<compile_context>
chip_gen: v7x
topology: tpu7x:2x2x1
jax: 0.10.0
libtpu: 0.0.40
codegen_flags: <defaults>
</compile_context>

<pallas_src>
import functools

import jax
import jax.numpy as jnp
from jax.experimental import pallas as pl
from jax.experimental.pallas import tpu as pltpu


# Stay well under the smallest scoped-VMEM budget across generations
# (v7x: 64 MiB physical / 32 MiB scoped default; v5e scoped default is only 16 MiB,
# so we raise it explicitly).
_VMEM_LIMIT_BYTES = 32 * 1024 * 1024


def _pick_tile(extent, target, mult=8):
    """Largest divisor of `extent` that is <= target and a multiple of `mult`.

    Never silently returns a huge full-extent block (VMEM hazard): small extents
    are allowed through as a single block, awkward large extents raise.
    """
    if extent <= target:
        return extent
    t0 = min(target, extent)
    t0 -= t0 % mult
    for t in range(t0, mult - 1, -mult):
        if extent % t == 0:
            return t
    if extent <= 1024:
        return extent
    # TODO(synk): support ragged extents with a pl.cdiv grid + masked final block.
    raise ValueError(f"no {mult}-aligned tile <= {target} divides extent {extent}")


# ----------------------------------------------------------------------------
# Pallas kernels
# ----------------------------------------------------------------------------
def _matmul_bias_kernel(x_ref, w_ref, b_ref, o_ref):
    # (tm, K)bf16 @ (K, N)bf16 -> f32 accumulation; f32 bias add; bf16 store.
    acc = jnp.dot(x_ref[...], w_ref[...], preferred_element_type=jnp.float32)
    o_ref[...] = (acc + b_ref[...]).astype(o_ref.dtype)


def _out_proj_kernel(x_ref, w_ref, b_ref, r_ref, sm_ref, sh_ref, o_ref):
    # Output projection with the residual (+ its folded BatchNorm affine) fused into
    # the epilogue: out = x @ W + b + (r * bn_scale_map + bn_shift_map), all f32.
    acc = jnp.dot(x_ref[...], w_ref[...], preferred_element_type=jnp.float32)
    res = r_ref[...] * sm_ref[...] + sh_ref[...]
    o_ref[...] = acc + b_ref[...] + res


def _attn_kernel(q_ref, k_ref, v_ref, o_ref, *, heads, d, np_valid):
    # q_ref: (tq, heads*d) bf16 (softmax scale already folded into Wq),
    # k_ref: (heads, d, Np_pad) bf16 (K pre-transposed -> no in-kernel k.T),
    # v_ref: (heads, Np_pad, d) bf16, o_ref: (tq, heads*d) bf16 (lane-dense when
    # d % 128 == 0).
    tq = q_ref.shape[0]
    np_pad = k_ref.shape[-1]
    masked = np_pad > np_valid
    if masked:
        col = jax.lax.broadcasted_iota(jnp.int32, (tq, np_pad), 1)
    # Per-head unrolled loop: fine for small head counts with d == 128 (aligned
    # full-lane stores, back-to-back MXU jobs).
    # TODO(synk): use a head-batched dot_general layout when heads is large or d < 128.
    for hh in range(heads):
        lo = hh * d
        s = jnp.dot(q_ref[:, lo:lo + d], k_ref[hh],
                    preferred_element_type=jnp.float32)          # (tq, Np_pad) f32
        if masked:
            s = jnp.where(col < np_valid, s, jnp.float32(-1e30))  # mask KV padding
        # Softmax math stays in f32 (no bf16 VPU/EUP on v5e).
        m = jnp.max(s, axis=-1, keepdims=True)
        p = jnp.exp(s - m)
        denom = jnp.sum(p, axis=-1, keepdims=True)
        p = p * pl.reciprocal(denom, approx=True)                # divide on the EUP slot
        o = jnp.dot(p.astype(jnp.bfloat16), v_ref[hh],
                    preferred_element_type=jnp.float32)
        o_ref[:, lo:lo + d] = o.astype(o_ref.dtype)


# ----------------------------------------------------------------------------
# Pallas wrappers
# ----------------------------------------------------------------------------
def pallas_linear(x, w, bias, *, out_dtype=jnp.bfloat16, tile_m=512, min_steps=2):
    """x: (M, K) @ w: (K, N) + bias -> (M, N) in `out_dtype`, tiled over M."""
    M, K = x.shape
    _, Nw = w.shape
    mult = 16 if x.dtype == jnp.bfloat16 else 8     # bf16 packs 16 rows per sublane tile
    target = tile_m
    if M // min_steps >= mult:                      # keep >=2 steps so v7x feeds both TCs
        target = min(target, M // min_steps)
    tm = _pick_tile(M, target, mult)
    out_bytes = M * Nw * jnp.dtype(out_dtype).itemsize
    return pl.pallas_call(
        _matmul_bias_kernel,
        out_shape=jax.ShapeDtypeStruct((M, Nw), out_dtype),
        grid=(M // tm,),
        in_specs=[
            pl.BlockSpec((tm, K), lambda i: (i, 0)),
            pl.BlockSpec((K, Nw), lambda i: (0, 0)),
            pl.BlockSpec((1, Nw), lambda i: (0, 0)),
        ],
        out_specs=pl.BlockSpec((tm, Nw), lambda i: (i, 0)),
        compiler_params=pltpu.CompilerParams(
            dimension_semantics=("parallel",),
            vmem_limit_bytes=_VMEM_LIMIT_BYTES,
        ),
        cost_estimate=pl.CostEstimate(
            flops=2 * M * K * Nw,
            transcendentals=0,
            bytes_accessed=(x.size * x.dtype.itemsize + w.size * w.dtype.itemsize
                            + bias.size * 4 + out_bytes),
        ),
    )(x, w, bias.reshape(1, Nw))


def pallas_attention(q, k, v, *, np_valid, tile_q=512):
    """q: (b,N,H*d) bf16, k: (b,H,d,Np_pad) bf16, v: (b,H,Np_pad,d) bf16 -> (b,N,H*d) bf16."""
    b, N, C = q.shape
    _, heads, d, np_pad = k.shape
    assert heads * d == C
    tq = _pick_tile(N, tile_q, mult=16)
    grid = (b, N // tq)
    kernel = functools.partial(_attn_kernel, heads=heads, d=d, np_valid=np_valid)
    return pl.pallas_call(
        kernel,
        out_shape=jax.ShapeDtypeStruct((b, N, C), jnp.bfloat16),
        grid=grid,
        in_specs=[
            pl.BlockSpec((None, tq, C), lambda bi, qi: (bi, qi, 0)),
            pl.BlockSpec((None, heads, d, np_pad), lambda bi, qi: (bi, 0, 0, 0)),
            pl.BlockSpec((None, heads, np_pad, d), lambda bi, qi: (bi, 0, 0, 0)),
        ],
        out_specs=pl.BlockSpec((None, tq, C), lambda bi, qi: (bi, qi, 0)),
        compiler_params=pltpu.CompilerParams(
            dimension_semantics=("parallel", "parallel"),
            vmem_limit_bytes=_VMEM_LIMIT_BYTES,
        ),
        cost_estimate=pl.CostEstimate(
            flops=4 * b * heads * N * np_pad * d,
            transcendentals=b * heads * N * (np_pad + 1),
            bytes_accessed=2 * (2 * q.size + k.size + v.size),
        ),
    )(q, k, v)


def pallas_out_proj(act, w, bias, resid, smap, shmap, *, tile_n=512):
    """act:(b,N,C) bf16 @ w:(C,dim) bf16 + bias + (resid*smap+shmap) -> (b,N,dim) f32.

    `resid` is the raw (b, N, dim) view of the module input; smap/shmap are the
    per-position BN scale/shift tables in that raw layout (period N over the rows).
    """
    b, N, C = act.shape
    _, dim = w.shape
    tn = _pick_tile(N, tile_n, mult=16)
    nt = N // tn
    grid = (b, nt)
    # NOTE: the output's last dim (`dim`) equals the full array extent so a <128 value
    # is legal; for dim=96 each row-tile store uses one masked vreg (minor at this size).
    return pl.pallas_call(
        _out_proj_kernel,
        out_shape=jax.ShapeDtypeStruct((b, N, dim), jnp.float32),
        grid=grid,
        in_specs=[
            pl.BlockSpec((None, tn, C), lambda bi, i: (bi, i, 0)),
            pl.BlockSpec((C, dim), lambda bi, i: (0, 0)),
            pl.BlockSpec((1, dim), lambda bi, i: (0, 0)),
            pl.BlockSpec((None, tn, dim), lambda bi, i: (bi, i, 0)),
            pl.BlockSpec((tn, dim), lambda bi, i: (i, 0)),
            pl.BlockSpec((tn, dim), lambda bi, i: (i, 0)),
        ],
        out_specs=pl.BlockSpec((None, tn, dim), lambda bi, i: (bi, i, 0)),
        compiler_params=pltpu.CompilerParams(
            dimension_semantics=("parallel", "parallel"),
            vmem_limit_bytes=_VMEM_LIMIT_BYTES,
        ),
        cost_estimate=pl.CostEstimate(
            flops=2 * b * N * C * dim,
            transcendentals=0,
            bytes_accessed=(act.size * 2 + w.size * 2 + bias.size * 4
                            + resid.size * 4 + smap.size * 4 + shmap.size * 4
                            + b * N * dim * 4),
        ),
    )(act, w, bias.reshape(1, dim), resid, smap, shmap)


# ----------------------------------------------------------------------------
# E_MHSA forward
# ----------------------------------------------------------------------------
def e_mhsa_forward(x, params, *, heads, inner_dim, stride):
    b, c, h, w = x.shape
    C = heads * inner_dim
    N = h * w
    M = b * N
    eps = 1e-5
    scale = inner_dim ** -0.5

    bn_scale = params["bn_gamma"] / jnp.sqrt(params["bn_var"] + eps)
    bn_shift = params["bn_beta"] - params["bn_mean"] * bn_scale

    # --- one-time parameter folds (tiny, in XLA) ---------------------------
    # Softmax scale -> Wq/bq, BatchNorm affine -> fused QKV weights/bias, then cast
    # the weights to bf16 so the kernels never re-cast the resident weight block.
    w_qkv = jnp.concatenate([params["wq"] * scale, params["wk"], params["wv"]], axis=1)
    b_qkv = jnp.concatenate([params["bq"] * scale, params["bk"], params["bv"]], axis=0)
    w_qkv_f = (bn_scale[:, None] * w_qkv).astype(jnp.bfloat16)     # (c, 3C) bf16
    b_qkv_f = b_qkv + bn_shift @ w_qkv                             # (3C,)  f32
    wo_b = params["wo"].astype(jnp.bfloat16)                       # (C, c) bf16

    # Per-position BN scale/shift tables in the residual's raw (N, c) layout:
    # the torch residual is `result.view(b, dim, h, w) + bn(x)`, a raw-memory add,
    # so element (n, j) of a row-tile belongs to channel (n*c + j) // N.
    ch_idx = (jnp.arange(N)[:, None] * c + jnp.arange(c)[None, :]) // N
    smap = bn_scale[ch_idx]      # (N, c) f32
    shmap = bn_shift[ch_idx]     # (N, c) f32

    # --- fused Q|K|V projection over bf16 token rows ------------------------
    x_seq = jnp.transpose(x.reshape(b, c, N), (0, 2, 1)).reshape(M, c)
    x_seq = x_seq.astype(jnp.bfloat16)
    qkv = pallas_linear(x_seq, w_qkv_f, b_qkv_f, out_dtype=jnp.bfloat16)   # (M, 3C) bf16

    q = qkv[:, :C].reshape(b, N, C)            # (b, N, heads*d) bf16 — kernel layout

    hp, wp = h // stride, w // stride
    Np = hp * wp
    np_pad = ((Np + 127) // 128) * 128          # lane-dense pooled KV length

    def pool(cols):
        # torch raw `.view(b, heads*inner_dim, h, w)` then AvgPool2d(stride, stride);
        # accumulate the mean in f32, stream the result in bf16.
        t = cols.reshape(b, C, h, w)
        t = t.reshape(b, C, hp, stride, wp, stride).mean(axis=(3, 5), dtype=jnp.float32)
        return t.reshape(b, heads, inner_dim, Np).astype(jnp.bfloat16)
    # TODO(synk): the avg-pool mixes spatial positions so it cannot be fused into the
    # token-row-tiled QKV projection epilogue; it stays a (small) XLA op.

    k = pool(qkv[:, C:2 * C])                                    # (b, H, d, Np): K^T layout
    v = jnp.transpose(pool(qkv[:, 2 * C:]), (0, 1, 3, 2))        # (b, H, Np, d)
    if np_pad > Np:
        k = jnp.pad(k, ((0, 0), (0, 0), (0, 0), (0, np_pad - Np)))
        v = jnp.pad(v, ((0, 0), (0, 0), (0, np_pad - Np), (0, 0)))

    attn_out = pallas_attention(q, k, v, np_valid=Np)            # (b, N, C) bf16

    # --- output projection + fused residual (BN affine applied in-kernel) ---
    resid = x.reshape(b, N, c)                                   # raw view, zero-copy
    out = pallas_out_proj(attn_out, wo_b, params["bo"], resid, smap, shmap)
    return out.reshape(b, c, h, w)


# ----------------------------------------------------------------------------
# Pure-JAX reference (mirrors the PyTorch forward exactly, all f32)
# ----------------------------------------------------------------------------
def e_mhsa_reference(x, params, *, heads, inner_dim, stride):
    b, c, h, w = x.shape
    C = heads * inner_dim
    N = h * w
    eps = 1e-5
    bn_scale = params["bn_gamma"] / jnp.sqrt(params["bn_var"] + eps)
    bn_shift = params["bn_beta"] - params["bn_mean"] * bn_scale
    x_bn = x * bn_scale[None, :, None, None] + bn_shift[None, :, None, None]
    xs = jnp.transpose(x_bn.reshape(b, c, N), (0, 2, 1))
    q = xs @ params["wq"] + params["bq"]
    k = xs @ params["wk"] + params["bk"]
    v = xs @ params["wv"] + params["bv"]
    q = jnp.transpose(q.reshape(b, N, heads, inner_dim), (0, 2, 1, 3))
    hp, wp = h // stride, w // stride
    Np = hp * wp

    def pool(t):
        t = t.reshape(b, C, h, w).reshape(b, C, hp, stride, wp, stride).mean(axis=(3, 5))
        return jnp.transpose(t.reshape(b, heads, inner_dim, Np), (0, 1, 3, 2))

    k, v = pool(k), pool(v)
    attn = jnp.einsum("bhid,bhjd->bhij", q, k) * (inner_dim ** -0.5)
    attn = jax.nn.softmax(attn, axis=-1)
    out = jnp.einsum("bhij,bhjd->bhid", attn, v)
    out = jnp.transpose(out, (0, 2, 1, 3)).reshape(b, N, C)
    out = out @ params["wo"] + params["bo"]
    return out.reshape(b, c, h, w) + x_bn


# ----------------------------------------------------------------------------
# main
# ----------------------------------------------------------------------------
if __name__ == "__main__":
    # Small but layout-friendly config: C = heads*inner_dim = 256 (lane-dense),
    # dim = 96 exercises the full-extent (<128) output/residual path, and the
    # pooled length Np = 64 exercises the pad-to-128 + score-masking path.
    B, DIM, H, W = 2, 96, 16, 16
    HEADS, INNER_DIM, STRIDE = 2, 128, 2
    C_INNER = HEADS * INNER_DIM

    key = jax.random.PRNGKey(0)
    keys = jax.random.split(key, 16)

    params = {
        "bn_gamma": 1.0 + 0.1 * jax.random.normal(keys[0], (DIM,), jnp.float32),
        "bn_beta": 0.1 * jax.random.normal(keys[1], (DIM,), jnp.float32),
        "bn_mean": 0.1 * jax.random.normal(keys[2], (DIM,), jnp.float32),
        "bn_var": 1.0 + 0.1 * jnp.abs(jax.random.normal(keys[3], (DIM,), jnp.float32)),
        # Linear weights stored as (in, out); PyTorch's y = x @ W.T + b.
        "wq": 0.05 * jax.random.normal(keys[4], (DIM, C_INNER), jnp.float32),
        "bq": 0.05 * jax.random.normal(keys[5], (C_INNER,), jnp.float32),
        "wk": 0.05 * jax.random.normal(keys[6], (DIM, C_INNER), jnp.float32),
        "bk": 0.05 * jax.random.normal(keys[7], (C_INNER,), jnp.float32),
        "wv": 0.05 * jax.random.normal(keys[8], (DIM, C_INNER), jnp.float32),
        "bv": 0.05 * jax.random.normal(keys[9], (C_INNER,), jnp.float32),
        "wo": 0.05 * jax.random.normal(keys[10], (C_INNER, DIM), jnp.float32),
        "bo": 0.05 * jax.random.normal(keys[11], (DIM,), jnp.float32),
    }

    x = jax.random.normal(keys[12], (B, DIM, H, W), jnp.float32)

    fwd = jax.jit(
        functools.partial(
            e_mhsa_forward, heads=HEADS, inner_dim=INNER_DIM, stride=STRIDE
        )
    )
    out = fwd(x, params)
    jax.block_until_ready(out)

    ref = e_mhsa_reference(x, params, heads=HEADS, inner_dim=INNER_DIM, stride=STRIDE)
    assert out.shape == (B, DIM, H, W)
    # bf16 weights + bf16 streamed intermediates + approx reciprocal -> loose tolerance.
    assert jnp.allclose(out, ref, rtol=5e-2, atol=5e-2), "mismatch vs reference"

    print("KERNEL_OK")
</pallas_src>

<mosaic_0001>
module attributes {stable_mosaic.version = 11 : i64} {
  func.func @_matmul_bias_kernel(%arg0: i32, %arg1: memref<256x96xbf16, #tpu.memory_space<vmem>>, %arg2: memref<96x768xbf16, #tpu.memory_space<vmem>>, %arg3: memref<1x768xf32, #tpu.memory_space<vmem>>, %arg4: memref<256x768xbf16, #tpu.memory_space<vmem>>) attributes {dimension_semantics = [#tpu.dimension_semantics<parallel>], iteration_bounds = array<i64: 2>, scalar_prefetch = 0 : i64, scratch_operands = 0 : i64, tpu.core_type = #tpu.core_type<tc>, window_params = [{transform_indices = @transform_0, window_bounds = array<i64: 256, 96>}, {pipeline_mode = #tpu.pipeline_mode<synchronous>, transform_indices = @transform_1, window_bounds = array<i64: 96, 768>}, {pipeline_mode = #tpu.pipeline_mode<synchronous>, transform_indices = @transform_2, window_bounds = array<i64: 1, 768>}, {transform_indices = @transform_3, window_bounds = array<i64: 256, 768>}]} {
    %c0 = arith.constant 0 : index
    %c0_0 = arith.constant 0 : index
    %0 = vector.load %arg1[%c0, %c0_0] : memref<256x96xbf16, #tpu.memory_space<vmem>>, vector<256x96xbf16>
    %c0_1 = arith.constant 0 : index
    %c0_2 = arith.constant 0 : index
    %1 = vector.load %arg2[%c0_1, %c0_2] : memref<96x768xbf16, #tpu.memory_space<vmem>>, vector<96x768xbf16>
    %cst = arith.constant dense<0.000000e+00> : vector<256x768xf32>
    %2 = tpu.matmul %0, %1, %cst {dimension_numbers = #tpu.dot_dimension_numbers<[1], [0], [0], [1], [0, 0, 1, 1], [], []>} : vector<256x96xbf16>, vector<96x768xbf16>, vector<256x768xf32> -> vector<256x768xf32>
    %c0_3 = arith.constant 0 : index
    %c0_4 = arith.constant 0 : index
    %3 = vector.load %arg3[%c0_3, %c0_4] : memref<1x768xf32, #tpu.memory_space<vmem>>, vector<1x768xf32>
    %4 = vector.broadcast %3 : vector<1x768xf32> to vector<256x768xf32>
    %5 = arith.addf %2, %4 : vector<256x768xf32>
    %6 = arith.truncf %5 : vector<256x768xf32> to vector<256x768xbf16>
    %c0_5 = arith.constant 0 : index
    %c0_6 = arith.constant 0 : index
    %7 = vector.load %arg4[%c0_5, %c0_6] : memref<256x768xbf16, #tpu.memory_space<vmem>>, vector<256x768xbf16>
    tpu.vector_store %arg4[%c0_5, %c0_6], %6 {strides = array<i32>} : memref<256x768xbf16, #tpu.memory_space<vmem>>, vector<256x768xbf16>,
    return
  }
  func.func @transform_0(%arg0: i32) -> (i32, i32) {
    %c0_i32 = arith.constant 0 : i32
    %c0_i32_0 = arith.constant 0 : i32
    return %arg0, %c0_i32 : i32, i32
  }
  func.func @transform_1(%arg0: i32) -> (i32, i32) {
    %c0_i32 = arith.constant 0 : i32
    %c0_i32_0 = arith.constant 0 : i32
    %c0_i32_1 = arith.constant 0 : i32
    return %c0_i32, %c0_i32_0 : i32, i32
  }
  func.func @transform_2(%arg0: i32) -> (i32, i32) {
    %c0_i32 = arith.constant 0 : i32
    %c0_i32_0 = arith.constant 0 : i32
    %c0_i32_1 = arith.constant 0 : i32
    return %c0_i32, %c0_i32_0 : i32, i32
  }
  func.func @transform_3(%arg0: i32) -> (i32, i32) {
    %c0_i32 = arith.constant 0 : i32
    %c0_i32_0 = arith.constant 0 : i32
    return %arg0, %c0_i32 : i32, i32
  }
}

module attributes {stable_mosaic.version = 11 : i64} {
  func.func @_attn_kernel(%arg0: i32, %arg1: i32, %arg2: memref<1x256x256xbf16, #tpu.memory_space<vmem>>, %arg3: memref<1x2x128x128xbf16, #tpu.memory_space<vmem>>, %arg4: memref<1x2x128x128xbf16, #tpu.memory_space<vmem>>, %arg5: memref<1x256x256xbf16, #tpu.memory_space<vmem>>) attributes {dimension_semantics = [#tpu.dimension_semantics<parallel>, #tpu.dimension_semantics<parallel>], iteration_bounds = array<i64: 2, 1>, scalar_prefetch = 0 : i64, scratch_operands = 0 : i64, tpu.core_type = #tpu.core_type<tc>, window_params = [{transform_indices = @transform_0, window_bounds = array<i64: 1, 256, 256>}, {transform_indices = @transform_1, window_bounds = array<i64: 1, 2, 128, 128>}, {transform_indices = @transform_2, window_bounds = array<i64: 1, 2, 128, 128>}, {transform_indices = @transform_3, window_bounds = array<i64: 1, 256, 256>}]} {
    %0 = tpu.iota {dimensions = array<i32: 1>} : vector<256x128xi32>
    %c0 = arith.constant 0 : index
    %c0_0 = arith.constant 0 : index
    %c0_1 = arith.constant 0 : index
    %1 = vector.load %arg2[%c0, %c0_0, %c0_1] : memref<1x256x256xbf16, #tpu.memory_space<vmem>>, vector<1x256x128xbf16>
    %2 = vector.shape_cast %1 : vector<1x256x128xbf16> to vector<256x128xbf16>
    %c0_2 = arith.constant 0 : index
    %c0_3 = arith.constant 0 : index
    %c0_4 = arith.constant 0 : index
    %c0_5 = arith.constant 0 : index
    %3 = vector.load %arg3[%c0_2, %c0_3, %c0_4, %c0_5] : memref<1x2x128x128xbf16, #tpu.memory_space<vmem>>, vector<1x1x128x128xbf16>
    %4 = vector.shape_cast %3 : vector<1x1x128x128xbf16> to vector<128x128xbf16>
    %cst = arith.constant dense<0.000000e+00> : vector<256x128xf32>
    %5 = tpu.matmul %2, %4, %cst {dimension_numbers = #tpu.dot_dimension_numbers<[1], [0], [0], [1], [0, 0, 1, 1], [], []>} : vector<256x128xbf16>, vector<128x128xbf16>, vector<256x128xf32> -> vector<256x128xf32>
    %c64_i32 = arith.constant 64 : i32
    %6 = vector.broadcast %c64_i32 : i32 to vector<256x128xi32>
    %7 = arith.cmpi slt, %0, %6 : vector<256x128xi32>
    %cst_6 = arith.constant -1.000000e+30 : f32
    %8 = vector.broadcast %cst_6 : f32 to vector<256x128xf32>
    %9 = arith.select %7, %5, %8 : vector<256x128xi1>, vector<256x128xf32>
    %cst_7 = arith.constant dense<0xFF800000> : vector<256xf32>
    %10 = vector.multi_reduction <maximumf>, %9, %cst_7 [1] : vector<256x128xf32> to vector<256xf32>
    %11 = vector.shape_cast %10 : vector<256xf32> to vector<256x1xf32>
    %12 = vector.broadcast %11 : vector<256x1xf32> to vector<256x128xf32>
    %13 = arith.subf %9, %12 : vector<256x128xf32>
    %14 = math.exp %13 : vector<256x128xf32>
    %cst_8 = arith.constant dense<0.000000e+00> : vector<256xf32>
    %15 = vector.multi_reduction <add>, %14, %cst_8 [1] : vector<256x128xf32> to vector<256xf32>
    %16 = vector.shape_cast %15 : vector<256xf32> to vector<256x1xf32>
    %17 = tpu.reciprocal %16 {approx = true} : vector<256x1xf32> -> vector<256x1xf32>
    %18 = vector.broadcast %17 : vector<256x1xf32> to vector<256x128xf32>
    %19 = arith.mulf %14, %18 : vector<256x128xf32>
    %20 = arith.truncf %19 : vector<256x128xf32> to vector<256x128xbf16>
    %c0_9 = arith.constant 0 : index
    %c0_10 = arith.constant 0 : index
    %c0_11 = arith.constant 0 : index
    %c0_12 = arith.constant 0 : index
    %21 = vector.load %arg4[%c0_9, %c0_10, %c0_11, %c0_12] : memref<1x2x128x128xbf16, #tpu.memory_space<vmem>>, vector<1x1x128x128xbf16>
    %22 = vector.shape_cast %21 : vector<1x1x128x128xbf16> to vector<128x128xbf16>
    %cst_13 = arith.constant dense<0.000000e+00> : vector<256x128xf32>
    %23 = tpu.matmul %20, %22, %cst_13 {dimension_numbers = #tpu.dot_dimension_numbers<[1], [0], [0], [1], [0, 0, 1, 1], [], []>} : vector<256x128xbf16>, vector<128x128xbf16>, vector<256x128xf32> -> vector<256x128xf32>
    %24 = arith.truncf %23 : vector<256x128xf32> to vector<256x128xbf16>
    %c0_14 = arith.constant 0 : index
    %c0_15 = arith.constant 0 : index
    %c0_16 = arith.constant 0 : index
    %25 = vector.load %arg5[%c0_14, %c0_15, %c0_16] : memref<1x256x256xbf16, #tpu.memory_space<vmem>>, vector<1x256x128xbf16>
    %26 = vector.shape_cast %25 : vector<1x256x128xbf16> to vector<256x128xbf16>
    %27 = vector.shape_cast %24 : vector<256x128xbf16> to vector<1x256x128xbf16>
    tpu.vector_store %arg5[%c0_14, %c0_15, %c0_16], %27 {strides = array<i32>} : memref<1x256x256xbf16, #tpu.memory_space<vmem>>, vector<1x256x128xbf16>,
    %c0_17 = arith.constant 0 : index
    %c0_18 = arith.constant 0 : index
    %c128 = arith.constant 128 : index
    %28 = vector.load %arg2[%c0_17, %c0_18, %c128] : memref<1x256x256xbf16, #tpu.memory_space<vmem>>, vector<1x256x128xbf16>
    %29 = vector.shape_cast %28 : vector<1x256x128xbf16> to vector<256x128xbf16>
    %c0_19 = arith.constant 0 : index
    %c1 = arith.constant 1 : index
    %c0_20 = arith.constant 0 : index
    %c0_21 = arith.constant 0 : index
    %30 = vector.load %arg3[%c0_19, %c1, %c0_20, %c0_21] : memref<1x2x128x128xbf16, #tpu.memory_space<vmem>>, vector<1x1x128x128xbf16>
    %31 = vector.shape_cast %30 : vector<1x1x128x128xbf16> to vector<128x128xbf16>
    %cst_22 = arith.constant dense<0.000000e+00> : vector<256x128xf32>
    %32 = tpu.matmul %29, %31, %cst_22 {dimension_numbers = #tpu.dot_dimension_numbers<[1], [0], [0], [1], [0, 0, 1, 1], [], []>} : vector<256x128xbf16>, vector<128x128xbf16>, vector<256x128xf32> -> vector<256x128xf32>
    %c64_i32_23 = arith.constant 64 : i32
    %33 = vector.broadcast %c64_i32_23 : i32 to vector<256x128xi32>
    %34 = arith.cmpi slt, %0, %33 : vector<256x128xi32>
    %cst_24 = arith.constant -1.000000e+30 : f32
    %35 = vector.broadcast %cst_24 : f32 to vector<256x128xf32>
    %36 = arith.select %34, %32, %35 : vector<256x128xi1>, vector<256x128xf32>
    %cst_25 = arith.constant dense<0xFF800000> : vector<256xf32>
    %37 = vector.multi_reduction <maximumf>, %36, %cst_25 [1] : vector<256x128xf32> to vector<256xf32>
    %38 = vector.shape_cast %37 : vector<256xf32> to vector<256x1xf32>
    %39 = vector.broadcast %38 : vector<256x1xf32> to vector<256x128xf32>
    %40 = arith.subf %36, %39 : vector<256x128xf32>
    %41 = math.exp %40 : vector<256x128xf32>
    %cst_26 = arith.constant dense<0.000000e+00> : vector<256xf32>
    %42 = vector.multi_reduction <add>, %41, %cst_26 [1] : vector<256x128xf32> to vector<256xf32>
    %43 = vector.shape_cast %42 : vector<256xf32> to vector<256x1xf32>
    %44 = tpu.reciprocal %43 {approx = true} : vector<256x1xf32> -> vector<256x1xf32>
    %45 = vector.broadcast %44 : vector<256x1xf32> to vector<256x128xf32>
    %46 = arith.mulf %41, %45 : vector<256x128xf32>
    %47 = arith.truncf %46 : vector<256x128xf32> to vector<256x128xbf16>
    %c0_27 = arith.constant 0 : index
    %c1_28 = arith.constant 1 : index
    %c0_29 = arith.constant 0 : index
    %c0_30 = arith.constant 0 : index
    %48 = vector.load %arg4[%c0_27, %c1_28, %c0_29, %c0_30] : memref<1x2x128x128xbf16, #tpu.memory_space<vmem>>, vector<1x1x128x128xbf16>
    %49 = vector.shape_cast %48 : vector<1x1x128x128xbf16> to vector<128x128xbf16>
    %cst_31 = arith.constant dense<0.000000e+00> : vector<256x128xf32>
    %50 = tpu.matmul %47, %49, %cst_31 {dimension_numbers = #tpu.dot_dimension_numbers<[1], [0], [0], [1], [0, 0, 1, 1], [], []>} : vector<256x128xbf16>, vector<128x128xbf16>, vector<256x128xf32> -> vector<256x128xf32>
    %51 = arith.truncf %50 : vector<256x128xf32> to vector<256x128xbf16>
    %c0_32 = arith.constant 0 : index
    %c0_33 = arith.constant 0 : index
    %c128_34 = arith.constant 128 : index
    %52 = vector.load %arg5[%c0_32, %c0_33, %c128_34] : memref<1x256x256xbf16, #tpu.memory_space<vmem>>, vector<1x256x128xbf16>
    %53 = vector.shape_cast %52 : vector<1x256x128xbf16> to vector<256x128xbf16>
    %54 = vector.shape_cast %51 : vector<256x128xbf16> to vector<1x256x128xbf16>
    tpu.vector_store %arg5[%c0_32, %c0_33, %c128_34], %54 {strides = array<i32>} : memref<1x256x256xbf16, #tpu.memory_space<vmem>>, vector<1x256x128xbf16>,
    return
  }
  func.func @transform_0(%arg0: i32, %arg1: i32) -> (i32, i32, i32) {
    %c0_i32 = arith.constant 0 : i32
    %c0_i32_0 = arith.constant 0 : i32
    return %arg0, %arg1, %c0_i32 : i32, i32, i32
  }
  func.func @transform_1(%arg0: i32, %arg1: i32) -> (i32, i32, i32, i32) {
    %c0_i32 = arith.constant 0 : i32
    %c0_i32_0 = arith.constant 0 : i32
    %c0_i32_1 = arith.constant 0 : i32
    %c0_i32_2 = arith.constant 0 : i32
    return %arg0, %c0_i32, %c0_i32_0, %c0_i32_1 : i32, i32, i32, i32
  }
  func.func @transform_2(%arg0: i32, %arg1: i32) -> (i32, i32, i32, i32) {
    %c0_i32 = arith.constant 0 : i32
    %c0_i32_0 = arith.constant 0 : i32
    %c0_i32_1 = arith.constant 0 : i32
    %c0_i32_2 = arith.constant 0 : i32
    return %arg0, %c0_i32, %c0_i32_0, %c0_i32_1 : i32, i32, i32, i32
  }
  func.func @transform_3(%arg0: i32, %arg1: i32) -> (i32, i32, i32) {
    %c0_i32 = arith.constant 0 : i32
    %c0_i32_0 = arith.constant 0 : i32
    return %arg0, %arg1, %c0_i32 : i32, i32, i32
  }
}

module attributes {stable_mosaic.version = 11 : i64} {
  func.func @_out_proj_kernel(%arg0: i32, %arg1: i32, %arg2: memref<1x256x256xbf16, #tpu.memory_space<vmem>>, %arg3: memref<256x96xbf16, #tpu.memory_space<vmem>>, %arg4: memref<1x96xf32, #tpu.memory_space<vmem>>, %arg5: memref<1x256x96xf32, #tpu.memory_space<vmem>>, %arg6: memref<256x96xf32, #tpu.memory_space<vmem>>, %arg7: memref<256x96xf32, #tpu.memory_space<vmem>>, %arg8: memref<1x256x96xf32, #tpu.memory_space<vmem>>) attributes {dimension_semantics = [#tpu.dimension_semantics<parallel>, #tpu.dimension_semantics<parallel>], iteration_bounds = array<i64: 2, 1>, scalar_prefetch = 0 : i64, scratch_operands = 0 : i64, tpu.core_type = #tpu.core_type<tc>, window_params = [{transform_indices = @transform_0, window_bounds = array<i64: 1, 256, 256>}, {pipeline_mode = #tpu.pipeline_mode<synchronous>, transform_indices = @transform_1, window_bounds = array<i64: 256, 96>}, {pipeline_mode = #tpu.pipeline_mode<synchronous>, transform_indices = @transform_2, window_bounds = array<i64: 1, 96>}, {transform_indices = @transform_3, window_bounds = array<i64: 1, 256, 96>}, {transform_indices = @transform_4, window_bounds = array<i64: 256, 96>}, {transform_indices = @transform_5, window_bounds = array<i64: 256, 96>}, {transform_indices = @transform_6, window_bounds = array<i64: 1, 256, 96>}]} {
    %c0 = arith.constant 0 : index
    %c0_0 = arith.constant 0 : index
    %c0_1 = arith.constant 0 : index
    %0 = vector.load %arg2[%c0, %c0_0, %c0_1] : memref<1x256x256xbf16, #tpu.memory_space<vmem>>, vector<1x256x256xbf16>
    %1 = vector.shape_cast %0 : vector<1x256x256xbf16> to vector<256x256xbf16>
    %c0_2 = arith.constant 0 : index
    %c0_3 = arith.constant 0 : index
    %2 = vector.load %arg3[%c0_2, %c0_3] : memref<256x96xbf16, #tpu.memory_space<vmem>>, vector<256x96xbf16>
    %cst = arith.constant dense<0.000000e+00> : vector<256x96xf32>
    %3 = tpu.matmul %1, %2, %cst {dimension_numbers = #tpu.dot_dimension_numbers<[1], [0], [0], [1], [0, 0, 1, 1], [], []>} : vector<256x256xbf16>, vector<256x96xbf16>, vector<256x96xf32> -> vector<256x96xf32>
    %c0_4 = arith.constant 0 : index
    %c0_5 = arith.constant 0 : index
    %c0_6 = arith.constant 0 : index
    %4 = vector.load %arg5[%c0_4, %c0_5, %c0_6] : memref<1x256x96xf32, #tpu.memory_space<vmem>>, vector<1x256x96xf32>
    %5 = vector.shape_cast %4 : vector<1x256x96xf32> to vector<256x96xf32>
    %c0_7 = arith.constant 0 : index
    %c0_8 = arith.constant 0 : index
    %6 = vector.load %arg6[%c0_7, %c0_8] : memref<256x96xf32, #tpu.memory_space<vmem>>, vector<256x96xf32>
    %7 = arith.mulf %5, %6 : vector<256x96xf32>
    %c0_9 = arith.constant 0 : index
    %c0_10 = arith.constant 0 : index
    %8 = vector.load %arg7[%c0_9, %c0_10] : memref<256x96xf32, #tpu.memory_space<vmem>>, vector<256x96xf32>
    %9 = arith.addf %7, %8 : vector<256x96xf32>
    %c0_11 = arith.constant 0 : index
    %c0_12 = arith.constant 0 : index
    %10 = vector.load %arg4[%c0_11, %c0_12] : memref<1x96xf32, #tpu.memory_space<vmem>>, vector<1x96xf32>
    %11 = vector.broadcast %10 : vector<1x96xf32> to vector<256x96xf32>
    %12 = arith.addf %3, %11 : vector<256x96xf32>
    %13 = arith.addf %12, %9 : vector<256x96xf32>
    %c0_13 = arith.constant 0 : index
    %c0_14 = arith.constant 0 : index
    %c0_15 = arith.constant 0 : index
    %14 = vector.load %arg8[%c0_13, %c0_14, %c0_15] : memref<1x256x96xf32, #tpu.memory_space<vmem>>, vector<1x256x96xf32>
    %15 = vector.shape_cast %14 : vector<1x256x96xf32> to vector<256x96xf32>
    %16 = vector.shape_cast %13 : vector<256x96xf32> to vector<1x256x96xf32>
    tpu.vector_store %arg8[%c0_13, %c0_14, %c0_15], %16 {strides = array<i32>} : memref<1x256x96xf32, #tpu.memory_space<vmem>>, vector<1x256x96xf32>,
    return
  }
  func.func @transform_0(%arg0: i32, %arg1: i32) -> (i32, i32, i32) {
    %c0_i32 = arith.constant 0 : i32
    %c0_i32_0 = arith.constant 0 : i32
    return %arg0, %arg1, %c0_i32 : i32, i32, i32
  }
  func.func @transform_1(%arg0: i32, %arg1: i32) -> (i32, i32) {
    %c0_i32 = arith.constant 0 : i32
    %c0_i32_0 = arith.constant 0 : i32
    %c0_i32_1 = arith.constant 0 : i32
    return %c0_i32, %c0_i32_0 : i32, i32
  }
  func.func @transform_2(%arg0: i32, %arg1: i32) -> (i32, i32) {
    %c0_i32 = arith.constant 0 : i32
    %c0_i32_0 = arith.constant 0 : i32
    %c0_i32_1 = arith.constant 0 : i32
    return %c0_i32, %c0_i32_0 : i32, i32
  }
  func.func @transform_3(%arg0: i32, %arg1: i32) -> (i32, i32, i32) {
    %c0_i32 = arith.constant 0 : i32
    %c0_i32_0 = arith.constant 0 : i32
    return %arg0, %arg1, %c0_i32 : i32, i32, i32
  }
  func.func @transform_4(%arg0: i32, %arg1: i32) -> (i32, i32) {
    %c0_i32 = arith.constant 0 : i32
    %c0_i32_0 = arith.constant 0 : i32
    return %arg1, %c0_i32 : i32, i32
  }
  func.func @transform_5(%arg0: i32, %arg1: i32) -> (i32, i32) {
    %c0_i32 = arith.constant 0 : i32
    %c0_i32_0 = arith.constant 0 : i32
    return %arg1, %c0_i32 : i32, i32
  }
  func.func @transform_6(%arg0: i32, %arg1: i32) -> (i32, i32, i32) {
    %c0_i32 = arith.constant 0 : i32
    %c0_i32_0 = arith.constant 0 : i32
    return %arg0, %arg1, %c0_i32 : i32, i32, i32
  }
}

</mosaic_0001>

<llo_original>
// kernel: e_mhsa_forward.3
$region0: #{e_mhsa_forward.3}
  #allocation0 [shape = 'u32[]', space=smem, size = 0x4, offset = 0x4, fixed_abs, tag = 'smem constant byte address 0x4 - core index']
  #allocation1 [shape = 'u32[144,128]{1,0:T(1,128)}', space=vmem, size = 0x12000, scoped, tag = 'internal scratch']
  %s0 = inlined_call_operand.vmem [shape: bf16[512,96], index: 0, kind: input, shape index: {}]
  %s1 = inlined_call_operand.vmem [shape: bf16[96,768], index: 1, kind: input, shape index: {}]
  %s2 = inlined_call_operand.vmem [shape: f32[1,768], index: 2, kind: input, shape index: {}]
  %s3 = inlined_call_operand.vmem [shape: bf16[512,768], index: 3, kind: output, shape index: {}]
  %s4 = sld [smem:[#allocation0]]
  $region45: #{e_mhsa_forward.3} parent=0
    _
  %s6 = ssub.s32 1, %s4
  %s7 = scalar_select 0, %s6, %s4
  loop: start=0, step=1, limit=4
  $region2: #{e_mhsa_forward.3} parent=0 // loop_pre_header
    _
  $region3: #{e_mhsa_forward.3} parent=0 // loop_header
    %s9 = sphi 0, %s13
    %p10 = scmp.ge.s32.totalorder %s9, 4
    %s19 = sphi 0, %s21
    %s22 = sphi 0, %s19
    %s23 = sphi 0, %s22
    %s39 = sphi 0, %s23
    %s43 = sphi 0, %s43
    %s45 = sphi 0, %s43
    %s46 = sphi 0, %s45
    %s60 = sphi 0, %s46
    %s64 = sphi 0, %s64
    %s66 = sphi 0, %s64
    %s67 = sphi 0, %s66
    %s81 = sphi 0, %s67
    %s87 = sphi 0, %s89
    %s90 = sphi 0, %s87
    %s91 = sphi 0, %s90
    %s107 = sphi 0, %s91
  $region4: #{e_mhsa_forward.3} parent=0 // loop_header_branch
    %12 = sbr.rel (%p10) target = $region8
  $region5: #{e_mhsa_forward.3} parent=0 // loop_body
    %s14 = ssub.s32 %s9, 1
    %s15 = ssub.s32 %s9, 2
    %s16 = sadd.s32 %s9, 1
    %s17 = ssub.s32 %s9, %s16
    %p18 = scmp.eq.s32.totalorder %s17, 0
    %s20 = sadd.s32 %s19, 1
    %s21 = scalar_select %p18, %s19, %s20
    %p24 = pneg %p18
    %p25 = scmp.eq.s32.totalorder %s9, 1
    %p26 = por %p24, %p25
    %p27 = scmp.ne.s32.totalorder %s19, %s22
    %p28 = scmp.eq.s32.totalorder %s9, 0
    %p29 = por %p27, %p28
    %p30 = scmp.ne.s32.totalorder %s19, %s22
    %p31 = scmp.eq.s32.totalorder %s14, 1
    %p32 = por %p30, %p31
    %p33 = scmp.ne.s32.totalorder %s22, %s23
    %p34 = scmp.eq.s32.totalorder %s14, 0
    %p35 = por %p33, %p34
    %p36 = scmp.ne.s32.totalorder %s22, %s23
    %p37 = scmp.eq.s32.totalorder %s15, 1
    %p38 = por %p36, %p37
    %p40 = scmp.ne.s32.totalorder %s23, %s39
    %p41 = scmp.eq.s32.totalorder %s15, 0
    %p42 = por %p40, %p41
    %s44 = sadd.s32 %s43, 1
    %p47 = scmp.eq.s32.totalorder %s9, 1
    %p48 = scmp.ne.s32.totalorder %s43, %s45
    %p49 = scmp.eq.s32.totalorder %s9, 0
    %p50 = por %p48, %p49
    %p51 = scmp.ne.s32.totalorder %s43, %s45
    %p52 = scmp.eq.s32.totalorder %s14, 1
    %p53 = por %p51, %p52
    %p54 = scmp.ne.s32.totalorder %s45, %s46
    %p55 = scmp.eq.s32.totalorder %s14, 0
    %p56 = por %p54, %p55
    %p57 = scmp.ne.s32.totalorder %s45, %s46
    %p58 = scmp.eq.s32.totalorder %s15, 1
    %p59 = por %p57, %p58
    %p61 = scmp.ne.s32.totalorder %s46, %s60
    %p62 = scmp.eq.s32.totalorder %s15, 0
    %p63 = por %p61, %p62
    %s65 = sadd.s32 %s64, 1
    %p68 = scmp.eq.s32.totalorder %s9, 1
    %p69 = scmp.ne.s32.totalorder %s64, %s66
    %p70 = scmp.eq.s32.totalorder %s9, 0
    %p71 = por %p69, %p70
    %p72 = scmp.ne.s32.totalorder %s64, %s66
    %p73 = scmp.eq.s32.totalorder %s14, 1
    %p74 = por %p72, %p73
    %p75 = scmp.ne.s32.totalorder %s66, %s67
    %p76 = scmp.eq.s32.totalorder %s14, 0
    %p77 = por %p75, %p76
    %p78 = scmp.ne.s32.totalorder %s66, %s67
    %p79 = scmp.eq.s32.totalorder %s15, 1
    %p80 = por %p78, %p79
    %p82 = scmp.ne.s32.totalorder %s67, %s81
    %p83 = scmp.eq.s32.totalorder %s15, 0
    %p84 = por %p82, %p83
    %s85 = ssub.s32 %s9, %s16
    %p86 = scmp.eq.s32.totalorder %s85, 0
    %s88 = sadd.s32 %s87, 1
    %s89 = scalar_select %p86, %s87, %s88
    %p92 = pneg %p86
    %p93 = scmp.eq.s32.totalorder %s9, 1
    %p94 = por %p92, %p93
    %p95 = scmp.ne.s32.totalorder %s87, %s90
    %p96 = scmp.eq.s32.totalorder %s9, 0
    %p97 = por %p95, %p96
    %p98 = scmp.ne.s32.totalorder %s87, %s90
    %p99 = scmp.eq.s32.totalorder %s14, 1
    %p100 = por %p98, %p99
    %p101 = scmp.ne.s32.totalorder %s90, %s91
    %p102 = scmp.eq.s32.totalorder %s14, 0
    %p103 = por %p101, %p102
    %p104 = scmp.ne.s32.totalorder %s90, %s91
    %p105 = scmp.eq.s32.totalorder %s15, 1
    %p106 = por %p104, %p105
    %p108 = scmp.ne.s32.totalorder %s91, %s107
    %p109 = scmp.eq.s32.totalorder %s15, 0
    %p110 = por %p108, %p109
    %p111 = scmp.le.s32.totalorder 1, %s9
    %p112 = scmp.lt.s32.totalorder %s9, 3
    %p113 = pnand %p111, %p112
    %p114 = pneg %p113
    // Predicated region
    $region9: #{e_mhsa_forward.3} parent=5 // pred_check
      _
    $region10: #{e_mhsa_forward.3} parent=5 // pred_check_branch
      %116 = sbr.rel (%p113) target = $region12
    $region11: #{e_mhsa_forward.3} parent=5 // pred_region
      %s117 = ssub.s32 %s9, 1
      // Predicated region
      $region13: #{e_mhsa_forward.3} parent=11 // pred_check
        %p118 = pneg %p56
      $region14: #{e_mhsa_forward.3} parent=11 // pred_check_branch
        %120 = sbr.rel (%p118) target = $region16
      $region15: #{e_mhsa_forward.3} parent=11 // pred_region
        _
      $region16: #{e_mhsa_forward.3} parent=11 // pred_fallthru
        _
      // Predicated region
      $region17: #{e_mhsa_forward.3} parent=11 // pred_check
        %p121 = pneg %p77
      $region18: #{e_mhsa_forward.3} parent=11 // pred_check_branch
        %123 = sbr.rel (%p121) target = $region20
      $region19: #{e_mhsa_forward.3} parent=11 // pred_region
        _
      $region20: #{e_mhsa_forward.3} parent=11 // pred_fallthru
        _
    $region12: #{e_mhsa_forward.3} parent=5 // pred_fallthru
      _
    %p124 = scmp.lt.s32.totalorder %s9, 2
    // Predicated region
    $region21: #{e_mhsa_forward.3} parent=5 // pred_check
      %p125 = pneg %p124
    $region22: #{e_mhsa_forward.3} parent=5 // pred_check_branch
      %127 = sbr.rel (%p125) target = $region24
    $region23: #{e_mhsa_forward.3} parent=5 // pred_region
      // Predicated region
      $region25: #{e_mhsa_forward.3} parent=23 // pred_check
        %p128 = pneg %p29
      $region26: #{e_mhsa_forward.3} parent=23 // pred_check_branch
        %130 = sbr.rel (%p128) target = $region28
      $region27: #{e_mhsa_forward.3} parent=23 // pred_region
        %s131 = smul.u32 32, %s9
        %p132 = scmp.lt.s32.totalorder %s131, 63
        %s133 = scalar_select %p132, %s131, 63
        %s134 = smul.addr %s133, 4
        %s135 = scalar_lea.vmem %s0, %s134
        %s136 = smul.u32 32, %s9
      $region28: #{e_mhsa_forward.3} parent=23 // pred_fallthru
        _
    $region24: #{e_mhsa_forward.3} parent=5 // pred_fallthru
      _
    %p137 = scmp.le.s32.totalorder 1, %s9
    %p138 = scmp.lt.s32.totalorder %s9, 3
    %p139 = pnand %p137, %p138
    %p140 = pneg %p139
    // Predicated region
    $region29: #{e_mhsa_forward.3} parent=5 // pred_check
      _
    $region30: #{e_mhsa_forward.3} parent=5 // pred_check_branch
      %142 = sbr.rel (%p139) target = $region32
    $region31: #{e_mhsa_forward.3} parent=5 // pred_region
      %s143 = ssub.s32 %s9, 1
      %s144 = smul.u32 32, %s14
      %p145 = scmp.lt.s32.totalorder %s144, 63
      %s146 = scalar_select %p145, %s144, 63
      %s147 = smul.addr %s146, 4
      %s148 = scalar_lea.vmem %s0, %s147
      %p149 = pneg %p35
      %p150 = pneg %p32
      %p151 = pneg %p56
      %p152 = pneg %p53
      %p153 = pneg %p77
      %p154 = pneg %p74
      %p155 = pneg %p103
      %p156 = pneg %p100
      %s157 = smul.u32 32, %s14
      %p158 = scmp.lt.s32.totalorder %s157, 63
      %s159 = scalar_select %p158, %s157, 63
      %s160 = smul.addr %s159, 6
      %s161 = smul.addr %s160, 4
      %s162 = scalar_lea.vmem %s3, %s161
      %s163 = smul.u32 32, %s14
      %p164 = scmp.lt.s32.totalorder %s163, 63
      %s165 = scalar_select %p164, %s163, 63
      %s166 = smul.addr %s165, 4
      %s167 = scalar_lea.vmem %s0, %s166
      %s168 = smul.u32 32, %s14
      %s169 = smul.u32 32, %s14
      %p170 = scmp.lt.s32.totalorder %s169, 63
      %s171 = scalar_select %p170, %s169, 63
      %s172 = smul.addr %s171, 6
      %s173 = smul.addr %s172, 4
      %s174 = scalar_lea.vmem %s3, %s173
      %s175 = smul.u32 32, %s14
      %v177 = vld [vmem:[%s167] sm:$0xf]
      %v178 = vld [vmem:[%s167 + $0x4] sm:$0xf]
      %v179 = vld [vmem:[%s167 + $0x8] sm:$0xf]
      %v180 = vld [vmem:[%s167 + $0xc] sm:$0xf]
      %v181 = vld [vmem:[%s167 + $0x10] sm:$0xf]
      %v182 = vld [vmem:[%s167 + $0x14] sm:$0xf]
      %v183 = vld [vmem:[%s167 + $0x18] sm:$0xf]
      %v184 = vld [vmem:[%s167 + $0x1c] sm:$0xf]
      %v185 = vld [vmem:[%s167 + $0x20] sm:$0xf]
      %v186 = vld [vmem:[%s167 + $0x24] sm:$0xf]
      %v187 = vld [vmem:[%s167 + $0x28] sm:$0xf]
      %v188 = vld [vmem:[%s167 + $0x2c] sm:$0xf]
      %v189 = vld [vmem:[%s167 + $0x30] sm:$0xf]
      %v190 = vld [vmem:[%s167 + $0x34] sm:$0xf]
      %v191 = vld [vmem:[%s167 + $0x38] sm:$0xf]
      %v192 = vld [vmem:[%s167 + $0x3c] sm:$0xf]
      %v193 = vld [vmem:[%s167 + $0x40] sm:$0xf]
      %v194 = vld [vmem:[%s167 + $0x44] sm:$0xf]
      %v195 = vld [vmem:[%s167 + $0x48] sm:$0xf]
      %v196 = vld [vmem:[%s167 + $0x4c] sm:$0xf]
      %v197 = vld [vmem:[%s167 + $0x50] sm:$0xf]
      %v198 = vld [vmem:[%s167 + $0x54] sm:$0xf]
      %v199 = vld [vmem:[%s167 + $0x58] sm:$0xf]
      %v200 = vld [vmem:[%s167 + $0x5c] sm:$0xf]
      %v201 = vld [vmem:[%s167 + $0x60] sm:$0xf]
      %v202 = vld [vmem:[%s167 + $0x64] sm:$0xf]
      %v203 = vld [vmem:[%s167 + $0x68] sm:$0xf]
      %v204 = vld [vmem:[%s167 + $0x6c] sm:$0xf]
      %v205 = vld [vmem:[%s167 + $0x70] sm:$0xf]
      %v206 = vld [vmem:[%s167 + $0x74] sm:$0xf]
      %v207 = vld [vmem:[%s167 + $0x78] sm:$0xf]
      %v208 = vld [vmem:[%s167 + $0x7c] sm:$0xf]
      %v209 = vld [vmem:[%s1] sm:$0xff]
      %v210 = vld [vmem:[%s1 + $0x8] sm:$0xff]
      %v211 = vld [vmem:[%s1 + $0x10] sm:$0xff]
      %v212 = vld [vmem:[%s1 + $0x18] sm:$0xff]
      %v213 = vld [vmem:[%s1 + $0x20] sm:$0xff]
      %v214 = vld [vmem:[%s1 + $0x28] sm:$0xff]
      %v215 = vld [vmem:[%s1 + $0x30] sm:$0xff]
      %v216 = vld [vmem:[%s1 + $0x38] sm:$0xff]
      %v217 = vld [vmem:[%s1 + $0x40] sm:$0xff]
      %v218 = vld [vmem:[%s1 + $0x48] sm:$0xff]
      %v219 = vld [vmem:[%s1 + $0x50] sm:$0xff]
      %v220 = vld [vmem:[%s1 + $0x58] sm:$0xff]
      %v221 = vld [vmem:[%s1 + $0x60] sm:$0xff]
      %v222 = vld [vmem:[%s1 + $0x68] sm:$0xff]
      %v223 = vld [vmem:[%s1 + $0x70] sm:$0xff]
      %v224 = vld [vmem:[%s1 + $0x78] sm:$0xff]
      %v225 = vld [vmem:[%s1 + $0x80] sm:$0xff]
      %v226 = vld [vmem:[%s1 + $0x88] sm:$0xff]
      %v227 = vld [vmem:[%s1 + $0x90] sm:$0xff]
      %v228 = vld [vmem:[%s1 + $0x98] sm:$0xff]
      %v229 = vld [vmem:[%s1 + $0xa0] sm:$0xff]
      %v230 = vld [vmem:[%s1 + $0xa8] sm:$0xff]
      %v231 = vld [vmem:[%s1 + $0xb0] sm:$0xff]
      %v232 = vld [vmem:[%s1 + $0xb8] sm:$0xff]
      %v233 = vld [vmem:[%s1 + $0xc0] sm:$0xff]
      %v234 = vld [vmem:[%s1 + $0xc8] sm:$0xff]
      %v235 = vld [vmem:[%s1 + $0xd0] sm:$0xff]
      %v236 = vld [vmem:[%s1 + $0xd8] sm:$0xff]
      %v237 = vld [vmem:[%s1 + $0xe0] sm:$0xff]
      %v238 = vld [vmem:[%s1 + $0xe8] sm:$0xff]
      %v239 = vld [vmem:[%s1 + $0xf0] sm:$0xff]
      %v240 = vld [vmem:[%s1 + $0xf8] sm:$0xff]
      %v241 = vld [vmem:[%s1 + $0x100] sm:$0xff]
      %v242 = vld [vmem:[%s1 + $0x108] sm:$0xff]
      %v243 = vld [vmem:[%s1 + $0x110] sm:$0xff]
      %v244 = vld [vmem:[%s1 + $0x118] sm:$0xff]
      %v245 = vld [vmem:[%s2] sm:$0x3f]
      %v247 = vlaneseq
      %v248 = vshrl.u32 %v247, 7
      %v249 = vsub.s32 0, %v248
      %v250 = vrot.slane %v245, %v249
      %v251 = vlaneseq
      %v252 = vshrl.u32 %v251, 7
      %v253 = vsub.s32 1, %v252
      %v254 = vrot.slane %v245, %v253
      %v255 = vlaneseq
      %v256 = vshrl.u32 %v255, 7
      %v257 = vsub.s32 2, %v256
      %v258 = vrot.slane %v245, %v257
      %v259 = vlaneseq
      %v260 = vshrl.u32 %v259, 7
      %v261 = vsub.s32 3, %v260
      %v262 = vrot.slane %v245, %v261
      %v263 = vlaneseq
      %v264 = vshrl.u32 %v263, 7
      %v265 = vsub.s32 4, %v264
      %v266 = vrot.slane %v245, %v265
      %v267 = vlaneseq
      %v268 = vshrl.u32 %v267, 7
      %v269 = vsub.s32 5, %v268
      %v270 = vrot.slane %v245, %v269
      %v309 = vunpack.c.l.b16 %v177
      %v310 = vunpack.c.l.b16 %v178
      %v311 = vunpack.c.l.b16 %v179
      %v312 = vunpack.c.l.b16 %v180
      %v313 = vunpack.c.l.b16 %v181
      %v314 = vunpack.c.l.b16 %v182
      %v315 = vunpack.c.l.b16 %v183
      %v316 = vunpack.c.l.b16 %v184
      %v317 = vunpack.c.l.b16 %v185
      %v318 = vunpack.c.l.b16 %v186
      %v319 = vunpack.c.l.b16 %v187
      %v320 = vunpack.c.l.b16 %v188
      %v321 = vunpack.c.l.b16 %v189
      %v322 = vunpack.c.l.b16 %v190
      %v323 = vunpack.c.l.b16 %v191
      %v324 = vunpack.c.l.b16 %v192
      %v325 = vunpack.c.l.b16 %v193
      %v326 = vunpack.c.l.b16 %v194
      %v327 = vunpack.c.l.b16 %v195
      %v328 = vunpack.c.l.b16 %v196
      %v329 = vunpack.c.l.b16 %v197
      %v330 = vunpack.c.l.b16 %v198
      %v331 = vunpack.c.l.b16 %v199
      %v332 = vunpack.c.l.b16 %v200
      %v333 = vunpack.c.l.b16 %v201
      %v334 = vunpack.c.l.b16 %v202
      %v335 = vunpack.c.l.b16 %v203
      %v336 = vunpack.c.l.b16 %v204
      %v337 = vunpack.c.l.b16 %v205
      %v338 = vunpack.c.l.b16 %v206
      %v339 = vunpack.c.l.b16 %v207
      %v340 = vunpack.c.l.b16 %v208
      %v341 = vpack.c.b16 %v310, %v309
      %v342 = vpack.c.b16 %v312, %v311
      %v343 = vpack.c.b16 %v314, %v313
      %v344 = vpack.c.b16 %v316, %v315
      %v345 = vpack.c.b16 %v318, %v317
      %v346 = vpack.c.b16 %v320, %v319
      %v347 = vpack.c.b16 %v322, %v321
      %v348 = vpack.c.b16 %v324, %v323
      %v349 = vpack.c.b16 %v326, %v325
      %v350 = vpack.c.b16 %v328, %v327
      %v351 = vpack.c.b16 %v330, %v329
      %v352 = vpack.c.b16 %v332, %v331
      %v353 = vpack.c.b16 %v334, %v333
      %v354 = vpack.c.b16 %v336, %v335
      %v355 = vpack.c.b16 %v338, %v337
      %v356 = vpack.c.b16 %v340, %v339
      %v393 = vunpack.c.l.b16 %v209
      %v394 = vunpack.c.h.b16 %v209
      %v395 = vunpack.c.l.b16 %v210
      %v396 = vunpack.c.h.b16 %v210
      %v397 = vunpack.c.l.b16 %v211
      %v398 = vunpack.c.h.b16 %v211
      %v399 = vunpack.c.l.b16 %v212
      %v400 = vunpack.c.h.b16 %v212
      %v401 = vunpack.c.l.b16 %v213
      %v402 = vunpack.c.h.b16 %v213
      %v403 = vunpack.c.l.b16 %v214
      %v404 = vunpack.c.h.b16 %v214
      %v405 = vunpack.c.l.b16 %v215
      %v406 = vunpack.c.h.b16 %v215
      %v407 = vunpack.c.l.b16 %v216
      %v408 = vunpack.c.h.b16 %v216
      %v409 = vunpack.c.l.b16 %v217
      %v410 = vunpack.c.h.b16 %v217
      %v411 = vunpack.c.l.b16 %v218
      %v412 = vunpack.c.h.b16 %v218
      %v413 = vunpack.c.l.b16 %v219
      %v414 = vunpack.c.h.b16 %v219
      %v415 = vunpack.c.l.b16 %v220
      %v416 = vunpack.c.h.b16 %v220
      %v417 = vunpack.c.l.b16 %v221
      %v418 = vunpack.c.h.b16 %v221
      %v419 = vunpack.c.l.b16 %v222
      %v420 = vunpack.c.h.b16 %v222
      %v421 = vunpack.c.l.b16 %v223
      %v422 = vunpack.c.h.b16 %v223
      %v423 = vunpack.c.l.b16 %v224
      %v424 = vunpack.c.h.b16 %v224
      %v425 = vunpack.c.l.b16 %v225
      %v426 = vunpack.c.h.b16 %v225
      %v427 = vunpack.c.l.b16 %v226
      %v428 = vunpack.c.h.b16 %v226
      %v429 = vunpack.c.l.b16 %v227
      %v430 = vunpack.c.h.b16 %v227
      %v431 = vunpack.c.l.b16 %v228
      %v432 = vunpack.c.h.b16 %v228
      %v433 = vunpack.c.l.b16 %v229
      %v434 = vunpack.c.h.b16 %v229
      %v435 = vunpack.c.l.b16 %v230
      %v436 = vunpack.c.h.b16 %v230
      %v437 = vunpack.c.l.b16 %v231
      %v438 = vunpack.c.h.b16 %v231
      %v439 = vunpack.c.l.b16 %v232
      %v440 = vunpack.c.h.b16 %v232
      %v441 = vunpack.c.l.b16 %v233
      %v442 = vunpack.c.h.b16 %v233
      %v443 = vunpack.c.l.b16 %v234
      %v444 = vunpack.c.h.b16 %v234
      %v445 = vunpack.c.l.b16 %v235
      %v446 = vunpack.c.h.b16 %v235
      %v447 = vunpack.c.l.b16 %v236
      %v448 = vunpack.c.h.b16 %v236
      %v449 = vunpack.c.l.b16 %v237
      %v450 = vunpack.c.h.b16 %v237
      %v451 = vunpack.c.l.b16 %v238
      %v452 = vunpack.c.h.b16 %v238
      %v453 = vunpack.c.l.b16 %v239
      %v454 = vunpack.c.h.b16 %v239
      %v455 = vunpack.c.l.b16 %v240
      %v456 = vunpack.c.h.b16 %v240
      %v457 = vunpack.c.l.b16 %v241
      %v458 = vunpack.c.h.b16 %v241
      %v459 = vunpack.c.l.b16 %v242
      %v460 = vunpack.c.h.b16 %v242
      %v461 = vunpack.c.l.b16 %v243
      %v462 = vunpack.c.h.b16 %v243
      %v463 = vunpack.c.l.b16 %v244
      %v464 = vunpack.c.h.b16 %v244
      %v465 = vpack.c.b16 %v399, %v393
      %v466 = vpack.c.b16 %v400, %v394
      %v467 = vpack.c.b16 %v401, %v395
      %v468 = vpack.c.b16 %v402, %v396
      %v469 = vpack.c.b16 %v403, %v397
      %v470 = vpack.c.b16 %v404, %v398
      %v471 = vpack.c.b16 %v411, %v405
      %v472 = vpack.c.b16 %v412, %v406
      %v473 = vpack.c.b16 %v413, %v407
      %v474 = vpack.c.b16 %v414, %v408
      %v475 = vpack.c.b16 %v415, %v409
      %v476 = vpack.c.b16 %v416, %v410
      %v477 = vpack.c.b16 %v423, %v417
      %v478 = vpack.c.b16 %v424, %v418
      %v479 = vpack.c.b16 %v425, %v419
      %v480 = vpack.c.b16 %v426, %v420
      %v481 = vpack.c.b16 %v427, %v421
      %v482 = vpack.c.b16 %v428, %v422
      %v483 = vpack.c.b16 %v435, %v429
      %v484 = vpack.c.b16 %v436, %v430
      %v485 = vpack.c.b16 %v437, %v431
      %v486 = vpack.c.b16 %v438, %v432
      %v487 = vpack.c.b16 %v439, %v433
      %v488 = vpack.c.b16 %v440, %v434
      %v489 = vpack.c.b16 %v447, %v441
      %v490 = vpack.c.b16 %v448, %v442
      %v491 = vpack.c.b16 %v449, %v443
      %v492 = vpack.c.b16 %v450, %v444
      %v493 = vpack.c.b16 %v451, %v445
      %v494 = vpack.c.b16 %v452, %v446
      %v495 = vpack.c.b16 %v459, %v453
      %v496 = vpack.c.b16 %v460, %v454
      %v497 = vpack.c.b16 %v461, %v455
      %v498 = vpack.c.b16 %v462, %v456
      %v499 = vpack.c.b16 %v463, %v457
      %v500 = vpack.c.b16 %v464, %v458
      %vm537 = vcmask 785408
      %v539 = vsel %vm537, %v341, 0
      %v542 = vsel %vm537, %v342, 0
      %v545 = vsel %vm537, %v343, 0
      %v548 = vsel %vm537, %v344, 0
      %v551 = vsel %vm537, %v345, 0
      %v554 = vsel %vm537, %v346, 0
      %v557 = vsel %vm537, %v347, 0
      %v560 = vsel %vm537, %v348, 0
      %v563 = vsel %vm537, %v349, 0
      %v566 = vsel %vm537, %v350, 0
      %v569 = vsel %vm537, %v351, 0
      %v572 = vsel %vm537, %v352, 0
      %v575 = vsel %vm537, %v353, 0
      %v578 = vsel %vm537, %v354, 0
      %v581 = vsel %vm537, %v355, 0
      %v584 = vsel %vm537, %v356, 0
      %586 = vmatprep.subr.bf16.mxu0 %v466
      %587 = vmatpush1.bf16.msra.mxu0 %v465
      %588 = vmatprep.subr.bf16.mxu0 %v472
      %589 = vmatpush1.bf16.msra.mxu0 %v471
      %590 = vmatprep.subr.bf16.mxu0 %v478
      %591 = vmatpush1.bf16.msra.mxu0 %v477
      %592 = vmatprep.subr.bf16.mxu0 %v484
      %593 = vmatpush1.bf16.msra.mxu0 %v483
      %594 = vmatprep.subr.bf16.mxu0 %v490
      %595 = vmatpush1.bf16.msra.mxu0 %v489
      %596 = vmatprep.subr.bf16.mxu0 %v496
      %597 = vmatpush1.bf16.msra.mxu0 %v495
      %598 = vmatprep.subr.bf16.mxu0 0
      %599 = vmatpush1.bf16.msra.mxu0 0
      %600 = vmatprep.subr.bf16.mxu0 0
      %601 = vmatpush1.bf16.msra.mxu0 0
      %602 = vmatprep.subr.bf16.mxu0 0
      %603 = vmatpush1.bf16.msra.mxu0 0
      %604 = vmatprep.subr.bf16.mxu0 0
      %605 = vmatpush1.bf16.msra.mxu0 0
      %606 = vmatprep.subr.bf16.mxu0 0
      %607 = vmatpush1.bf16.msra.mxu0 0
      %608 = vmatprep.subr.bf16.mxu0 0
      %609 = vmatpush1.bf16.msra.mxu0 0
      %610 = vmatprep.subr.bf16.mxu0 0
      %611 = vmatpush1.bf16.msra.mxu0 0
      %612 = vmatprep.subr.bf16.mxu0 0
      %613 = vmatpush1.bf16.msra.mxu0 0
      %614 = vmatprep.subr.bf16.mxu0 0
      %615 = vmatpush1.bf16.msra.mxu0 0
      %616 = vmatprep.subr.bf16.mxu0 0
      %617 = vmatpush1.bf16.msra.mxu0 0
      %618 = vmatprep.mubr.bf16.mxu0 0
      %619 = vmatmul.mubr.bf16.gmra.mrb[0].mxu0 %v539
      %v620 = vpop.f32.mrb[0].mxu0
      %v621 = vadd.f32 %v250, %v620
      %v622 = vpop.f32.mrb[0].mxu0
      %v623 = vadd.f32 %v254, %v622
      %v624 = vpop.f32.mrb[0].mxu0
      %v625 = vadd.f32 %v250, %v624
      %v626 = vpop.f32.mrb[0].mxu0
      %v627 = vadd.f32 %v254, %v626
      %628 = vmatprep.mubr.bf16.mxu0 0
      %629 = vmatmul.mubr.bf16.gmra.mrb[0].mxu0 %v542
      %v630 = vpop.f32.mrb[0].mxu0
      %v631 = vadd.f32 %v250, %v630
      %v632 = vpop.f32.mrb[0].mxu0
      %v633 = vadd.f32 %v254, %v632
      %v634 = vpop.f32.mrb[0].mxu0
      %v635 = vadd.f32 %v250, %v634
      %v636 = vpop.f32.mrb[0].mxu0
      %v637 = vadd.f32 %v254, %v636
      %638 = vmatprep.mubr.bf16.mxu0 0
      %639 = vmatmul.mubr.bf16.gmra.mrb[0].mxu0 %v545
      %v640 = vpop.f32.mrb[0].mxu0
      %v641 = vadd.f32 %v250, %v640
      %v642 = vpop.f32.mrb[0].mxu0
      %v643 = vadd.f32 %v254, %v642
      %v644 = vpop.f32.mrb[0].mxu0
      %v645 = vadd.f32 %v250, %v644
      %v646 = vpop.f32.mrb[0].mxu0
      %v647 = vadd.f32 %v254, %v646
      %648 = vmatprep.mubr.bf16.mxu0 0
      %649 = vmatmul.mubr.bf16.gmra.mrb[0].mxu0 %v548
      %v650 = vpop.f32.mrb[0].mxu0
      %v651 = vadd.f32 %v250, %v650
      %v652 = vpop.f32.mrb[0].mxu0
      %v653 = vadd.f32 %v254, %v652
      %v654 = vpop.f32.mrb[0].mxu0
      %v655 = vadd.f32 %v250, %v654
      %v656 = vpop.f32.mrb[0].mxu0
      %v657 = vadd.f32 %v254, %v656
      %658 = vmatprep.mubr.bf16.mxu0 0
      %659 = vmatmul.mubr.bf16.gmra.mrb[0].mxu0 %v551
      %v660 = vpop.f32.mrb[0].mxu0
      %v661 = vadd.f32 %v250, %v660
      %v662 = vpop.f32.mrb[0].mxu0
      %v663 = vadd.f32 %v254, %v662
      %v664 = vpop.f32.mrb[0].mxu0
      %v665 = vadd.f32 %v250, %v664
      %v666 = vpop.f32.mrb[0].mxu0
      %v667 = vadd.f32 %v254, %v666
      %668 = vmatprep.mubr.bf16.mxu0 0
      %669 = vmatmul.mubr.bf16.gmra.mrb[0].mxu0 %v554
      %v670 = vpop.f32.mrb[0].mxu0
      %v671 = vadd.f32 %v250, %v670
      %v672 = vpop.f32.mrb[0].mxu0
      %v673 = vadd.f32 %v254, %v672
      %v674 = vpop.f32.mrb[0].mxu0
      %v675 = vadd.f32 %v250, %v674
      %v676 = vpop.f32.mrb[0].mxu0
      %v677 = vadd.f32 %v254, %v676
      %678 = vmatprep.mubr.bf16.mxu0 0
      %679 = vmatmul.mubr.bf16.gmra.mrb[0].mxu0 %v557
      %v680 = vpop.f32.mrb[0].mxu0
      %v681 = vadd.f32 %v250, %v680
      %v682 = vpop.f32.mrb[0].mxu0
      %v683 = vadd.f32 %v254, %v682
      %v684 = vpop.f32.mrb[0].mxu0
      %v685 = vadd.f32 %v250, %v684
      %v686 = vpop.f32.mrb[0].mxu0
      %v687 = vadd.f32 %v254, %v686
      %688 = vmatprep.mubr.bf16.mxu0 0
      %689 = vmatmul.mubr.bf16.gmra.mrb[0].mxu0 %v560
      %v690 = vpop.f32.mrb[0].mxu0
      %v691 = vadd.f32 %v250, %v690
      %v692 = vpop.f32.mrb[0].mxu0
      %v693 = vadd.f32 %v254, %v692
      %v694 = vpop.f32.mrb[0].mxu0
      %v695 = vadd.f32 %v250, %v694
      %v696 = vpop.f32.mrb[0].mxu0
      %v697 = vadd.f32 %v254, %v696
      %698 = vmatprep.mubr.bf16.mxu0 0
      %699 = vmatmul.mubr.bf16.gmra.mrb[0].mxu0 %v563
      %v700 = vpop.f32.mrb[0].mxu0
      %v701 = vadd.f32 %v250, %v700
      %v702 = vpop.f32.mrb[0].mxu0
      %v703 = vadd.f32 %v254, %v702
      %v704 = vpop.f32.mrb[0].mxu0
      %v705 = vadd.f32 %v250, %v704
      %v706 = vpop.f32.mrb[0].mxu0
      %v707 = vadd.f32 %v254, %v706
      %708 = vmatprep.mubr.bf16.mxu0 0
      %709 = vmatmul.mubr.bf16.gmra.mrb[0].mxu0 %v566
      %v710 = vpop.f32.mrb[0].mxu0
      %v711 = vadd.f32 %v250, %v710
      %v712 = vpop.f32.mrb[0].mxu0
      %v713 = vadd.f32 %v254, %v712
      %v714 = vpop.f32.mrb[0].mxu0
      %v715 = vadd.f32 %v250, %v714
      %v716 = vpop.f32.mrb[0].mxu0
      %v717 = vadd.f32 %v254, %v716
      %718 = vmatprep.mubr.bf16.mxu0 0
      %719 = vmatmul.mubr.bf16.gmra.mrb[0].mxu0 %v569
      %v720 = vpop.f32.mrb[0].mxu0
      %v721 = vadd.f32 %v250, %v720
      %v722 = vpop.f32.mrb[0].mxu0
      %v723 = vadd.f32 %v254, %v722
      %v724 = vpop.f32.mrb[0].mxu0
      %v725 = vadd.f32 %v250, %v724
      %v726 = vpop.f32.mrb[0].mxu0
      %v727 = vadd.f32 %v254, %v726
      %728 = vmatprep.mubr.bf16.mxu0 0
      %729 = vmatmul.mubr.bf16.gmra.mrb[0].mxu0 %v572
      %v730 = vpop.f32.mrb[0].mxu0
      %v731 = vadd.f32 %v250, %v730
      %v732 = vpop.f32.mrb[0].mxu0
      %v733 = vadd.f32 %v254, %v732
      %v734 = vpop.f32.mrb[0].mxu0
      %v735 = vadd.f32 %v250, %v734
      %v736 = vpop.f32.mrb[0].mxu0
      %v737 = vadd.f32 %v254, %v736
      %738 = vmatprep.mubr.bf16.mxu0 0
      %739 = vmatmul.mubr.bf16.gmra.mrb[0].mxu0 %v575
      %v740 = vpop.f32.mrb[0].mxu0
      %v741 = vadd.f32 %v250, %v740
      %v742 = vpop.f32.mrb[0].mxu0
      %v743 = vadd.f32 %v254, %v742
      %v744 = vpop.f32.mrb[0].mxu0
      %v745 = vadd.f32 %v250, %v744
      %v746 = vpop.f32.mrb[0].mxu0
      %v747 = vadd.f32 %v254, %v746
      %748 = vmatprep.mubr.bf16.mxu0 0
      %749 = vmatmul.mubr.bf16.gmra.mrb[0].mxu0 %v578
      %v750 = vpop.f32.mrb[0].mxu0
      %v751 = vadd.f32 %v250, %v750
      %v752 = vpop.f32.mrb[0].mxu0
      %v753 = vadd.f32 %v254, %v752
      %v754 = vpop.f32.mrb[0].mxu0
      %v755 = vadd.f32 %v250, %v754
      %v756 = vpop.f32.mrb[0].mxu0
      %v757 = vadd.f32 %v254, %v756
      %758 = vmatprep.mubr.bf16.mxu0 0
      %759 = vmatmul.mubr.bf16.gmra.mrb[0].mxu0 %v581
      %v760 = vpop.f32.mrb[0].mxu0
      %v761 = vadd.f32 %v250, %v760
      %v762 = vpop.f32.mrb[0].mxu0
      %v763 = vadd.f32 %v254, %v762
      %v764 = vpop.f32.mrb[0].mxu0
      %v765 = vadd.f32 %v250, %v764
      %v766 = vpop.f32.mrb[0].mxu0
      %v767 = vadd.f32 %v254, %v766
      %768 = vmatprep.mubr.bf16.mxu0 0
      %769 = vmatmul.mubr.bf16.gmra.mrb[0].mxu0 %v584
      %v770 = vpop.f32.mrb[0].mxu0
      %v771 = vadd.f32 %v250, %v770
      %v772 = vpop.f32.mrb[0].mxu0
      %v773 = vadd.f32 %v254, %v772
      %v774 = vpop.f32.mrb[0].mxu0
      %v775 = vadd.f32 %v250, %v774
      %v776 = vpop.f32.mrb[0].mxu0
      %v777 = vadd.f32 %v254, %v776
      %778 = vdwg.mxu0
      %779 = vmatprep.subr.bf16.mxu0 %v468
      %780 = vmatpush1.bf16.msra.mxu0 %v467
      %781 = vmatprep.subr.bf16.mxu0 %v474
      %782 = vmatpush1.bf16.msra.mxu0 %v473
      %783 = vmatprep.subr.bf16.mxu0 %v480
      %784 = vmatpush1.bf16.msra.mxu0 %v479
      %785 = vmatprep.subr.bf16.mxu0 %v486
      %786 = vmatpush1.bf16.msra.mxu0 %v485
      %787 = vmatprep.subr.bf16.mxu0 %v492
      %788 = vmatpush1.bf16.msra.mxu0 %v491
      %789 = vmatprep.subr.bf16.mxu0 %v498
      %790 = vmatpush1.bf16.msra.mxu0 %v497
      %791 = vmatprep.subr.bf16.mxu0 0
      %792 = vmatpush1.bf16.msra.mxu0 0
      %793 = vmatprep.subr.bf16.mxu0 0
      %794 = vmatpush1.bf16.msra.mxu0 0
      %795 = vmatprep.subr.bf16.mxu0 0
      %796 = vmatpush1.bf16.msra.mxu0 0
      %797 = vmatprep.subr.bf16.mxu0 0
      %798 = vmatpush1.bf16.msra.mxu0 0
      %799 = vmatprep.subr.bf16.mxu0 0
      %800 = vmatpush1.bf16.msra.mxu0 0
      %801 = vmatprep.subr.bf16.mxu0 0
      %802 = vmatpush1.bf16.msra.mxu0 0
      %803 = vmatprep.subr.bf16.mxu0 0
      %804 = vmatpush1.bf16.msra.mxu0 0
      %805 = vmatprep.subr.bf16.mxu0 0
      %806 = vmatpush1.bf16.msra.mxu0 0
      %807 = vmatprep.subr.bf16.mxu0 0
      %808 = vmatpush1.bf16.msra.mxu0 0
      %809 = vmatprep.subr.bf16.mxu0 0
      %810 = vmatpush1.bf16.msra.mxu0 0
      %811 = vmatprep.mubr.bf16.mxu0 0
      %812 = vmatmul.mubr.bf16.gmra.mrb[0].mxu0 %v539
      %v813 = vpop.f32.mrb[0].mxu0
      %v814 = vadd.f32 %v258, %v813
      %v815 = vpop.f32.mrb[0].mxu0
      %v816 = vadd.f32 %v262, %v815
      %v817 = vpop.f32.mrb[0].mxu0
      %v818 = vadd.f32 %v258, %v817
      %v819 = vpop.f32.mrb[0].mxu0
      %v820 = vadd.f32 %v262, %v819
      %821 = vmatprep.mubr.bf16.mxu0 0
      %822 = vmatmul.mubr.bf16.gmra.mrb[0].mxu0 %v542
      %v823 = vpop.f32.mrb[0].mxu0
      %v824 = vadd.f32 %v258, %v823
      %v825 = vpop.f32.mrb[0].mxu0
      %v826 = vadd.f32 %v262, %v825
      %v827 = vpop.f32.mrb[0].mxu0
      %v828 = vadd.f32 %v258, %v827
      %v829 = vpop.f32.mrb[0].mxu0
      %v830 = vadd.f32 %v262, %v829
      %831 = vmatprep.mubr.bf16.mxu0 0
      %832 = vmatmul.mubr.bf16.gmra.mrb[0].mxu0 %v545
      %v833 = vpop.f32.mrb[0].mxu0
      %v834 = vadd.f32 %v258, %v833
      %v835 = vpop.f32.mrb[0].mxu0
      %v836 = vadd.f32 %v262, %v835
      %v837 = vpop.f32.mrb[0].mxu0
      %v838 = vadd.f32 %v258, %v837
      %v839 = vpop.f32.mrb[0].mxu0
      %v840 = vadd.f32 %v262, %v839
      %841 = vmatprep.mubr.bf16.mxu0 0
      %842 = vmatmul.mubr.bf16.gmra.mrb[0].mxu0 %v548
      %v843 = vpop.f32.mrb[0].mxu0
      %v844 = vadd.f32 %v258, %v843
      %v845 = vpop.f32.mrb[0].mxu0
      %v846 = vadd.f32 %v262, %v845
      %v847 = vpop.f32.mrb[0].mxu0
      %v848 = vadd.f32 %v258, %v847
      %v849 = vpop.f32.mrb[0].mxu0
      %v850 = vadd.f32 %v262, %v849
      %851 = vmatprep.mubr.bf16.mxu0 0
      %852 = vmatmul.mubr.bf16.gmra.mrb[0].mxu0 %v551
      %v853 = vpop.f32.mrb[0].mxu0
      %v854 = vadd.f32 %v258, %v853
      %v855 = vpop.f32.mrb[0].mxu0
      %v856 = vadd.f32 %v262, %v855
      %v857 = vpop.f32.mrb[0].mxu0
      %v858 = vadd.f32 %v258, %v857
      %v859 = vpop.f32.mrb[0].mxu0
      %v860 = vadd.f32 %v262, %v859
      %861 = vmatprep.mubr.bf16.mxu0 0
      %862 = vmatmul.mubr.bf16.gmra.mrb[0].mxu0 %v554
      %v863 = vpop.f32.mrb[0].mxu0
      %v864 = vadd.f32 %v258, %v863
      %v865 = vpop.f32.mrb[0].mxu0
      %v866 = vadd.f32 %v262, %v865
      %v867 = vpop.f32.mrb[0].mxu0
      %v868 = vadd.f32 %v258, %v867
      %v869 = vpop.f32.mrb[0].mxu0
      %v870 = vadd.f32 %v262, %v869
      %871 = vmatprep.mubr.bf16.mxu0 0
      %872 = vmatmul.mubr.bf16.gmra.mrb[0].mxu0 %v557
      %v873 = vpop.f32.mrb[0].mxu0
      %v874 = vadd.f32 %v258, %v873
      %v875 = vpop.f32.mrb[0].mxu0
      %v876 = vadd.f32 %v262, %v875
      %v877 = vpop.f32.mrb[0].mxu0
      %v878 = vadd.f32 %v258, %v877
      %v879 = vpop.f32.mrb[0].mxu0
      %v880 = vadd.f32 %v262, %v879
      %881 = vmatprep.mubr.bf16.mxu0 0
      %882 = vmatmul.mubr.bf16.gmra.mrb[0].mxu0 %v560
      %v883 = vpop.f32.mrb[0].mxu0
      %v884 = vadd.f32 %v258, %v883
      %v885 = vpop.f32.mrb[0].mxu0
      %v886 = vadd.f32 %v262, %v885
      %v887 = vpop.f32.mrb[0].mxu0
      %v888 = vadd.f32 %v258, %v887
      %v889 = vpop.f32.mrb[0].mxu0
      %v890 = vadd.f32 %v262, %v889
      %891 = vmatprep.mubr.bf16.mxu0 0
      %892 = vmatmul.mubr.bf16.gmra.mrb[0].mxu0 %v563
      %v893 = vpop.f32.mrb[0].mxu0
      %v894 = vadd.f32 %v258, %v893
      %v895 = vpop.f32.mrb[0].mxu0
      %v896 = vadd.f32 %v262, %v895
      %v897 = vpop.f32.mrb[0].mxu0
      %v898 = vadd.f32 %v258, %v897
      %v899 = vpop.f32.mrb[0].mxu0
      %v900 = vadd.f32 %v262, %v899
      %901 = vmatprep.mubr.bf16.mxu0 0
      %902 = vmatmul.mubr.bf16.gmra.mrb[0].mxu0 %v566
      %v903 = vpop.f32.mrb[0].mxu0
      %v904 = vadd.f32 %v258, %v903
      %v905 = vpop.f32.mrb[0].mxu0
      %v906 = vadd.f32 %v262, %v905
      %v907 = vpop.f32.mrb[0].mxu0
      %v908 = vadd.f32 %v258, %v907
      %v909 = vpop.f32.mrb[0].mxu0
      %v910 = vadd.f32 %v262, %v909
      %911 = vmatprep.mubr.bf16.mxu0 0
      %912 = vmatmul.mubr.bf16.gmra.mrb[0].mxu0 %v569
      %v913 = vpop.f32.mrb[0].mxu0
      %v914 = vadd.f32 %v258, %v913
      %v915 = vpop.f32.mrb[0].mxu0
      %v916 = vadd.f32 %v262, %v915
      %v917 = vpop.f32.mrb[0].mxu0
      %v918 = vadd.f32 %v258, %v917
      %v919 = vpop.f32.mrb[0].mxu0
      %v920 = vadd.f32 %v262, %v919
      %921 = vmatprep.mubr.bf16.mxu0 0
      %922 = vmatmul.mubr.bf16.gmra.mrb[0].mxu0 %v572
      %v923 = vpop.f32.mrb[0].mxu0
      %v924 = vadd.f32 %v258, %v923
      %v925 = vpop.f32.mrb[0].mxu0
      %v926 = vadd.f32 %v262, %v925
      %v927 = vpop.f32.mrb[0].mxu0
      %v928 = vadd.f32 %v258, %v927
      %v929 = vpop.f32.mrb[0].mxu0
      %v930 = vadd.f32 %v262, %v929
      %931 = vmatprep.mubr.bf16.mxu0 0
      %932 = vmatmul.mubr.bf16.gmra.mrb[0].mxu0 %v575
      %v933 = vpop.f32.mrb[0].mxu0
      %v934 = vadd.f32 %v258, %v933
      %v935 = vpop.f32.mrb[0].mxu0
      %v936 = vadd.f32 %v262, %v935
      %v937 = vpop.f32.mrb[0].mxu0
      %v938 = vadd.f32 %v258, %v937
      %v939 = vpop.f32.mrb[0].mxu0
      %v940 = vadd.f32 %v262, %v939
      %941 = vmatprep.mubr.bf16.mxu0 0
      %942 = vmatmul.mubr.bf16.gmra.mrb[0].mxu0 %v578
      %v943 = vpop.f32.mrb[0].mxu0
      %v944 = vadd.f32 %v258, %v943
      %v945 = vpop.f32.mrb[0].mxu0
      %v946 = vadd.f32 %v262, %v945
      %v947 = vpop.f32.mrb[0].mxu0
      %v948 = vadd.f32 %v258, %v947
      %v949 = vpop.f32.mrb[0].mxu0
      %v950 = vadd.f32 %v262, %v949
      %951 = vmatprep.mubr.bf16.mxu0 0
      %952 = vmatmul.mubr.bf16.gmra.mrb[0].mxu0 %v581
      %v953 = vpop.f32.mrb[0].mxu0
      %v954 = vadd.f32 %v258, %v953
      %v955 = vpop.f32.mrb[0].mxu0
      %v956 = vadd.f32 %v262, %v955
      %v957 = vpop.f32.mrb[0].mxu0
      %v958 = vadd.f32 %v258, %v957
      %v959 = vpop.f32.mrb[0].mxu0
      %v960 = vadd.f32 %v262, %v959
      %961 = vmatprep.mubr.bf16.mxu0 0
      %962 = vmatmul.mubr.bf16.gmra.mrb[0].mxu0 %v584
      %v963 = vpop.f32.mrb[0].mxu0
      %v964 = vadd.f32 %v258, %v963
      %v965 = vpop.f32.mrb[0].mxu0
      %v966 = vadd.f32 %v262, %v965
      %v967 = vpop.f32.mrb[0].mxu0
      %v968 = vadd.f32 %v258, %v967
      %v969 = vpop.f32.mrb[0].mxu0
      %v970 = vadd.f32 %v262, %v969
      %971 = vdwg.mxu0
      %972 = vmatprep.subr.bf16.mxu0 %v470
      %973 = vmatpush1.bf16.msra.mxu0 %v469
      %974 = vmatprep.subr.bf16.mxu0 %v476
      %975 = vmatpush1.bf16.msra.mxu0 %v475
      %976 = vmatprep.subr.bf16.mxu0 %v482
      %977 = vmatpush1.bf16.msra.mxu0 %v481
      %978 = vmatprep.subr.bf16.mxu0 %v488
      %979 = vmatpush1.bf16.msra.mxu0 %v487
      %980 = vmatprep.subr.bf16.mxu0 %v494
      %981 = vmatpush1.bf16.msra.mxu0 %v493
      %982 = vmatprep.subr.bf16.mxu0 %v500
      %983 = vmatpush1.bf16.msra.mxu0 %v499
      %984 = vmatprep.subr.bf16.mxu0 0
      %985 = vmatpush1.bf16.msra.mxu0 0
      %986 = vmatprep.subr.bf16.mxu0 0
      %987 = vmatpush1.bf16.msra.mxu0 0
      %988 = vmatprep.subr.bf16.mxu0 0
      %989 = vmatpush1.bf16.msra.mxu0 0
      %990 = vmatprep.subr.bf16.mxu0 0
      %991 = vmatpush1.bf16.msra.mxu0 0
      %992 = vmatprep.subr.bf16.mxu0 0
      %993 = vmatpush1.bf16.msra.mxu0 0
      %994 = vmatprep.subr.bf16.mxu0 0
      %995 = vmatpush1.bf16.msra.mxu0 0
      %996 = vmatprep.subr.bf16.mxu0 0
      %997 = vmatpush1.bf16.msra.mxu0 0
      %998 = vmatprep.subr.bf16.mxu0 0
      %999 = vmatpush1.bf16.msra.mxu0 0
      %1000 = vmatprep.subr.bf16.mxu0 0
      %1001 = vmatpush1.bf16.msra.mxu0 0
      %1002 = vmatprep.subr.bf16.mxu0 0
      %1003 = vmatpush1.bf16.msra.mxu0 0
      %1004 = vmatprep.mubr.bf16.mxu0 0
      %1005 = vmatmul.mubr.bf16.gmra.mrb[0].mxu0 %v539
      %v1006 = vpop.f32.mrb[0].mxu0
      %v1007 = vadd.f32 %v266, %v1006
      %v1008 = vpop.f32.mrb[0].mxu0
      %v1009 = vadd.f32 %v270, %v1008
      %v1010 = vpop.f32.mrb[0].mxu0
      %v1011 = vadd.f32 %v266, %v1010
      %v1012 = vpop.f32.mrb[0].mxu0
      %v1013 = vadd.f32 %v270, %v1012
      %1014 = vmatprep.mubr.bf16.mxu0 0
      %1015 = vmatmul.mubr.bf16.gmra.mrb[0].mxu0 %v542
      %v1016 = vpop.f32.mrb[0].mxu0
      %v1017 = vadd.f32 %v266, %v1016
      %v1018 = vpop.f32.mrb[0].mxu0
      %v1019 = vadd.f32 %v270, %v1018
      %v1020 = vpop.f32.mrb[0].mxu0
      %v1021 = vadd.f32 %v266, %v1020
      %v1022 = vpop.f32.mrb[0].mxu0
      %v1023 = vadd.f32 %v270, %v1022
      %1024 = vmatprep.mubr.bf16.mxu0 0
      %1025 = vmatmul.mubr.bf16.gmra.mrb[0].mxu0 %v545
      %v1026 = vpop.f32.mrb[0].mxu0
      %v1027 = vadd.f32 %v266, %v1026
      %v1028 = vpop.f32.mrb[0].mxu0
      %v1029 = vadd.f32 %v270, %v1028
      %v1030 = vpop.f32.mrb[0].mxu0
      %v1031 = vadd.f32 %v266, %v1030
      %v1032 = vpop.f32.mrb[0].mxu0
      %v1033 = vadd.f32 %v270, %v1032
      %1034 = vmatprep.mubr.bf16.mxu0 0
      %1035 = vmatmul.mubr.bf16.gmra.mrb[0].mxu0 %v548
      %v1036 = vpop.f32.mrb[0].mxu0
      %v1037 = vadd.f32 %v266, %v1036
      %v1038 = vpop.f32.mrb[0].mxu0
      %v1039 = vadd.f32 %v270, %v1038
      %v1040 = vpop.f32.mrb[0].mxu0
      %v1041 = vadd.f32 %v266, %v1040
      %v1042 = vpop.f32.mrb[0].mxu0
      %v1043 = vadd.f32 %v270, %v1042
      %1044 = vmatprep.mubr.bf16.mxu0 0
      %1045 = vmatmul.mubr.bf16.gmra.mrb[0].mxu0 %v551
      %v1046 = vpop.f32.mrb[0].mxu0
      %v1047 = vadd.f32 %v266, %v1046
      %v1048 = vpop.f32.mrb[0].mxu0
      %v1049 = vadd.f32 %v270, %v1048
      %v1050 = vpop.f32.mrb[0].mxu0
      %v1051 = vadd.f32 %v266, %v1050
      %v1052 = vpop.f32.mrb[0].mxu0
      %v1053 = vadd.f32 %v270, %v1052
      %1054 = vmatprep.mubr.bf16.mxu0 0
      %1055 = vmatmul.mubr.bf16.gmra.mrb[0].mxu0 %v554
      %v1056 = vpop.f32.mrb[0].mxu0
      %v1057 = vadd.f32 %v266, %v1056
      %v1058 = vpop.f32.mrb[0].mxu0
      %v1059 = vadd.f32 %v270, %v1058
      %v1060 = vpop.f32.mrb[0].mxu0
      %v1061 = vadd.f32 %v266, %v1060
      %v1062 = vpop.f32.mrb[0].mxu0
      %v1063 = vadd.f32 %v270, %v1062
      %1064 = vmatprep.mubr.bf16.mxu0 0
      %1065 = vmatmul.mubr.bf16.gmra.mrb[0].mxu0 %v557
      %v1066 = vpop.f32.mrb[0].mxu0
      %v1067 = vadd.f32 %v266, %v1066
      %v1068 = vpop.f32.mrb[0].mxu0
      %v1069 = vadd.f32 %v270, %v1068
      %v1070 = vpop.f32.mrb[0].mxu0
      %v1071 = vadd.f32 %v266, %v1070
      %v1072 = vpop.f32.mrb[0].mxu0
      %v1073 = vadd.f32 %v270, %v1072
      %1074 = vmatprep.mubr.bf16.mxu0 0
      %1075 = vmatmul.mubr.bf16.gmra.mrb[0].mxu0 %v560
      %v1076 = vpop.f32.mrb[0].mxu0
      %v1077 = vadd.f32 %v266, %v1076
      %v1078 = vpop.f32.mrb[0].mxu0
      %v1079 = vadd.f32 %v270, %v1078
      %v1080 = vpop.f32.mrb[0].mxu0
      %v1081 = vadd.f32 %v266, %v1080
      %v1082 = vpop.f32.mrb[0].mxu0
      %v1083 = vadd.f32 %v270, %v1082
      %1084 = vmatprep.mubr.bf16.mxu0 0
      %1085 = vmatmul.mubr.bf16.gmra.mrb[0].mxu0 %v563
      %v1086 = vpop.f32.mrb[0].mxu0
      %v1087 = vadd.f32 %v266, %v1086
      %v1088 = vpop.f32.mrb[0].mxu0
      %v1089 = vadd.f32 %v270, %v1088
      %v1090 = vpop.f32.mrb[0].mxu0
      %v1091 = vadd.f32 %v266, %v1090
      %v1092 = vpop.f32.mrb[0].mxu0
      %v1093 = vadd.f32 %v270, %v1092
      %1094 = vmatprep.mubr.bf16.mxu0 0
      %1095 = vmatmul.mubr.bf16.gmra.mrb[0].mxu0 %v566
      %v1096 = vpop.f32.mrb[0].mxu0
      %v1097 = vadd.f32 %v266, %v1096
      %v1098 = vpop.f32.mrb[0].mxu0
      %v1099 = vadd.f32 %v270, %v1098
      %v1100 = vpop.f32.mrb[0].mxu0
      %v1101 = vadd.f32 %v266, %v1100
      %v1102 = vpop.f32.mrb[0].mxu0
      %v1103 = vadd.f32 %v270, %v1102
      %1104 = vmatprep.mubr.bf16.mxu0 0
      %1105 = vmatmul.mubr.bf16.gmra.mrb[0].mxu0 %v569
      %v1106 = vpop.f32.mrb[0].mxu0
      %v1107 = vadd.f32 %v266, %v1106
      %v1108 = vpop.f32.mrb[0].mxu0
      %v1109 = vadd.f32 %v270, %v1108
      %v1110 = vpop.f32.mrb[0].mxu0
      %v1111 = vadd.f32 %v266, %v1110
      %v1112 = vpop.f32.mrb[0].mxu0
      %v1113 = vadd.f32 %v270, %v1112
      %1114 = vmatprep.mubr.bf16.mxu0 0
      %1115 = vmatmul.mubr.bf16.gmra.mrb[0].mxu0 %v572
      %v1116 = vpop.f32.mrb[0].mxu0
      %v1117 = vadd.f32 %v266, %v1116
      %v1118 = vpop.f32.mrb[0].mxu0
      %v1119 = vadd.f32 %v270, %v1118
      %v1120 = vpop.f32.mrb[0].mxu0
      %v1121 = vadd.f32 %v266, %v1120
      %v1122 = vpop.f32.mrb[0].mxu0
      %v1123 = vadd.f32 %v270, %v1122
      %1124 = vmatprep.mubr.bf16.mxu0 0
      %1125 = vmatmul.mubr.bf16.gmra.mrb[0].mxu0 %v575
      %v1126 = vpop.f32.mrb[0].mxu0
      %v1127 = vadd.f32 %v266, %v1126
      %v1128 = vpop.f32.mrb[0].mxu0
      %v1129 = vadd.f32 %v270, %v1128
      %v1130 = vpop.f32.mrb[0].mxu0
      %v1131 = vadd.f32 %v266, %v1130
      %v1132 = vpop.f32.mrb[0].mxu0
      %v1133 = vadd.f32 %v270, %v1132
      %1134 = vmatprep.mubr.bf16.mxu0 0
      %1135 = vmatmul.mubr.bf16.gmra.mrb[0].mxu0 %v578
      %v1136 = vpop.f32.mrb[0].mxu0
      %v1137 = vadd.f32 %v266, %v1136
      %v1138 = vpop.f32.mrb[0].mxu0
      %v1139 = vadd.f32 %v270, %v1138
      %v1140 = vpop.f32.mrb[0].mxu0
      %v1141 = vadd.f32 %v266, %v1140
      %v1142 = vpop.f32.mrb[0].mxu0
      %v1143 = vadd.f32 %v270, %v1142
      %1144 = vmatprep.mubr.bf16.mxu0 0
      %1145 = vmatmul.mubr.bf16.gmra.mrb[0].mxu0 %v581
      %v1146 = vpop.f32.mrb[0].mxu0
      %v1147 = vadd.f32 %v266, %v1146
      %v1148 = vpop.f32.mrb[0].mxu0
      %v1149 = vadd.f32 %v270, %v1148
      %v1150 = vpop.f32.mrb[0].mxu0
      %v1151 = vadd.f32 %v266, %v1150
      %v1152 = vpop.f32.mrb[0].mxu0
      %v1153 = vadd.f32 %v270, %v1152
      %1154 = vmatprep.mubr.bf16.mxu0 0
      %1155 = vmatmul.mubr.bf16.gmra.mrb[0].mxu0 %v584
      %v1156 = vpop.f32.mrb[0].mxu0
      %v1157 = vadd.f32 %v266, %v1156
      %v1158 = vpop.f32.mrb[0].mxu0
      %v1159 = vadd.f32 %v270, %v1158
      %v1160 = vpop.f32.mrb[0].mxu0
      %v1161 = vadd.f32 %v266, %v1160
      %v1162 = vpop.f32.mrb[0].mxu0
      %v1163 = vadd.f32 %v270, %v1162
      %1164 = vdwg.mxu0
      %v1165 = vpack.c.bf16 %v625, %v621
      %v1166 = vpack.c.bf16 %v627, %v623
      %v1167 = vpack.c.bf16 %v818, %v814
      %v1168 = vpack.c.bf16 %v820, %v816
      %v1169 = vpack.c.bf16 %v1011, %v1007
      %v1170 = vpack.c.bf16 %v1013, %v1009
      %v1171 = vpack.c.bf16 %v635, %v631
      %v1172 = vpack.c.bf16 %v637, %v633
      %v1173 = vpack.c.bf16 %v828, %v824
      %v1174 = vpack.c.bf16 %v830, %v826
      %v1175 = vpack.c.bf16 %v1021, %v1017
      %v1176 = vpack.c.bf16 %v1023, %v1019
      %v1177 = vpack.c.bf16 %v645, %v641
      %v1178 = vpack.c.bf16 %v647, %v643
      %v1179 = vpack.c.bf16 %v838, %v834
      %v1180 = vpack.c.bf16 %v840, %v836
      %v1181 = vpack.c.bf16 %v1031, %v1027
      %v1182 = vpack.c.bf16 %v1033, %v1029
      %v1183 = vpack.c.bf16 %v655, %v651
      %v1184 = vpack.c.bf16 %v657, %v653
      %v1185 = vpack.c.bf16 %v848, %v844
      %v1186 = vpack.c.bf16 %v850, %v846
      %v1187 = vpack.c.bf16 %v1041, %v1037
      %v1188 = vpack.c.bf16 %v1043, %v1039
      %v1189 = vpack.c.bf16 %v665, %v661
      %v1190 = vpack.c.bf16 %v667, %v663
      %v1191 = vpack.c.bf16 %v858, %v854
      %v1192 = vpack.c.bf16 %v860, %v856
      %v1193 = vpack.c.bf16 %v1051, %v1047
      %v1194 = vpack.c.bf16 %v1053, %v1049
      %v1195 = vpack.c.bf16 %v675, %v671
      %v1196 = vpack.c.bf16 %v677, %v673
      %v1197 = vpack.c.bf16 %v868, %v864
      %v1198 = vpack.c.bf16 %v870, %v866
      %v1199 = vpack.c.bf16 %v1061, %v1057
      %v1200 = vpack.c.bf16 %v1063, %v1059
      %v1201 = vpack.c.bf16 %v685, %v681
      %v1202 = vpack.c.bf16 %v687, %v683
      %v1203 = vpack.c.bf16 %v878, %v874
      %v1204 = vpack.c.bf16 %v880, %v876
      %v1205 = vpack.c.bf16 %v1071, %v1067
      %v1206 = vpack.c.bf16 %v1073, %v1069
      %v1207 = vpack.c.bf16 %v695, %v691
      %v1208 = vpack.c.bf16 %v697, %v693
      %v1209 = vpack.c.bf16 %v888, %v884
      %v1210 = vpack.c.bf16 %v890, %v886
      %v1211 = vpack.c.bf16 %v1081, %v1077
      %v1212 = vpack.c.bf16 %v1083, %v1079
      %v1213 = vpack.c.bf16 %v705, %v701
      %v1214 = vpack.c.bf16 %v707, %v703
      %v1215 = vpack.c.bf16 %v898, %v894
      %v1216 = vpack.c.bf16 %v900, %v896
      %v1217 = vpack.c.bf16 %v1091, %v1087
      %v1218 = vpack.c.bf16 %v1093, %v1089
      %v1219 = vpack.c.bf16 %v715, %v711
      %v1220 = vpack.c.bf16 %v717, %v713
      %v1221 = vpack.c.bf16 %v908, %v904
      %v1222 = vpack.c.bf16 %v910, %v906
      %v1223 = vpack.c.bf16 %v1101, %v1097
      %v1224 = vpack.c.bf16 %v1103, %v1099
      %v1225 = vpack.c.bf16 %v725, %v721
      %v1226 = vpack.c.bf16 %v727, %v723
      %v1227 = vpack.c.bf16 %v918, %v914
      %v1228 = vpack.c.bf16 %v920, %v916
      %v1229 = vpack.c.bf16 %v1111, %v1107
      %v1230 = vpack.c.bf16 %v1113, %v1109
      %v1231 = vpack.c.bf16 %v735, %v731
      %v1232 = vpack.c.bf16 %v737, %v733
      %v1233 = vpack.c.bf16 %v928, %v924
      %v1234 = vpack.c.bf16 %v930, %v926
      %v1235 = vpack.c.bf16 %v1121, %v1117
      %v1236 = vpack.c.bf16 %v1123, %v1119
      %v1237 = vpack.c.bf16 %v745, %v741
      %v1238 = vpack.c.bf16 %v747, %v743
      %v1239 = vpack.c.bf16 %v938, %v934
      %v1240 = vpack.c.bf16 %v940, %v936
      %v1241 = vpack.c.bf16 %v1131, %v1127
      %v1242 = vpack.c.bf16 %v1133, %v1129
      %v1243 = vpack.c.bf16 %v755, %v751
      %v1244 = vpack.c.bf16 %v757, %v753
      %v1245 = vpack.c.bf16 %v948, %v944
      %v1246 = vpack.c.bf16 %v950, %v946
      %v1247 = vpack.c.bf16 %v1141, %v1137
      %v1248 = vpack.c.bf16 %v1143, %v1139
      %v1249 = vpack.c.bf16 %v765, %v761
      %v1250 = vpack.c.bf16 %v767, %v763
      %v1251 = vpack.c.bf16 %v958, %v954
      %v1252 = vpack.c.bf16 %v960, %v956
      %v1253 = vpack.c.bf16 %v1151, %v1147
      %v1254 = vpack.c.bf16 %v1153, %v1149
      %v1255 = vpack.c.bf16 %v775, %v771
      %v1256 = vpack.c.bf16 %v777, %v773
      %v1257 = vpack.c.bf16 %v968, %v964
      %v1258 = vpack.c.bf16 %v970, %v966
      %v1259 = vpack.c.bf16 %v1161, %v1157
      %v1260 = vpack.c.bf16 %v1163, %v1159
      %v1357 = vunpack.c.l.b16 %v1165
      %v1358 = vunpack.c.l.b16 %v1166
      %v1359 = vunpack.c.l.b16 %v1167
      %v1360 = vunpack.c.l.b16 %v1168
      %v1361 = vunpack.c.l.b16 %v1169
      %v1362 = vunpack.c.l.b16 %v1170
      %v1363 = vunpack.c.h.b16 %v1165
      %v1364 = vunpack.c.h.b16 %v1166
      %v1365 = vunpack.c.h.b16 %v1167
      %v1366 = vunpack.c.h.b16 %v1168
      %v1367 = vunpack.c.h.b16 %v1169
      %v1368 = vunpack.c.h.b16 %v1170
      %v1369 = vunpack.c.l.b16 %v1171
      %v1370 = vunpack.c.l.b16 %v1172
      %v1371 = vunpack.c.l.b16 %v1173
      %v1372 = vunpack.c.l.b16 %v1174
      %v1373 = vunpack.c.l.b16 %v1175
      %v1374 = vunpack.c.l.b16 %v1176
      %v1375 = vunpack.c.h.b16 %v1171
      %v1376 = vunpack.c.h.b16 %v1172
      %v1377 = vunpack.c.h.b16 %v1173
      %v1378 = vunpack.c.h.b16 %v1174
      %v1379 = vunpack.c.h.b16 %v1175
      %v1380 = vunpack.c.h.b16 %v1176
      %v1381 = vunpack.c.l.b16 %v1177
      %v1382 = vunpack.c.l.b16 %v1178
      %v1383 = vunpack.c.l.b16 %v1179
      %v1384 = vunpack.c.l.b16 %v1180
      %v1385 = vunpack.c.l.b16 %v1181
      %v1386 = vunpack.c.l.b16 %v1182
      %v1387 = vunpack.c.h.b16 %v1177
      %v1388 = vunpack.c.h.b16 %v1178
      %v1389 = vunpack.c.h.b16 %v1179
      %v1390 = vunpack.c.h.b16 %v1180
      %v1391 = vunpack.c.h.b16 %v1181
      %v1392 = vunpack.c.h.b16 %v1182
      %v1393 = vunpack.c.l.b16 %v1183
      %v1394 = vunpack.c.l.b16 %v1184
      %v1395 = vunpack.c.l.b16 %v1185
      %v1396 = vunpack.c.l.b16 %v1186
      %v1397 = vunpack.c.l.b16 %v1187
      %v1398 = vunpack.c.l.b16 %v1188
      %v1399 = vunpack.c.h.b16 %v1183
      %v1400 = vunpack.c.h.b16 %v1184
      %v1401 = vunpack.c.h.b16 %v1185
      %v1402 = vunpack.c.h.b16 %v1186
      %v1403 = vunpack.c.h.b16 %v1187
      %v1404 = vunpack.c.h.b16 %v1188
      %v1405 = vunpack.c.l.b16 %v1189
      %v1406 = vunpack.c.l.b16 %v1190
      %v1407 = vunpack.c.l.b16 %v1191
      %v1408 = vunpack.c.l.b16 %v1192
      %v1409 = vunpack.c.l.b16 %v1193
      %v1410 = vunpack.c.l.b16 %v1194
      %v1411 = vunpack.c.h.b16 %v1189
      %v1412 = vunpack.c.h.b16 %v1190
      %v1413 = vunpack.c.h.b16 %v1191
      %v1414 = vunpack.c.h.b16 %v1192
      %v1415 = vunpack.c.h.b16 %v1193
      %v1416 = vunpack.c.h.b16 %v1194
      %v1417 = vunpack.c.l.b16 %v1195
      %v1418 = vunpack.c.l.b16 %v1196
      %v1419 = vunpack.c.l.b16 %v1197
      %v1420 = vunpack.c.l.b16 %v1198
      %v1421 = vunpack.c.l.b16 %v1199
      %v1422 = vunpack.c.l.b16 %v1200
      %v1423 = vunpack.c.h.b16 %v1195
      %v1424 = vunpack.c.h.b16 %v1196
      %v1425 = vunpack.c.h.b16 %v1197
      %v1426 = vunpack.c.h.b16 %v1198
      %v1427 = vunpack.c.h.b16 %v1199
      %v1428 = vunpack.c.h.b16 %v1200
      %v1429 = vunpack.c.l.b16 %v1201
      %v1430 = vunpack.c.l.b16 %v1202
      %v1431 = vunpack.c.l.b16 %v1203
      %v1432 = vunpack.c.l.b16 %v1204
      %v1433 = vunpack.c.l.b16 %v1205
      %v1434 = vunpack.c.l.b16 %v1206
      %v1435 = vunpack.c.h.b16 %v1201
      %v1436 = vunpack.c.h.b16 %v1202
      %v1437 = vunpack.c.h.b16 %v1203
      %v1438 = vunpack.c.h.b16 %v1204
      %v1439 = vunpack.c.h.b16 %v1205
      %v1440 = vunpack.c.h.b16 %v1206
      %v1441 = vunpack.c.l.b16 %v1207
      %v1442 = vunpack.c.l.b16 %v1208
      %v1443 = vunpack.c.l.b16 %v1209
      %v1444 = vunpack.c.l.b16 %v1210
      %v1445 = vunpack.c.l.b16 %v1211
      %v1446 = vunpack.c.l.b16 %v1212
      %v1447 = vunpack.c.h.b16 %v1207
      %v1448 = vunpack.c.h.b16 %v1208
      %v1449 = vunpack.c.h.b16 %v1209
      %v1450 = vunpack.c.h.b16 %v1210
      %v1451 = vunpack.c.h.b16 %v1211
      %v1452 = vunpack.c.h.b16 %v1212
      %v1453 = vunpack.c.l.b16 %v1213
      %v1454 = vunpack.c.l.b16 %v1214
      %v1455 = vunpack.c.l.b16 %v1215
      %v1456 = vunpack.c.l.b16 %v1216
      %v1457 = vunpack.c.l.b16 %v1217
      %v1458 = vunpack.c.l.b16 %v1218
      %v1459 = vunpack.c.h.b16 %v1213
      %v1460 = vunpack.c.h.b16 %v1214
      %v1461 = vunpack.c.h.b16 %v1215
      %v1462 = vunpack.c.h.b16 %v1216
      %v1463 = vunpack.c.h.b16 %v1217
      %v1464 = vunpack.c.h.b16 %v1218
      %v1465 = vunpack.c.l.b16 %v1219
      %v1466 = vunpack.c.l.b16 %v1220
      %v1467 = vunpack.c.l.b16 %v1221
      %v1468 = vunpack.c.l.b16 %v1222
      %v1469 = vunpack.c.l.b16 %v1223
      %v1470 = vunpack.c.l.b16 %v1224
      %v1471 = vunpack.c.h.b16 %v1219
      %v1472 = vunpack.c.h.b16 %v1220
      %v1473 = vunpack.c.h.b16 %v1221
      %v1474 = vunpack.c.h.b16 %v1222
      %v1475 = vunpack.c.h.b16 %v1223
      %v1476 = vunpack.c.h.b16 %v1224
      %v1477 = vunpack.c.l.b16 %v1225
      %v1478 = vunpack.c.l.b16 %v1226
      %v1479 = vunpack.c.l.b16 %v1227
      %v1480 = vunpack.c.l.b16 %v1228
      %v1481 = vunpack.c.l.b16 %v1229
      %v1482 = vunpack.c.l.b16 %v1230
      %v1483 = vunpack.c.h.b16 %v1225
      %v1484 = vunpack.c.h.b16 %v1226
      %v1485 = vunpack.c.h.b16 %v1227
      %v1486 = vunpack.c.h.b16 %v1228
      %v1487 = vunpack.c.h.b16 %v1229
      %v1488 = vunpack.c.h.b16 %v1230
      %v1489 = vunpack.c.l.b16 %v1231
      %v1490 = vunpack.c.l.b16 %v1232
      %v1491 = vunpack.c.l.b16 %v1233
      %v1492 = vunpack.c.l.b16 %v1234
      %v1493 = vunpack.c.l.b16 %v1235
      %v1494 = vunpack.c.l.b16 %v1236
      %v1495 = vunpack.c.h.b16 %v1231
      %v1496 = vunpack.c.h.b16 %v1232
      %v1497 = vunpack.c.h.b16 %v1233
      %v1498 = vunpack.c.h.b16 %v1234
      %v1499 = vunpack.c.h.b16 %v1235
      %v1500 = vunpack.c.h.b16 %v1236
      %v1501 = vunpack.c.l.b16 %v1237
      %v1502 = vunpack.c.l.b16 %v1238
      %v1503 = vunpack.c.l.b16 %v1239
      %v1504 = vunpack.c.l.b16 %v1240
      %v1505 = vunpack.c.l.b16 %v1241
      %v1506 = vunpack.c.l.b16 %v1242
      %v1507 = vunpack.c.h.b16 %v1237
      %v1508 = vunpack.c.h.b16 %v1238
      %v1509 = vunpack.c.h.b16 %v1239
      %v1510 = vunpack.c.h.b16 %v1240
      %v1511 = vunpack.c.h.b16 %v1241
      %v1512 = vunpack.c.h.b16 %v1242
      %v1513 = vunpack.c.l.b16 %v1243
      %v1514 = vunpack.c.l.b16 %v1244
      %v1515 = vunpack.c.l.b16 %v1245
      %v1516 = vunpack.c.l.b16 %v1246
      %v1517 = vunpack.c.l.b16 %v1247
      %v1518 = vunpack.c.l.b16 %v1248
      %v1519 = vunpack.c.h.b16 %v1243
      %v1520 = vunpack.c.h.b16 %v1244
      %v1521 = vunpack.c.h.b16 %v1245
      %v1522 = vunpack.c.h.b16 %v1246
      %v1523 = vunpack.c.h.b16 %v1247
      %v1524 = vunpack.c.h.b16 %v1248
      %v1525 = vunpack.c.l.b16 %v1249
      %v1526 = vunpack.c.l.b16 %v1250
      %v1527 = vunpack.c.l.b16 %v1251
      %v1528 = vunpack.c.l.b16 %v1252
      %v1529 = vunpack.c.l.b16 %v1253
      %v1530 = vunpack.c.l.b16 %v1254
      %v1531 = vunpack.c.h.b16 %v1249
      %v1532 = vunpack.c.h.b16 %v1250
      %v1533 = vunpack.c.h.b16 %v1251
      %v1534 = vunpack.c.h.b16 %v1252
      %v1535 = vunpack.c.h.b16 %v1253
      %v1536 = vunpack.c.h.b16 %v1254
      %v1537 = vunpack.c.l.b16 %v1255
      %v1538 = vunpack.c.l.b16 %v1256
      %v1539 = vunpack.c.l.b16 %v1257
      %v1540 = vunpack.c.l.b16 %v1258
      %v1541 = vunpack.c.l.b16 %v1259
      %v1542 = vunpack.c.l.b16 %v1260
      %v1543 = vunpack.c.h.b16 %v1255
      %v1544 = vunpack.c.h.b16 %v1256
      %v1545 = vunpack.c.h.b16 %v1257
      %v1546 = vunpack.c.h.b16 %v1258
      %v1547 = vunpack.c.h.b16 %v1259
      %v1548 = vunpack.c.h.b16 %v1260
      %v1549 = vpack.c.b16 %v1358, %v1357
      %v1550 = vpack.c.b16 %v1360, %v1359
      %v1551 = vpack.c.b16 %v1362, %v1361
      %v1552 = vpack.c.b16 %v1364, %v1363
      %v1553 = vpack.c.b16 %v1366, %v1365
      %v1554 = vpack.c.b16 %v1368, %v1367
      %v1555 = vpack.c.b16 %v1370, %v1369
      %v1556 = vpack.c.b16 %v1372, %v1371
      %v1557 = vpack.c.b16 %v1374, %v1373
      %v1558 = vpack.c.b16 %v1376, %v1375
      %v1559 = vpack.c.b16 %v1378, %v1377
      %v1560 = vpack.c.b16 %v1380, %v1379
      %v1561 = vpack.c.b16 %v1382, %v1381
      %v1562 = vpack.c.b16 %v1384, %v1383
      %v1563 = vpack.c.b16 %v1386, %v1385
      %v1564 = vpack.c.b16 %v1388, %v1387
      %v1565 = vpack.c.b16 %v1390, %v1389
      %v1566 = vpack.c.b16 %v1392, %v1391
      %v1567 = vpack.c.b16 %v1394, %v1393
      %v1568 = vpack.c.b16 %v1396, %v1395
      %v1569 = vpack.c.b16 %v1398, %v1397
      %v1570 = vpack.c.b16 %v1400, %v1399
      %v1571 = vpack.c.b16 %v1402, %v1401
      %v1572 = vpack.c.b16 %v1404, %v1403
      %v1573 = vpack.c.b16 %v1406, %v1405
      %v1574 = vpack.c.b16 %v1408, %v1407
      %v1575 = vpack.c.b16 %v1410, %v1409
      %v1576 = vpack.c.b16 %v1412, %v1411
      %v1577 = vpack.c.b16 %v1414, %v1413
      %v1578 = vpack.c.b16 %v1416, %v1415
      %v1579 = vpack.c.b16 %v1418, %v1417
      %v1580 = vpack.c.b16 %v1420, %v1419
      %v1581 = vpack.c.b16 %v1422, %v1421
      %v1582 = vpack.c.b16 %v1424, %v1423
      %v1583 = vpack.c.b16 %v1426, %v1425
      %v1584 = vpack.c.b16 %v1428, %v1427
      %v1585 = vpack.c.b16 %v1430, %v1429
      %v1586 = vpack.c.b16 %v1432, %v1431
      %v1587 = vpack.c.b16 %v1434, %v1433
      %v1588 = vpack.c.b16 %v1436, %v1435
      %v1589 = vpack.c.b16 %v1438, %v1437
      %v1590 = vpack.c.b16 %v1440, %v1439
      %v1591 = vpack.c.b16 %v1442, %v1441
      %v1592 = vpack.c.b16 %v1444, %v1443
      %v1593 = vpack.c.b16 %v1446, %v1445
      %v1594 = vpack.c.b16 %v1448, %v1447
      %v1595 = vpack.c.b16 %v1450, %v1449
      %v1596 = vpack.c.b16 %v1452, %v1451
      %v1597 = vpack.c.b16 %v1454, %v1453
      %v1598 = vpack.c.b16 %v1456, %v1455
      %v1599 = vpack.c.b16 %v1458, %v1457
      %v1600 = vpack.c.b16 %v1460, %v1459
      %v1601 = vpack.c.b16 %v1462, %v1461
      %v1602 = vpack.c.b16 %v1464, %v1463
      %v1603 = vpack.c.b16 %v1466, %v1465
      %v1604 = vpack.c.b16 %v1468, %v1467
      %v1605 = vpack.c.b16 %v1470, %v1469
      %v1606 = vpack.c.b16 %v1472, %v1471
      %v1607 = vpack.c.b16 %v1474, %v1473
      %v1608 = vpack.c.b16 %v1476, %v1475
      %v1609 = vpack.c.b16 %v1478, %v1477
      %v1610 = vpack.c.b16 %v1480, %v1479
      %v1611 = vpack.c.b16 %v1482, %v1481
      %v1612 = vpack.c.b16 %v1484, %v1483
      %v1613 = vpack.c.b16 %v1486, %v1485
      %v1614 = vpack.c.b16 %v1488, %v1487
      %v1615 = vpack.c.b16 %v1490, %v1489
      %v1616 = vpack.c.b16 %v1492, %v1491
      %v1617 = vpack.c.b16 %v1494, %v1493
      %v1618 = vpack.c.b16 %v1496, %v1495
      %v1619 = vpack.c.b16 %v1498, %v1497
      %v1620 = vpack.c.b16 %v1500, %v1499
      %v1621 = vpack.c.b16 %v1502, %v1501
      %v1622 = vpack.c.b16 %v1504, %v1503
      %v1623 = vpack.c.b16 %v1506, %v1505
      %v1624 = vpack.c.b16 %v1508, %v1507
      %v1625 = vpack.c.b16 %v1510, %v1509
      %v1626 = vpack.c.b16 %v1512, %v1511
      %v1627 = vpack.c.b16 %v1514, %v1513
      %v1628 = vpack.c.b16 %v1516, %v1515
      %v1629 = vpack.c.b16 %v1518, %v1517
      %v1630 = vpack.c.b16 %v1520, %v1519
      %v1631 = vpack.c.b16 %v1522, %v1521
      %v1632 = vpack.c.b16 %v1524, %v1523
      %v1633 = vpack.c.b16 %v1526, %v1525
      %v1634 = vpack.c.b16 %v1528, %v1527
      %v1635 = vpack.c.b16 %v1530, %v1529
      %v1636 = vpack.c.b16 %v1532, %v1531
      %v1637 = vpack.c.b16 %v1534, %v1533
      %v1638 = vpack.c.b16 %v1536, %v1535
      %v1639 = vpack.c.b16 %v1538, %v1537
      %v1640 = vpack.c.b16 %v1540, %v1539
      %v1641 = vpack.c.b16 %v1542, %v1541
      %v1642 = vpack.c.b16 %v1544, %v1543
      %v1643 = vpack.c.b16 %v1546, %v1545
      %v1644 = vpack.c.b16 %v1548, %v1547
      %1741 = vst [vmem:[%s174] sm:$0xff] %v1549
      %1742 = vst [vmem:[%s174 + $0x8] sm:$0xff] %v1550
      %1743 = vst [vmem:[%s174 + $0x10] sm:$0xff] %v1551
      %1744 = vst [vmem:[%s174 + $0x18] sm:$0xff] %v1552
      %1745 = vst [vmem:[%s174 + $0x20] sm:$0xff] %v1553
      %1746 = vst [vmem:[%s174 + $0x28] sm:$0xff] %v1554
      %1747 = vst [vmem:[%s174 + $0x30] sm:$0xff] %v1555
      %1748 = vst [vmem:[%s174 + $0x38] sm:$0xff] %v1556
      %1749 = vst [vmem:[%s174 + $0x40] sm:$0xff] %v1557
      %1750 = vst [vmem:[%s174 + $0x48] sm:$0xff] %v1558
      %1751 = vst [vmem:[%s174 + $0x50] sm:$0xff] %v1559
      %1752 = vst [vmem:[%s174 + $0x58] sm:$0xff] %v1560
      %1753 = vst [vmem:[%s174 + $0x60] sm:$0xff] %v1561
      %1754 = vst [vmem:[%s174 + $0x68] sm:$0xff] %v1562
      %1755 = vst [vmem:[%s174 + $0x70] sm:$0xff] %v1563
      %1756 = vst [vmem:[%s174 + $0x78] sm:$0xff] %v1564
      %1757 = vst [vmem:[%s174 + $0x80] sm:$0xff] %v1565
      %1758 = vst [vmem:[%s174 + $0x88] sm:$0xff] %v1566
      %1759 = vst [vmem:[%s174 + $0x90] sm:$0xff] %v1567
      %1760 = vst [vmem:[%s174 + $0x98] sm:$0xff] %v1568
      %1761 = vst [vmem:[%s174 + $0xa0] sm:$0xff] %v1569
      %1762 = vst [vmem:[%s174 + $0xa8] sm:$0xff] %v1570
      %1763 = vst [vmem:[%s174 + $0xb0] sm:$0xff] %v1571
      %1764 = vst [vmem:[%s174 + $0xb8] sm:$0xff] %v1572
      %1765 = vst [vmem:[%s174 + $0xc0] sm:$0xff] %v1573
      %1766 = vst [vmem:[%s174 + $0xc8] sm:$0xff] %v1574
      %1767 = vst [vmem:[%s174 + $0xd0] sm:$0xff] %v1575
      %1768 = vst [vmem:[%s174 + $0xd8] sm:$0xff] %v1576
      %1769 = vst [vmem:[%s174 + $0xe0] sm:$0xff] %v1577
      %1770 = vst [vmem:[%s174 + $0xe8] sm:$0xff] %v1578
      %1771 = vst [vmem:[%s174 + $0xf0] sm:$0xff] %v1579
      %1772 = vst [vmem:[%s174 + $0xf8] sm:$0xff] %v1580
      %1773 = vst [vmem:[%s174 + $0x100] sm:$0xff] %v1581
      %1774 = vst [vmem:[%s174 + $0x108] sm:$0xff] %v1582
      %1775 = vst [vmem:[%s174 + $0x110] sm:$0xff] %v1583
      %1776 = vst [vmem:[%s174 + $0x118] sm:$0xff] %v1584
      %1777 = vst [vmem:[%s174 + $0x120] sm:$0xff] %v1585
      %1778 = vst [vmem:[%s174 + $0x128] sm:$0xff] %v1586
      %1779 = vst [vmem:[%s174 + $0x130] sm:$0xff] %v1587
      %1780 = vst [vmem:[%s174 + $0x138] sm:$0xff] %v1588
      %1781 = vst [vmem:[%s174 + $0x140] sm:$0xff] %v1589
      %1782 = vst [vmem:[%s174 + $0x148] sm:$0xff] %v1590
      %1783 = vst [vmem:[%s174 + $0x150] sm:$0xff] %v1591
      %1784 = vst [vmem:[%s174 + $0x158] sm:$0xff] %v1592
      %1785 = vst [vmem:[%s174 + $0x160] sm:$0xff] %v1593
      %1786 = vst [vmem:[%s174 + $0x168] sm:$0xff] %v1594
      %1787 = vst [vmem:[%s174 + $0x170] sm:$0xff] %v1595
      %1788 = vst [vmem:[%s174 + $0x178] sm:$0xff] %v1596
      %1789 = vst [vmem:[%s174 + $0x180] sm:$0xff] %v1597
      %1790 = vst [vmem:[%s174 + $0x188] sm:$0xff] %v1598
      %1791 = vst [vmem:[%s174 + $0x190] sm:$0xff] %v1599
      %1792 = vst [vmem:[%s174 + $0x198] sm:$0xff] %v1600
      %1793 = vst [vmem:[%s174 + $0x1a0] sm:$0xff] %v1601
      %1794 = vst [vmem:[%s174 + $0x1a8] sm:$0xff] %v1602
      %1795 = vst [vmem:[%s174 + $0x1b0] sm:$0xff] %v1603
      %1796 = vst [vmem:[%s174 + $0x1b8] sm:$0xff] %v1604
      %1797 = vst [vmem:[%s174 + $0x1c0] sm:$0xff] %v1605
      %1798 = vst [vmem:[%s174 + $0x1c8] sm:$0xff] %v1606
      %1799 = vst [vmem:[%s174 + $0x1d0] sm:$0xff] %v1607
      %1800 = vst [vmem:[%s174 + $0x1d8] sm:$0xff] %v1608
      %1801 = vst [vmem:[%s174 + $0x1e0] sm:$0xff] %v1609
      %1802 = vst [vmem:[%s174 + $0x1e8] sm:$0xff] %v1610
      %1803 = vst [vmem:[%s174 + $0x1f0] sm:$0xff] %v1611
      %1804 = vst [vmem:[%s174 + $0x1f8] sm:$0xff] %v1612
      %1805 = vst [vmem:[%s174 + $0x200] sm:$0xff] %v1613
      %1806 = vst [vmem:[%s174 + $0x208] sm:$0xff] %v1614
      %1807 = vst [vmem:[%s174 + $0x210] sm:$0xff] %v1615
      %1808 = vst [vmem:[%s174 + $0x218] sm:$0xff] %v1616
      %1809 = vst [vmem:[%s174 + $0x220] sm:$0xff] %v1617
      %1810 = vst [vmem:[%s174 + $0x228] sm:$0xff] %v1618
      %1811 = vst [vmem:[%s174 + $0x230] sm:$0xff] %v1619
      %1812 = vst [vmem:[%s174 + $0x238] sm:$0xff] %v1620
      %1813 = vst [vmem:[%s174 + $0x240] sm:$0xff] %v1621
      %1814 = vst [vmem:[%s174 + $0x248] sm:$0xff] %v1622
      %1815 = vst [vmem:[%s174 + $0x250] sm:$0xff] %v1623
      %1816 = vst [vmem:[%s174 + $0x258] sm:$0xff] %v1624
      %1817 = vst [vmem:[%s174 + $0x260] sm:$0xff] %v1625
      %1818 = vst [vmem:[%s174 + $0x268] sm:$0xff] %v1626
      %1819 = vst [vmem:[%s174 + $0x270] sm:$0xff] %v1627
      %1820 = vst [vmem:[%s174 + $0x278] sm:$0xff] %v1628
      %1821 = vst [vmem:[%s174 + $0x280] sm:$0xff] %v1629
      %1822 = vst [vmem:[%s174 + $0x288] sm:$0xff] %v1630
      %1823 = vst [vmem:[%s174 + $0x290] sm:$0xff] %v1631
      %1824 = vst [vmem:[%s174 + $0x298] sm:$0xff] %v1632
      %1825 = vst [vmem:[%s174 + $0x2a0] sm:$0xff] %v1633
      %1826 = vst [vmem:[%s174 + $0x2a8] sm:$0xff] %v1634
      %1827 = vst [vmem:[%s174 + $0x2b0] sm:$0xff] %v1635
      %1828 = vst [vmem:[%s174 + $0x2b8] sm:$0xff] %v1636
      %1829 = vst [vmem:[%s174 + $0x2c0] sm:$0xff] %v1637
      %1830 = vst [vmem:[%s174 + $0x2c8] sm:$0xff] %v1638
      %1831 = vst [vmem:[%s174 + $0x2d0] sm:$0xff] %v1639
      %1832 = vst [vmem:[%s174 + $0x2d8] sm:$0xff] %v1640
      %1833 = vst [vmem:[%s174 + $0x2e0] sm:$0xff] %v1641
      %1834 = vst [vmem:[%s174 + $0x2e8] sm:$0xff] %v1642
      %1835 = vst [vmem:[%s174 + $0x2f0] sm:$0xff] %v1643
      %1836 = vst [vmem:[%s174 + $0x2f8] sm:$0xff] %v1644
      %s1837 = smul.u32 32, %s14
      %p1838 = scmp.lt.s32.totalorder %s1837, 63
      %s1839 = scalar_select %p1838, %s1837, 63
      %s1840 = smul.addr %s1839, 6
      %s1841 = smul.addr %s1840, 4
      %s1842 = scalar_lea.vmem %s3, %s1841
      // Predicated region
      $region33: #{e_mhsa_forward.3} parent=31 // pred_check
        %p1843 = pneg %p100
      $region34: #{e_mhsa_forward.3} parent=31 // pred_check_branch
        %1845 = sbr.rel (%p1843) target = $region36
      $region35: #{e_mhsa_forward.3} parent=31 // pred_region
        %s1846 = smul.u32 32, %s14
      $region36: #{e_mhsa_forward.3} parent=31 // pred_fallthru
        _
    $region32: #{e_mhsa_forward.3} parent=5 // pred_fallthru
      _
    %p1847 = scmp.le.s32.totalorder 2, %s9
    // Predicated region
    $region37: #{e_mhsa_forward.3} parent=5 // pred_check
      %p1848 = pneg %p1847
    $region38: #{e_mhsa_forward.3} parent=5 // pred_check_branch
      %1850 = sbr.rel (%p1848) target = $region40
    $region39: #{e_mhsa_forward.3} parent=5 // pred_region
      %s1851 = ssub.s32 %s9, 2
      // Predicated region
      $region41: #{e_mhsa_forward.3} parent=39 // pred_check
        %p1852 = pneg %p106
      $region42: #{e_mhsa_forward.3} parent=39 // pred_check_branch
        %1854 = sbr.rel (%p1852) target = $region44
      $region43: #{e_mhsa_forward.3} parent=39 // pred_region
        %s1855 = smul.u32 32, %s15
        %p1856 = scmp.lt.s32.totalorder %s1855, 63
        %s1857 = scalar_select %p1856, %s1855, 63
        %s1858 = smul.addr %s1857, 6
        %s1859 = smul.addr %s1858, 4
        %s1860 = scalar_lea.vmem %s3, %s1859
      $region44: #{e_mhsa_forward.3} parent=39 // pred_fallthru
        _
    $region40: #{e_mhsa_forward.3} parent=5 // pred_fallthru
      _
  $region6: #{e_mhsa_forward.3} parent=0 // loop_footer
    %s13 = sadd.s32 1, %s9
  $region7: #{e_mhsa_forward.3} parent=0 // loop_footer_branch
    %8 = sbr.rel target = $region3
  $region8: #{e_mhsa_forward.3} parent=0 // loop_exit
    _

// kernel: e_mhsa_forward.4
$region0: #{e_mhsa_forward.4}
  #allocation0 [shape = 'u32[]', space=smem, size = 0x4, offset = 0x4, fixed_abs, tag = 'smem constant byte address 0x4 - core index']
  #allocation1 [shape = 'u32[144,128]{1,0:T(1,128)}', space=vmem, size = 0x12000, scoped, tag = 'internal scratch']
  %s0 = inlined_call_operand.vmem [shape: bf16[2,256,256], index: 0, kind: input, shape index: {}]
  %s1 = inlined_call_operand.vmem [shape: bf16[2,2,128,128], index: 1, kind: input, shape index: {}]
  %s2 = inlined_call_operand.vmem [shape: bf16[2,2,128,128], index: 2, kind: input, shape index: {}]
  %s3 = inlined_call_operand.vmem [shape: bf16[2,256,256], index: 3, kind: output, shape index: {}]
  %s4 = sld [smem:[#allocation0]]
  $region45: #{e_mhsa_forward.4} parent=0
    _
  %s6 = ssub.s32 1, %s4
  %s7 = scalar_select 0, %s6, %s4
  loop: start=0, step=1, limit=4
  $region2: #{e_mhsa_forward.4} parent=0 // loop_pre_header
    _
  $region3: #{e_mhsa_forward.4} parent=0 // loop_header
    %s9 = sphi 0, %s13
    %p10 = scmp.ge.s32.totalorder %s9, 4
    %s16 = sphi 0, %s28
    %s17 = sphi 0, %s24
    %s18 = sphi 0, %s16
    %s19 = sphi 0, %s17
    %s20 = sphi 0, %s18
    %s21 = sphi 0, %s19
    %s33 = sphi 0, %s35
    %s36 = sphi 0, %s33
    %s37 = sphi 0, %s36
    %s53 = sphi 0, %s37
    %s59 = sphi 0, %s61
    %s62 = sphi 0, %s59
    %s63 = sphi 0, %s62
    %s79 = sphi 0, %s63
    %s85 = sphi 0, %s87
    %s88 = sphi 0, %s85
    %s89 = sphi 0, %s88
    %s105 = sphi 0, %s89
    %s113 = sphi 0, %s115
    %s116 = sphi 0, %s113
    %s117 = sphi 0, %s116
    %s133 = sphi 0, %s117
  $region4: #{e_mhsa_forward.4} parent=0 // loop_header_branch
    %12 = sbr.rel (%p10) target = $region8
  $region5: #{e_mhsa_forward.4} parent=0 // loop_body
    %s14 = ssub.s32 %s9, 1
    %s15 = ssub.s32 %s9, 2
    %s22 = sadd.s32 1, %s17
    %p23 = scmp.ge.s32.totalorder %s22, 1
    %s24 = scalar_select %p23, 0, %s22
    %s25 = sadd.s32 1, %s16
    %s26 = scalar_select %p23, %s25, %s16
    %p27 = scmp.ge.s32.totalorder %s26, 2
    %s28 = scalar_select %p27, 0, %s26
    %s29 = ssub.s32 %s16, %s28
    %s30 = ssub.s32 %s17, %s24
    %s31 = sor.u32 %s29, %s30
    %p32 = scmp.eq.s32.totalorder %s31, 0
    %s34 = sadd.s32 %s33, 1
    %s35 = scalar_select %p32, %s33, %s34
    %p38 = pneg %p32
    %p39 = scmp.eq.s32.totalorder %s9, 1
    %p40 = por %p38, %p39
    %p41 = scmp.ne.s32.totalorder %s33, %s36
    %p42 = scmp.eq.s32.totalorder %s9, 0
    %p43 = por %p41, %p42
    %p44 = scmp.ne.s32.totalorder %s33, %s36
    %p45 = scmp.eq.s32.totalorder %s14, 1
    %p46 = por %p44, %p45
    %p47 = scmp.ne.s32.totalorder %s36, %s37
    %p48 = scmp.eq.s32.totalorder %s14, 0
    %p49 = por %p47, %p48
    %p50 = scmp.ne.s32.totalorder %s36, %s37
    %p51 = scmp.eq.s32.totalorder %s15, 1
    %p52 = por %p50, %p51
    %p54 = scmp.ne.s32.totalorder %s37, %s53
    %p55 = scmp.eq.s32.totalorder %s15, 0
    %p56 = por %p54, %p55
    %s57 = ssub.s32 %s16, %s28
    %p58 = scmp.eq.s32.totalorder %s57, 0
    %s60 = sadd.s32 %s59, 1
    %s61 = scalar_select %p58, %s59, %s60
    %p64 = pneg %p58
    %p65 = scmp.eq.s32.totalorder %s9, 1
    %p66 = por %p64, %p65
    %p67 = scmp.ne.s32.totalorder %s59, %s62
    %p68 = scmp.eq.s32.totalorder %s9, 0
    %p69 = por %p67, %p68
    %p70 = scmp.ne.s32.totalorder %s59, %s62
    %p71 = scmp.eq.s32.totalorder %s14, 1
    %p72 = por %p70, %p71
    %p73 = scmp.ne.s32.totalorder %s62, %s63
    %p74 = scmp.eq.s32.totalorder %s14, 0
    %p75 = por %p73, %p74
    %p76 = scmp.ne.s32.totalorder %s62, %s63
    %p77 = scmp.eq.s32.totalorder %s15, 1
    %p78 = por %p76, %p77
    %p80 = scmp.ne.s32.totalorder %s63, %s79
    %p81 = scmp.eq.s32.totalorder %s15, 0
    %p82 = por %p80, %p81
    %s83 = ssub.s32 %s16, %s28
    %p84 = scmp.eq.s32.totalorder %s83, 0
    %s86 = sadd.s32 %s85, 1
    %s87 = scalar_select %p84, %s85, %s86
    %p90 = pneg %p84
    %p91 = scmp.eq.s32.totalorder %s9, 1
    %p92 = por %p90, %p91
    %p93 = scmp.ne.s32.totalorder %s85, %s88
    %p94 = scmp.eq.s32.totalorder %s9, 0
    %p95 = por %p93, %p94
    %p96 = scmp.ne.s32.totalorder %s85, %s88
    %p97 = scmp.eq.s32.totalorder %s14, 1
    %p98 = por %p96, %p97
    %p99 = scmp.ne.s32.totalorder %s88, %s89
    %p100 = scmp.eq.s32.totalorder %s14, 0
    %p101 = por %p99, %p100
    %p102 = scmp.ne.s32.totalorder %s88, %s89
    %p103 = scmp.eq.s32.totalorder %s15, 1
    %p104 = por %p102, %p103
    %p106 = scmp.ne.s32.totalorder %s89, %s105
    %p107 = scmp.eq.s32.totalorder %s15, 0
    %p108 = por %p106, %p107
    %s109 = ssub.s32 %s16, %s28
    %s110 = ssub.s32 %s17, %s24
    %s111 = sor.u32 %s109, %s110
    %p112 = scmp.eq.s32.totalorder %s111, 0
    %s114 = sadd.s32 %s113, 1
    %s115 = scalar_select %p112, %s113, %s114
    %p118 = pneg %p112
    %p119 = scmp.eq.s32.totalorder %s9, 1
    %p120 = por %p118, %p119
    %p121 = scmp.ne.s32.totalorder %s113, %s116
    %p122 = scmp.eq.s32.totalorder %s9, 0
    %p123 = por %p121, %p122
    %p124 = scmp.ne.s32.totalorder %s113, %s116
    %p125 = scmp.eq.s32.totalorder %s14, 1
    %p126 = por %p124, %p125
    %p127 = scmp.ne.s32.totalorder %s116, %s117
    %p128 = scmp.eq.s32.totalorder %s14, 0
    %p129 = por %p127, %p128
    %p130 = scmp.ne.s32.totalorder %s116, %s117
    %p131 = scmp.eq.s32.totalorder %s15, 1
    %p132 = por %p130, %p131
    %p134 = scmp.ne.s32.totalorder %s117, %s133
    %p135 = scmp.eq.s32.totalorder %s15, 0
    %p136 = por %p134, %p135
    %p137 = scmp.le.s32.totalorder 1, %s9
    %p138 = scmp.lt.s32.totalorder %s9, 3
    %p139 = pnand %p137, %p138
    %p140 = pneg %p139
    // Predicated region
    $region9: #{e_mhsa_forward.4} parent=5 // pred_check
      _
    $region10: #{e_mhsa_forward.4} parent=5 // pred_check_branch
      %142 = sbr.rel (%p139) target = $region12
    $region11: #{e_mhsa_forward.4} parent=5 // pred_region
      %s143 = ssub.s32 %s9, 1
    $region12: #{e_mhsa_forward.4} parent=5 // pred_fallthru
      _
    %p144 = scmp.lt.s32.totalorder %s9, 2
    // Predicated region
    $region13: #{e_mhsa_forward.4} parent=5 // pred_check
      %p145 = pneg %p144
    $region14: #{e_mhsa_forward.4} parent=5 // pred_check_branch
      %147 = sbr.rel (%p145) target = $region16
    $region15: #{e_mhsa_forward.4} parent=5 // pred_region
      // Predicated region
      $region17: #{e_mhsa_forward.4} parent=15 // pred_check
        %p148 = pneg %p43
      $region18: #{e_mhsa_forward.4} parent=15 // pred_check_branch
        %150 = sbr.rel (%p148) target = $region20
      $region19: #{e_mhsa_forward.4} parent=15 // pred_region
        %s151 = smul.u32 32, %s17
        %p152 = scmp.lt.s32.totalorder %s16, 1
        %s153 = scalar_select %p152, %s16, 1
        %p154 = scmp.lt.s32.totalorder %s151, 31
        %s155 = scalar_select %p154, %s151, 31
        %s156 = smul.addr %s155, 2
        %s157 = smul.addr %s153, 64
        %s158 = sadd.s32 %s156, %s157
        %s159 = smul.addr %s158, 4
        %s160 = scalar_lea.vmem %s0, %s159
        %s161 = smul.u32 32, %s17
      $region20: #{e_mhsa_forward.4} parent=15 // pred_fallthru
        _
      // Predicated region
      $region21: #{e_mhsa_forward.4} parent=15 // pred_check
        %p162 = pneg %p69
      $region22: #{e_mhsa_forward.4} parent=15 // pred_check_branch
        %164 = sbr.rel (%p162) target = $region24
      $region23: #{e_mhsa_forward.4} parent=15 // pred_region
        %p165 = scmp.lt.s32.totalorder %s16, 1
        %s166 = scalar_select %p165, %s16, 1
        %s167 = smul.addr %s166, 32
        %s168 = smul.addr %s167, 4
        %s169 = scalar_lea.vmem %s1, %s168
      $region24: #{e_mhsa_forward.4} parent=15 // pred_fallthru
        _
      // Predicated region
      $region25: #{e_mhsa_forward.4} parent=15 // pred_check
        %p170 = pneg %p95
      $region26: #{e_mhsa_forward.4} parent=15 // pred_check_branch
        %172 = sbr.rel (%p170) target = $region28
      $region27: #{e_mhsa_forward.4} parent=15 // pred_region
        %p173 = scmp.lt.s32.totalorder %s16, 1
        %s174 = scalar_select %p173, %s16, 1
        %s175 = smul.addr %s174, 32
        %s176 = smul.addr %s175, 4
        %s177 = scalar_lea.vmem %s2, %s176
      $region28: #{e_mhsa_forward.4} parent=15 // pred_fallthru
        _
    $region16: #{e_mhsa_forward.4} parent=5 // pred_fallthru
      _
    %p178 = scmp.le.s32.totalorder 1, %s9
    %p179 = scmp.lt.s32.totalorder %s9, 3
    %p180 = pnand %p178, %p179
    %p181 = pneg %p180
    // Predicated region
    $region29: #{e_mhsa_forward.4} parent=5 // pred_check
      _
    $region30: #{e_mhsa_forward.4} parent=5 // pred_check_branch
      %183 = sbr.rel (%p180) target = $region32
    $region31: #{e_mhsa_forward.4} parent=5 // pred_region
      %s184 = ssub.s32 %s9, 1
      %s185 = smul.u32 32, %s19
      %p186 = scmp.lt.s32.totalorder %s18, 1
      %s187 = scalar_select %p186, %s18, 1
      %p188 = scmp.lt.s32.totalorder %s185, 31
      %s189 = scalar_select %p188, %s185, 31
      %s190 = smul.addr %s189, 2
      %s191 = smul.addr %s187, 64
      %s192 = sadd.s32 %s190, %s191
      %s193 = smul.addr %s192, 4
      %s194 = scalar_lea.vmem %s0, %s193
      %p195 = pneg %p49
      %p196 = pneg %p46
      %p197 = scmp.lt.s32.totalorder %s18, 1
      %s198 = scalar_select %p197, %s18, 1
      %s199 = smul.addr %s198, 32
      %s200 = smul.addr %s199, 4
      %s201 = scalar_lea.vmem %s1, %s200
      %p202 = pneg %p75
      %p203 = pneg %p72
      %p204 = scmp.lt.s32.totalorder %s18, 1
      %s205 = scalar_select %p204, %s18, 1
      %s206 = smul.addr %s205, 32
      %s207 = smul.addr %s206, 4
      %s208 = scalar_lea.vmem %s2, %s207
      %p209 = pneg %p101
      %p210 = pneg %p98
      %p211 = pneg %p129
      %p212 = pneg %p126
      %s213 = smul.u32 32, %s19
      %p214 = scmp.lt.s32.totalorder %s18, 1
      %s215 = scalar_select %p214, %s18, 1
      %p216 = scmp.lt.s32.totalorder %s213, 31
      %s217 = scalar_select %p216, %s213, 31
      %s218 = smul.addr %s217, 2
      %s219 = smul.addr %s215, 64
      %s220 = sadd.s32 %s218, %s219
      %s221 = smul.addr %s220, 4
      %s222 = scalar_lea.vmem %s3, %s221
      %s223 = smul.u32 32, %s19
      %p224 = scmp.lt.s32.totalorder %s18, 1
      %s225 = scalar_select %p224, %s18, 1
      %p226 = scmp.lt.s32.totalorder %s223, 31
      %s227 = scalar_select %p226, %s223, 31
      %s228 = smul.addr %s227, 2
      %s229 = smul.addr %s225, 64
      %s230 = sadd.s32 %s228, %s229
      %s231 = smul.addr %s230, 4
      %s232 = scalar_lea.vmem %s0, %s231
      %s233 = smul.u32 32, %s19
      %p234 = scmp.lt.s32.totalorder %s18, 1
      %s235 = scalar_select %p234, %s18, 1
      %s236 = smul.addr %s235, 32
      %s237 = smul.addr %s236, 4
      %s238 = scalar_lea.vmem %s1, %s237
      %p239 = scmp.lt.s32.totalorder %s18, 1
      %s240 = scalar_select %p239, %s18, 1
      %s241 = smul.addr %s240, 32
      %s242 = smul.addr %s241, 4
      %s243 = scalar_lea.vmem %s2, %s242
      %s244 = smul.u32 32, %s19
      %p245 = scmp.lt.s32.totalorder %s18, 1
      %s246 = scalar_select %p245, %s18, 1
      %p247 = scmp.lt.s32.totalorder %s244, 31
      %s248 = scalar_select %p247, %s244, 31
      %s249 = smul.addr %s248, 2
      %s250 = smul.addr %s246, 64
      %s251 = sadd.s32 %s249, %s250
      %s252 = smul.addr %s251, 4
      %s253 = scalar_lea.vmem %s3, %s252
      %s254 = smul.u32 32, %s19
      %v256 = vlaneseq
      %v257 = vand.u32 %v256, 127
      %v258 = vld [vmem:[%s232] sm:$0xf]
      %v259 = vld [vmem:[%s232 + $0x8] sm:$0xf]
      %v260 = vld [vmem:[%s232 + $0x10] sm:$0xf]
      %v261 = vld [vmem:[%s232 + $0x18] sm:$0xf]
      %v262 = vld [vmem:[%s232 + $0x20] sm:$0xf]
      %v263 = vld [vmem:[%s232 + $0x28] sm:$0xf]
      %v264 = vld [vmem:[%s232 + $0x30] sm:$0xf]
      %v265 = vld [vmem:[%s232 + $0x38] sm:$0xf]
      %v266 = vld [vmem:[%s232 + $0x40] sm:$0xf]
      %v267 = vld [vmem:[%s232 + $0x48] sm:$0xf]
      %v268 = vld [vmem:[%s232 + $0x50] sm:$0xf]
      %v269 = vld [vmem:[%s232 + $0x58] sm:$0xf]
      %v270 = vld [vmem:[%s232 + $0x60] sm:$0xf]
      %v271 = vld [vmem:[%s232 + $0x68] sm:$0xf]
      %v272 = vld [vmem:[%s232 + $0x70] sm:$0xf]
      %v273 = vld [vmem:[%s232 + $0x78] sm:$0xf]
      %v274 = vld [vmem:[%s232 + $0x80] sm:$0xf]
      %v275 = vld [vmem:[%s232 + $0x88] sm:$0xf]
      %v276 = vld [vmem:[%s232 + $0x90] sm:$0xf]
      %v277 = vld [vmem:[%s232 + $0x98] sm:$0xf]
      %v278 = vld [vmem:[%s232 + $0xa0] sm:$0xf]
      %v279 = vld [vmem:[%s232 + $0xa8] sm:$0xf]
      %v280 = vld [vmem:[%s232 + $0xb0] sm:$0xf]
      %v281 = vld [vmem:[%s232 + $0xb8] sm:$0xf]
      %v282 = vld [vmem:[%s232 + $0xc0] sm:$0xf]
      %v283 = vld [vmem:[%s232 + $0xc8] sm:$0xf]
      %v284 = vld [vmem:[%s232 + $0xd0] sm:$0xf]
      %v285 = vld [vmem:[%s232 + $0xd8] sm:$0xf]
      %v286 = vld [vmem:[%s232 + $0xe0] sm:$0xf]
      %v287 = vld [vmem:[%s232 + $0xe8] sm:$0xf]
      %v288 = vld [vmem:[%s232 + $0xf0] sm:$0xf]
      %v289 = vld [vmem:[%s232 + $0xf8] sm:$0xf]
      %v290 = vld [vmem:[%s238] sm:$0xf]
      %v291 = vld [vmem:[%s238 + $0x4] sm:$0xf]
      %v292 = vld [vmem:[%s238 + $0x8] sm:$0xf]
      %v293 = vld [vmem:[%s238 + $0xc] sm:$0xf]
      %v294 = vld [vmem:[%s238 + $0x10] sm:$0xf]
      %v295 = vld [vmem:[%s238 + $0x14] sm:$0xf]
      %v296 = vld [vmem:[%s238 + $0x18] sm:$0xf]
      %v297 = vld [vmem:[%s238 + $0x1c] sm:$0xf]
      %v298 = vld [vmem:[%s238 + $0x20] sm:$0xf]
      %v299 = vld [vmem:[%s238 + $0x24] sm:$0xf]
      %v300 = vld [vmem:[%s238 + $0x28] sm:$0xf]
      %v301 = vld [vmem:[%s238 + $0x2c] sm:$0xf]
      %v302 = vld [vmem:[%s238 + $0x30] sm:$0xf]
      %v303 = vld [vmem:[%s238 + $0x34] sm:$0xf]
      %v304 = vld [vmem:[%s238 + $0x38] sm:$0xf]
      %v305 = vld [vmem:[%s238 + $0x3c] sm:$0xf]
      %v338 = vunpack.c.l.b16 %v258
      %v339 = vunpack.c.l.b16 %v259
      %v340 = vunpack.c.l.b16 %v260
      %v341 = vunpack.c.l.b16 %v261
      %v342 = vunpack.c.l.b16 %v262
      %v343 = vunpack.c.l.b16 %v263
      %v344 = vunpack.c.l.b16 %v264
      %v345 = vunpack.c.l.b16 %v265
      %v346 = vunpack.c.l.b16 %v266
      %v347 = vunpack.c.l.b16 %v267
      %v348 = vunpack.c.l.b16 %v268
      %v349 = vunpack.c.l.b16 %v269
      %v350 = vunpack.c.l.b16 %v270
      %v351 = vunpack.c.l.b16 %v271
      %v352 = vunpack.c.l.b16 %v272
      %v353 = vunpack.c.l.b16 %v273
      %v354 = vunpack.c.l.b16 %v274
      %v355 = vunpack.c.l.b16 %v275
      %v356 = vunpack.c.l.b16 %v276
      %v357 = vunpack.c.l.b16 %v277
      %v358 = vunpack.c.l.b16 %v278
      %v359 = vunpack.c.l.b16 %v279
      %v360 = vunpack.c.l.b16 %v280
      %v361 = vunpack.c.l.b16 %v281
      %v362 = vunpack.c.l.b16 %v282
      %v363 = vunpack.c.l.b16 %v283
      %v364 = vunpack.c.l.b16 %v284
      %v365 = vunpack.c.l.b16 %v285
      %v366 = vunpack.c.l.b16 %v286
      %v367 = vunpack.c.l.b16 %v287
      %v368 = vunpack.c.l.b16 %v288
      %v369 = vunpack.c.l.b16 %v289
      %v370 = vpack.c.b16 %v339, %v338
      %v371 = vpack.c.b16 %v341, %v340
      %v372 = vpack.c.b16 %v343, %v342
      %v373 = vpack.c.b16 %v345, %v344
      %v374 = vpack.c.b16 %v347, %v346
      %v375 = vpack.c.b16 %v349, %v348
      %v376 = vpack.c.b16 %v351, %v350
      %v377 = vpack.c.b16 %v353, %v352
      %v378 = vpack.c.b16 %v355, %v354
      %v379 = vpack.c.b16 %v357, %v356
      %v380 = vpack.c.b16 %v359, %v358
      %v381 = vpack.c.b16 %v361, %v360
      %v382 = vpack.c.b16 %v363, %v362
      %v383 = vpack.c.b16 %v365, %v364
      %v384 = vpack.c.b16 %v367, %v366
      %v385 = vpack.c.b16 %v369, %v368
      %v418 = vunpack.c.l.b16 %v290
      %v419 = vunpack.c.l.b16 %v291
      %v420 = vunpack.c.l.b16 %v292
      %v421 = vunpack.c.l.b16 %v293
      %v422 = vunpack.c.l.b16 %v294
      %v423 = vunpack.c.l.b16 %v295
      %v424 = vunpack.c.l.b16 %v296
      %v425 = vunpack.c.l.b16 %v297
      %v426 = vunpack.c.l.b16 %v298
      %v427 = vunpack.c.l.b16 %v299
      %v428 = vunpack.c.l.b16 %v300
      %v429 = vunpack.c.l.b16 %v301
      %v430 = vunpack.c.l.b16 %v302
      %v431 = vunpack.c.l.b16 %v303
      %v432 = vunpack.c.l.b16 %v304
      %v433 = vunpack.c.l.b16 %v305
      %v434 = vpack.c.b16 %v419, %v418
      %v435 = vpack.c.b16 %v421, %v420
      %v436 = vpack.c.b16 %v423, %v422
      %v437 = vpack.c.b16 %v425, %v424
      %v438 = vpack.c.b16 %v427, %v426
      %v439 = vpack.c.b16 %v429, %v428
      %v440 = vpack.c.b16 %v431, %v430
      %v441 = vpack.c.b16 %v433, %v432
      %450 = vmatprep.subr.bf16.mxu0 0
      %451 = vmatpush1.bf16.msra.mxu0 %v434
      %452 = vmatprep.subr.bf16.mxu0 0
      %453 = vmatpush1.bf16.msra.mxu0 %v435
      %454 = vmatprep.subr.bf16.mxu0 0
      %455 = vmatpush1.bf16.msra.mxu0 %v436
      %456 = vmatprep.subr.bf16.mxu0 0
      %457 = vmatpush1.bf16.msra.mxu0 %v437
      %458 = vmatprep.subr.bf16.mxu0 0
      %459 = vmatpush1.bf16.msra.mxu0 %v438
      %460 = vmatprep.subr.bf16.mxu0 0
      %461 = vmatpush1.bf16.msra.mxu0 %v439
      %462 = vmatprep.subr.bf16.mxu0 0
      %463 = vmatpush1.bf16.msra.mxu0 %v440
      %464 = vmatprep.subr.bf16.mxu0 0
      %465 = vmatpush1.bf16.msra.mxu0 %v441
      %466 = vmatprep.subr.bf16.mxu0 0
      %467 = vmatpush1.bf16.msra.mxu0 0
      %468 = vmatprep.subr.bf16.mxu0 0
      %469 = vmatpush1.bf16.msra.mxu0 0
      %470 = vmatprep.subr.bf16.mxu0 0
      %471 = vmatpush1.bf16.msra.mxu0 0
      %472 = vmatprep.subr.bf16.mxu0 0
      %473 = vmatpush1.bf16.msra.mxu0 0
      %474 = vmatprep.subr.bf16.mxu0 0
      %475 = vmatpush1.bf16.msra.mxu0 0
      %476 = vmatprep.subr.bf16.mxu0 0
      %477 = vmatpush1.bf16.msra.mxu0 0
      %478 = vmatprep.subr.bf16.mxu0 0
      %479 = vmatpush1.bf16.msra.mxu0 0
      %480 = vmatprep.subr.bf16.mxu0 0
      %481 = vmatpush1.bf16.msra.mxu0 0
      %482 = vmatprep.mubr.bf16.mxu0 0
      %483 = vmatmul.mubr.bf16.gmra.mrb[0].mxu0 %v370
      %v484 = vpop.f32.mrb[0].mxu0
      %v485 = vadd.f32 0.0, %v484
      %v486 = vpop.f32.mrb[0].mxu0
      %v487 = vpop.f32.mrb[0].mxu0
      %v488 = vadd.f32 0.0, %v487
      %v489 = vpop.f32.mrb[0].mxu0
      %490 = vmatprep.mubr.bf16.mxu0 0
      %491 = vmatmul.mubr.bf16.gmra.mrb[0].mxu0 %v371
      %v492 = vpop.f32.mrb[0].mxu0
      %v493 = vadd.f32 0.0, %v492
      %v494 = vpop.f32.mrb[0].mxu0
      %v495 = vpop.f32.mrb[0].mxu0
      %v496 = vadd.f32 0.0, %v495
      %v497 = vpop.f32.mrb[0].mxu0
      %498 = vmatprep.mubr.bf16.mxu0 0
      %499 = vmatmul.mubr.bf16.gmra.mrb[0].mxu0 %v372
      %v500 = vpop.f32.mrb[0].mxu0
      %v501 = vadd.f32 0.0, %v500
      %v502 = vpop.f32.mrb[0].mxu0
      %v503 = vpop.f32.mrb[0].mxu0
      %v504 = vadd.f32 0.0, %v503
      %v505 = vpop.f32.mrb[0].mxu0
      %506 = vmatprep.mubr.bf16.mxu0 0
      %507 = vmatmul.mubr.bf16.gmra.mrb[0].mxu0 %v373
      %v508 = vpop.f32.mrb[0].mxu0
      %v509 = vadd.f32 0.0, %v508
      %v510 = vpop.f32.mrb[0].mxu0
      %v511 = vpop.f32.mrb[0].mxu0
      %v512 = vadd.f32 0.0, %v511
      %v513 = vpop.f32.mrb[0].mxu0
      %514 = vmatprep.mubr.bf16.mxu0 0
      %515 = vmatmul.mubr.bf16.gmra.mrb[0].mxu0 %v374
      %v516 = vpop.f32.mrb[0].mxu0
      %v517 = vadd.f32 0.0, %v516
      %v518 = vpop.f32.mrb[0].mxu0
      %v519 = vpop.f32.mrb[0].mxu0
      %v520 = vadd.f32 0.0, %v519
      %v521 = vpop.f32.mrb[0].mxu0
      %522 = vmatprep.mubr.bf16.mxu0 0
      %523 = vmatmul.mubr.bf16.gmra.mrb[0].mxu0 %v375
      %v524 = vpop.f32.mrb[0].mxu0
      %v525 = vadd.f32 0.0, %v524
      %v526 = vpop.f32.mrb[0].mxu0
      %v527 = vpop.f32.mrb[0].mxu0
      %v528 = vadd.f32 0.0, %v527
      %v529 = vpop.f32.mrb[0].mxu0
      %530 = vmatprep.mubr.bf16.mxu0 0
      %531 = vmatmul.mubr.bf16.gmra.mrb[0].mxu0 %v376
      %v532 = vpop.f32.mrb[0].mxu0
      %v533 = vadd.f32 0.0, %v532
      %v534 = vpop.f32.mrb[0].mxu0
      %v535 = vpop.f32.mrb[0].mxu0
      %v536 = vadd.f32 0.0, %v535
      %v537 = vpop.f32.mrb[0].mxu0
      %538 = vmatprep.mubr.bf16.mxu0 0
      %539 = vmatmul.mubr.bf16.gmra.mrb[0].mxu0 %v377
      %v540 = vpop.f32.mrb[0].mxu0
      %v541 = vadd.f32 0.0, %v540
      %v542 = vpop.f32.mrb[0].mxu0
      %v543 = vpop.f32.mrb[0].mxu0
      %v544 = vadd.f32 0.0, %v543
      %v545 = vpop.f32.mrb[0].mxu0
      %546 = vmatprep.mubr.bf16.mxu0 0
      %547 = vmatmul.mubr.bf16.gmra.mrb[0].mxu0 %v378
      %v548 = vpop.f32.mrb[0].mxu0
      %v549 = vadd.f32 0.0, %v548
      %v550 = vpop.f32.mrb[0].mxu0
      %v551 = vpop.f32.mrb[0].mxu0
      %v552 = vadd.f32 0.0, %v551
      %v553 = vpop.f32.mrb[0].mxu0
      %554 = vmatprep.mubr.bf16.mxu0 0
      %555 = vmatmul.mubr.bf16.gmra.mrb[0].mxu0 %v379
      %v556 = vpop.f32.mrb[0].mxu0
      %v557 = vadd.f32 0.0, %v556
      %v558 = vpop.f32.mrb[0].mxu0
      %v559 = vpop.f32.mrb[0].mxu0
      %v560 = vadd.f32 0.0, %v559
      %v561 = vpop.f32.mrb[0].mxu0
      %562 = vmatprep.mubr.bf16.mxu0 0
      %563 = vmatmul.mubr.bf16.gmra.mrb[0].mxu0 %v380
      %v564 = vpop.f32.mrb[0].mxu0
      %v565 = vadd.f32 0.0, %v564
      %v566 = vpop.f32.mrb[0].mxu0
      %v567 = vpop.f32.mrb[0].mxu0
      %v568 = vadd.f32 0.0, %v567
      %v569 = vpop.f32.mrb[0].mxu0
      %570 = vmatprep.mubr.bf16.mxu0 0
      %571 = vmatmul.mubr.bf16.gmra.mrb[0].mxu0 %v381
      %v572 = vpop.f32.mrb[0].mxu0
      %v573 = vadd.f32 0.0, %v572
      %v574 = vpop.f32.mrb[0].mxu0
      %v575 = vpop.f32.mrb[0].mxu0
      %v576 = vadd.f32 0.0, %v575
      %v577 = vpop.f32.mrb[0].mxu0
      %578 = vmatprep.mubr.bf16.mxu0 0
      %579 = vmatmul.mubr.bf16.gmra.mrb[0].mxu0 %v382
      %v580 = vpop.f32.mrb[0].mxu0
      %v581 = vadd.f32 0.0, %v580
      %v582 = vpop.f32.mrb[0].mxu0
      %v583 = vpop.f32.mrb[0].mxu0
      %v584 = vadd.f32 0.0, %v583
      %v585 = vpop.f32.mrb[0].mxu0
      %586 = vmatprep.mubr.bf16.mxu0 0
      %587 = vmatmul.mubr.bf16.gmra.mrb[0].mxu0 %v383
      %v588 = vpop.f32.mrb[0].mxu0
      %v589 = vadd.f32 0.0, %v588
      %v590 = vpop.f32.mrb[0].mxu0
      %v591 = vpop.f32.mrb[0].mxu0
      %v592 = vadd.f32 0.0, %v591
      %v593 = vpop.f32.mrb[0].mxu0
      %594 = vmatprep.mubr.bf16.mxu0 0
      %595 = vmatmul.mubr.bf16.gmra.mrb[0].mxu0 %v384
      %v596 = vpop.f32.mrb[0].mxu0
      %v597 = vadd.f32 0.0, %v596
      %v598 = vpop.f32.mrb[0].mxu0
      %v599 = vpop.f32.mrb[0].mxu0
      %v600 = vadd.f32 0.0, %v599
      %v601 = vpop.f32.mrb[0].mxu0
      %602 = vmatprep.mubr.bf16.mxu0 0
      %603 = vmatmul.mubr.bf16.gmra.mrb[0].mxu0 %v385
      %v604 = vpop.f32.mrb[0].mxu0
      %v605 = vadd.f32 0.0, %v604
      %v606 = vpop.f32.mrb[0].mxu0
      %v607 = vpop.f32.mrb[0].mxu0
      %v608 = vadd.f32 0.0, %v607
      %v609 = vpop.f32.mrb[0].mxu0
      %610 = vdwg.mxu0
      %vm611 = vcmp.lt.s32.totalorder %v257, 64
      %v612 = vsel %vm611, %v485, -1e+30
      %v613 = vsel %vm611, %v488, -1e+30
      %v614 = vsel %vm611, %v493, -1e+30
      %v615 = vsel %vm611, %v496, -1e+30
      %v616 = vsel %vm611, %v501, -1e+30
      %v617 = vsel %vm611, %v504, -1e+30
      %v618 = vsel %vm611, %v509, -1e+30
      %v619 = vsel %vm611, %v512, -1e+30
      %v620 = vsel %vm611, %v517, -1e+30
      %v621 = vsel %vm611, %v520, -1e+30
      %v622 = vsel %vm611, %v525, -1e+30
      %v623 = vsel %vm611, %v528, -1e+30
      %v624 = vsel %vm611, %v533, -1e+30
      %v625 = vsel %vm611, %v536, -1e+30
      %v626 = vsel %vm611, %v541, -1e+30
      %v627 = vsel %vm611, %v544, -1e+30
      %v628 = vsel %vm611, %v549, -1e+30
      %v629 = vsel %vm611, %v552, -1e+30
      %v630 = vsel %vm611, %v557, -1e+30
      %v631 = vsel %vm611, %v560, -1e+30
      %v632 = vsel %vm611, %v565, -1e+30
      %v633 = vsel %vm611, %v568, -1e+30
      %v634 = vsel %vm611, %v573, -1e+30
      %v635 = vsel %vm611, %v576, -1e+30
      %v636 = vsel %vm611, %v581, -1e+30
      %v637 = vsel %vm611, %v584, -1e+30
      %v638 = vsel %vm611, %v589, -1e+30
      %v639 = vsel %vm611, %v592, -1e+30
      %v640 = vsel %vm611, %v597, -1e+30
      %v641 = vsel %vm611, %v600, -1e+30
      %v642 = vsel %vm611, %v605, -1e+30
      %v643 = vsel %vm611, %v608, -1e+30
      %644 = vmax.xlane.f32.xlu0 %v612
      %v645 = vpop.xlane.xlu0 %644
      %646 = vmax.xlane.f32.xlu0 %v613
      %v647 = vpop.xlane.xlu0 %646
      %648 = vmax.xlane.f32.xlu0 %v614
      %v649 = vpop.xlane.xlu0 %648
      %650 = vmax.xlane.f32.xlu0 %v615
      %v651 = vpop.xlane.xlu0 %650
      %652 = vmax.xlane.f32.xlu0 %v616
      %v653 = vpop.xlane.xlu0 %652
      %654 = vmax.xlane.f32.xlu0 %v617
      %v655 = vpop.xlane.xlu0 %654
      %656 = vmax.xlane.f32.xlu0 %v618
      %v657 = vpop.xlane.xlu0 %656
      %658 = vmax.xlane.f32.xlu0 %v619
      %v659 = vpop.xlane.xlu0 %658
      %660 = vmax.xlane.f32.xlu0 %v620
      %v661 = vpop.xlane.xlu0 %660
      %662 = vmax.xlane.f32.xlu0 %v621
      %v663 = vpop.xlane.xlu0 %662
      %664 = vmax.xlane.f32.xlu0 %v622
      %v665 = vpop.xlane.xlu0 %664
      %666 = vmax.xlane.f32.xlu0 %v623
      %v667 = vpop.xlane.xlu0 %666
      %668 = vmax.xlane.f32.xlu0 %v624
      %v669 = vpop.xlane.xlu0 %668
      %670 = vmax.xlane.f32.xlu0 %v625
      %v671 = vpop.xlane.xlu0 %670
      %672 = vmax.xlane.f32.xlu0 %v626
      %v673 = vpop.xlane.xlu0 %672
      %674 = vmax.xlane.f32.xlu0 %v627
      %v675 = vpop.xlane.xlu0 %674
      %676 = vmax.xlane.f32.xlu0 %v628
      %v677 = vpop.xlane.xlu0 %676
      %678 = vmax.xlane.f32.xlu0 %v629
      %v679 = vpop.xlane.xlu0 %678
      %680 = vmax.xlane.f32.xlu0 %v630
      %v681 = vpop.xlane.xlu0 %680
      %682 = vmax.xlane.f32.xlu0 %v631
      %v683 = vpop.xlane.xlu0 %682
      %684 = vmax.xlane.f32.xlu0 %v632
      %v685 = vpop.xlane.xlu0 %684
      %686 = vmax.xlane.f32.xlu0 %v633
      %v687 = vpop.xlane.xlu0 %686
      %688 = vmax.xlane.f32.xlu0 %v634
      %v689 = vpop.xlane.xlu0 %688
      %690 = vmax.xlane.f32.xlu0 %v635
      %v691 = vpop.xlane.xlu0 %690
      %692 = vmax.xlane.f32.xlu0 %v636
      %v693 = vpop.xlane.xlu0 %692
      %694 = vmax.xlane.f32.xlu0 %v637
      %v695 = vpop.xlane.xlu0 %694
      %696 = vmax.xlane.f32.xlu0 %v638
      %v697 = vpop.xlane.xlu0 %696
      %698 = vmax.xlane.f32.xlu0 %v639
      %v699 = vpop.xlane.xlu0 %698
      %700 = vmax.xlane.f32.xlu0 %v640
      %v701 = vpop.xlane.xlu0 %700
      %702 = vmax.xlane.f32.xlu0 %v641
      %v703 = vpop.xlane.xlu0 %702
      %704 = vmax.xlane.f32.xlu0 %v642
      %v705 = vpop.xlane.xlu0 %704
      %706 = vmax.xlane.f32.xlu0 %v643
      %v707 = vpop.xlane.xlu0 %706
      %v708 = vsub.f32 %v612, %v645
      %v709 = vsub.f32 %v613, %v647
      %v710 = vsub.f32 %v614, %v649
      %v711 = vsub.f32 %v615, %v651
      %v712 = vsub.f32 %v616, %v653
      %v713 = vsub.f32 %v617, %v655
      %v714 = vsub.f32 %v618, %v657
      %v715 = vsub.f32 %v619, %v659
      %v716 = vsub.f32 %v620, %v661
      %v717 = vsub.f32 %v621, %v663
      %v718 = vsub.f32 %v622, %v665
      %v719 = vsub.f32 %v623, %v667
      %v720 = vsub.f32 %v624, %v669
      %v721 = vsub.f32 %v625, %v671
      %v722 = vsub.f32 %v626, %v673
      %v723 = vsub.f32 %v627, %v675
      %v724 = vsub.f32 %v628, %v677
      %v725 = vsub.f32 %v629, %v679
      %v726 = vsub.f32 %v630, %v681
      %v727 = vsub.f32 %v631, %v683
      %v728 = vsub.f32 %v632, %v685
      %v729 = vsub.f32 %v633, %v687
      %v730 = vsub.f32 %v634, %v689
      %v731 = vsub.f32 %v635, %v691
      %v732 = vsub.f32 %v636, %v693
      %v733 = vsub.f32 %v637, %v695
      %v734 = vsub.f32 %v638, %v697
      %v735 = vsub.f32 %v639, %v699
      %v736 = vsub.f32 %v640, %v701
      %v737 = vsub.f32 %v641, %v703
      %v738 = vsub.f32 %v642, %v705
      %v739 = vsub.f32 %v643, %v707
      %v740 = vmul.f32 %v708, 1.442695
      %v741 = vpow.pop %v740
      %v742 = vmul.f32 %v709, 1.442695
      %v743 = vpow.pop %v742
      %v744 = vmul.f32 %v710, 1.442695
      %v745 = vpow.pop %v744
      %v746 = vmul.f32 %v711, 1.442695
      %v747 = vpow.pop %v746
      %v748 = vmul.f32 %v712, 1.442695
      %v749 = vpow.pop %v748
      %v750 = vmul.f32 %v713, 1.442695
      %v751 = vpow.pop %v750
      %v752 = vmul.f32 %v714, 1.442695
      %v753 = vpow.pop %v752
      %v754 = vmul.f32 %v715, 1.442695
      %v755 = vpow.pop %v754
      %v756 = vmul.f32 %v716, 1.442695
      %v757 = vpow.pop %v756
      %v758 = vmul.f32 %v717, 1.442695
      %v759 = vpow.pop %v758
      %v760 = vmul.f32 %v718, 1.442695
      %v761 = vpow.pop %v760
      %v762 = vmul.f32 %v719, 1.442695
      %v763 = vpow.pop %v762
      %v764 = vmul.f32 %v720, 1.442695
      %v765 = vpow.pop %v764
      %v766 = vmul.f32 %v721, 1.442695
      %v767 = vpow.pop %v766
      %v768 = vmul.f32 %v722, 1.442695
      %v769 = vpow.pop %v768
      %v770 = vmul.f32 %v723, 1.442695
      %v771 = vpow.pop %v770
      %v772 = vmul.f32 %v724, 1.442695
      %v773 = vpow.pop %v772
      %v774 = vmul.f32 %v725, 1.442695
      %v775 = vpow.pop %v774
      %v776 = vmul.f32 %v726, 1.442695
      %v777 = vpow.pop %v776
      %v778 = vmul.f32 %v727, 1.442695
      %v779 = vpow.pop %v778
      %v780 = vmul.f32 %v728, 1.442695
      %v781 = vpow.pop %v780
      %v782 = vmul.f32 %v729, 1.442695
      %v783 = vpow.pop %v782
      %v784 = vmul.f32 %v730, 1.442695
      %v785 = vpow.pop %v784
      %v786 = vmul.f32 %v731, 1.442695
      %v787 = vpow.pop %v786
      %v788 = vmul.f32 %v732, 1.442695
      %v789 = vpow.pop %v788
      %v790 = vmul.f32 %v733, 1.442695
      %v791 = vpow.pop %v790
      %v792 = vmul.f32 %v734, 1.442695
      %v793 = vpow.pop %v792
      %v794 = vmul.f32 %v735, 1.442695
      %v795 = vpow.pop %v794
      %v796 = vmul.f32 %v736, 1.442695
      %v797 = vpow.pop %v796
      %v798 = vmul.f32 %v737, 1.442695
      %v799 = vpow.pop %v798
      %v800 = vmul.f32 %v738, 1.442695
      %v801 = vpow.pop %v800
      %v802 = vmul.f32 %v739, 1.442695
      %v803 = vpow.pop %v802
      %804 = vadd.xlane.f32.xlu0 %v741
      %v805 = vpop.xlane.xlu0 %804
      %806 = vadd.xlane.f32.xlu0 %v743
      %v807 = vpop.xlane.xlu0 %806
      %808 = vadd.xlane.f32.xlu0 %v745
      %v809 = vpop.xlane.xlu0 %808
      %810 = vadd.xlane.f32.xlu0 %v747
      %v811 = vpop.xlane.xlu0 %810
      %812 = vadd.xlane.f32.xlu0 %v749
      %v813 = vpop.xlane.xlu0 %812
      %814 = vadd.xlane.f32.xlu0 %v751
      %v815 = vpop.xlane.xlu0 %814
      %816 = vadd.xlane.f32.xlu0 %v753
      %v817 = vpop.xlane.xlu0 %816
      %818 = vadd.xlane.f32.xlu0 %v755
      %v819 = vpop.xlane.xlu0 %818
      %820 = vadd.xlane.f32.xlu0 %v757
      %v821 = vpop.xlane.xlu0 %820
      %822 = vadd.xlane.f32.xlu0 %v759
      %v823 = vpop.xlane.xlu0 %822
      %824 = vadd.xlane.f32.xlu0 %v761
      %v825 = vpop.xlane.xlu0 %824
      %826 = vadd.xlane.f32.xlu0 %v763
      %v827 = vpop.xlane.xlu0 %826
      %828 = vadd.xlane.f32.xlu0 %v765
      %v829 = vpop.xlane.xlu0 %828
      %830 = vadd.xlane.f32.xlu0 %v767
      %v831 = vpop.xlane.xlu0 %830
      %832 = vadd.xlane.f32.xlu0 %v769
      %v833 = vpop.xlane.xlu0 %832
      %834 = vadd.xlane.f32.xlu0 %v771
      %v835 = vpop.xlane.xlu0 %834
      %836 = vadd.xlane.f32.xlu0 %v773
      %v837 = vpop.xlane.xlu0 %836
      %838 = vadd.xlane.f32.xlu0 %v775
      %v839 = vpop.xlane.xlu0 %838
      %840 = vadd.xlane.f32.xlu0 %v777
      %v841 = vpop.xlane.xlu0 %840
      %842 = vadd.xlane.f32.xlu0 %v779
      %v843 = vpop.xlane.xlu0 %842
      %844 = vadd.xlane.f32.xlu0 %v781
      %v845 = vpop.xlane.xlu0 %844
      %846 = vadd.xlane.f32.xlu0 %v783
      %v847 = vpop.xlane.xlu0 %846
      %848 = vadd.xlane.f32.xlu0 %v785
      %v849 = vpop.xlane.xlu0 %848
      %850 = vadd.xlane.f32.xlu0 %v787
      %v851 = vpop.xlane.xlu0 %850
      %852 = vadd.xlane.f32.xlu0 %v789
      %v853 = vpop.xlane.xlu0 %852
      %854 = vadd.xlane.f32.xlu0 %v791
      %v855 = vpop.xlane.xlu0 %854
      %856 = vadd.xlane.f32.xlu0 %v793
      %v857 = vpop.xlane.xlu0 %856
      %858 = vadd.xlane.f32.xlu0 %v795
      %v859 = vpop.xlane.xlu0 %858
      %860 = vadd.xlane.f32.xlu0 %v797
      %v861 = vpop.xlane.xlu0 %860
      %862 = vadd.xlane.f32.xlu0 %v799
      %v863 = vpop.xlane.xlu0 %862
      %864 = vadd.xlane.f32.xlu0 %v801
      %v865 = vpop.xlane.xlu0 %864
      %866 = vadd.xlane.f32.xlu0 %v803
      %v867 = vpop.xlane.xlu0 %866
      %v868 = vrcp.pop %v805
      %v869 = vrcp.pop %v807
      %v870 = vrcp.pop %v809
      %v871 = vrcp.pop %v811
      %v872 = vrcp.pop %v813
      %v873 = vrcp.pop %v815
      %v874 = vrcp.pop %v817
      %v875 = vrcp.pop %v819
      %v876 = vrcp.pop %v821
      %v877 = vrcp.pop %v823
      %v878 = vrcp.pop %v825
      %v879 = vrcp.pop %v827
      %v880 = vrcp.pop %v829
      %v881 = vrcp.pop %v831
      %v882 = vrcp.pop %v833
      %v883 = vrcp.pop %v835
      %v884 = vrcp.pop %v837
      %v885 = vrcp.pop %v839
      %v886 = vrcp.pop %v841
      %v887 = vrcp.pop %v843
      %v888 = vrcp.pop %v845
      %v889 = vrcp.pop %v847
      %v890 = vrcp.pop %v849
      %v891 = vrcp.pop %v851
      %v892 = vrcp.pop %v853
      %v893 = vrcp.pop %v855
      %v894 = vrcp.pop %v857
      %v895 = vrcp.pop %v859
      %v896 = vrcp.pop %v861
      %v897 = vrcp.pop %v863
      %v898 = vrcp.pop %v865
      %v899 = vrcp.pop %v867
      %v900 = vmul.f32 %v741, %v868
      %v901 = vmul.f32 %v743, %v869
      %v902 = vmul.f32 %v745, %v870
      %v903 = vmul.f32 %v747, %v871
      %v904 = vmul.f32 %v749, %v872
      %v905 = vmul.f32 %v751, %v873
      %v906 = vmul.f32 %v753, %v874
      %v907 = vmul.f32 %v755, %v875
      %v908 = vmul.f32 %v757, %v876
      %v909 = vmul.f32 %v759, %v877
      %v910 = vmul.f32 %v761, %v878
      %v911 = vmul.f32 %v763, %v879
      %v912 = vmul.f32 %v765, %v880
      %v913 = vmul.f32 %v767, %v881
      %v914 = vmul.f32 %v769, %v882
      %v915 = vmul.f32 %v771, %v883
      %v916 = vmul.f32 %v773, %v884
      %v917 = vmul.f32 %v775, %v885
      %v918 = vmul.f32 %v777, %v886
      %v919 = vmul.f32 %v779, %v887
      %v920 = vmul.f32 %v781, %v888
      %v921 = vmul.f32 %v783, %v889
      %v922 = vmul.f32 %v785, %v890
      %v923 = vmul.f32 %v787, %v891
      %v924 = vmul.f32 %v789, %v892
      %v925 = vmul.f32 %v791, %v893
      %v926 = vmul.f32 %v793, %v894
      %v927 = vmul.f32 %v795, %v895
      %v928 = vmul.f32 %v797, %v896
      %v929 = vmul.f32 %v799, %v897
      %v930 = vmul.f32 %v801, %v898
      %v931 = vmul.f32 %v803, %v899
      %v932 = vpack.c.bf16 %v901, %v900
      %v933 = vpack.c.bf16 %v903, %v902
      %v934 = vpack.c.bf16 %v905, %v904
      %v935 = vpack.c.bf16 %v907, %v906
      %v936 = vpack.c.bf16 %v909, %v908
      %v937 = vpack.c.bf16 %v911, %v910
      %v938 = vpack.c.bf16 %v913, %v912
      %v939 = vpack.c.bf16 %v915, %v914
      %v940 = vpack.c.bf16 %v917, %v916
      %v941 = vpack.c.bf16 %v919, %v918
      %v942 = vpack.c.bf16 %v921, %v920
      %v943 = vpack.c.bf16 %v923, %v922
      %v944 = vpack.c.bf16 %v925, %v924
      %v945 = vpack.c.bf16 %v927, %v926
      %v946 = vpack.c.bf16 %v929, %v928
      %v947 = vpack.c.bf16 %v931, %v930
      %v948 = vld [vmem:[%s243] sm:$0xf]
      %v949 = vld [vmem:[%s243 + $0x4] sm:$0xf]
      %v950 = vld [vmem:[%s243 + $0x8] sm:$0xf]
      %v951 = vld [vmem:[%s243 + $0xc] sm:$0xf]
      %v952 = vld [vmem:[%s243 + $0x10] sm:$0xf]
      %v953 = vld [vmem:[%s243 + $0x14] sm:$0xf]
      %v954 = vld [vmem:[%s243 + $0x18] sm:$0xf]
      %v955 = vld [vmem:[%s243 + $0x1c] sm:$0xf]
      %v956 = vld [vmem:[%s243 + $0x20] sm:$0xf]
      %v957 = vld [vmem:[%s243 + $0x24] sm:$0xf]
      %v958 = vld [vmem:[%s243 + $0x28] sm:$0xf]
      %v959 = vld [vmem:[%s243 + $0x2c] sm:$0xf]
      %v960 = vld [vmem:[%s243 + $0x30] sm:$0xf]
      %v961 = vld [vmem:[%s243 + $0x34] sm:$0xf]
      %v962 = vld [vmem:[%s243 + $0x38] sm:$0xf]
      %v963 = vld [vmem:[%s243 + $0x3c] sm:$0xf]
      %v980 = vunpack.c.l.b16 %v948
      %v981 = vunpack.c.l.b16 %v949
      %v982 = vunpack.c.l.b16 %v950
      %v983 = vunpack.c.l.b16 %v951
      %v984 = vunpack.c.l.b16 %v952
      %v985 = vunpack.c.l.b16 %v953
      %v986 = vunpack.c.l.b16 %v954
      %v987 = vunpack.c.l.b16 %v955
      %v988 = vunpack.c.l.b16 %v956
      %v989 = vunpack.c.l.b16 %v957
      %v990 = vunpack.c.l.b16 %v958
      %v991 = vunpack.c.l.b16 %v959
      %v992 = vunpack.c.l.b16 %v960
      %v993 = vunpack.c.l.b16 %v961
      %v994 = vunpack.c.l.b16 %v962
      %v995 = vunpack.c.l.b16 %v963
      %v996 = vpack.c.b16 %v981, %v980
      %v997 = vpack.c.b16 %v983, %v982
      %v998 = vpack.c.b16 %v985, %v984
      %v999 = vpack.c.b16 %v987, %v986
      %v1000 = vpack.c.b16 %v989, %v988
      %v1001 = vpack.c.b16 %v991, %v990
      %v1002 = vpack.c.b16 %v993, %v992
      %v1003 = vpack.c.b16 %v995, %v994
      %1012 = vmatprep.subr.bf16.mxu0 0
      %1013 = vmatpush1.bf16.msra.mxu0 %v996
      %1014 = vmatprep.subr.bf16.mxu0 0
      %1015 = vmatpush1.bf16.msra.mxu0 %v997
      %1016 = vmatprep.subr.bf16.mxu0 0
      %1017 = vmatpush1.bf16.msra.mxu0 %v998
      %1018 = vmatprep.subr.bf16.mxu0 0
      %1019 = vmatpush1.bf16.msra.mxu0 %v999
      %1020 = vmatprep.subr.bf16.mxu0 0
      %1021 = vmatpush1.bf16.msra.mxu0 %v1000
      %1022 = vmatprep.subr.bf16.mxu0 0
      %1023 = vmatpush1.bf16.msra.mxu0 %v1001
      %1024 = vmatprep.subr.bf16.mxu0 0
      %1025 = vmatpush1.bf16.msra.mxu0 %v1002
      %1026 = vmatprep.subr.bf16.mxu0 0
      %1027 = vmatpush1.bf16.msra.mxu0 %v1003
      %1028 = vmatprep.subr.bf16.mxu0 0
      %1029 = vmatpush1.bf16.msra.mxu0 0
      %1030 = vmatprep.subr.bf16.mxu0 0
      %1031 = vmatpush1.bf16.msra.mxu0 0
      %1032 = vmatprep.subr.bf16.mxu0 0
      %1033 = vmatpush1.bf16.msra.mxu0 0
      %1034 = vmatprep.subr.bf16.mxu0 0
      %1035 = vmatpush1.bf16.msra.mxu0 0
      %1036 = vmatprep.subr.bf16.mxu0 0
      %1037 = vmatpush1.bf16.msra.mxu0 0
      %1038 = vmatprep.subr.bf16.mxu0 0
      %1039 = vmatpush1.bf16.msra.mxu0 0
      %1040 = vmatprep.subr.bf16.mxu0 0
      %1041 = vmatpush1.bf16.msra.mxu0 0
      %1042 = vmatprep.subr.bf16.mxu0 0
      %1043 = vmatpush1.bf16.msra.mxu0 0
      %1044 = vmatprep.mubr.bf16.mxu0 0
      %1045 = vmatmul.mubr.bf16.gmra.mrb[0].mxu0 %v932
      %v1046 = vpop.f32.mrb[0].mxu0
      %v1047 = vadd.f32 0.0, %v1046
      %v1048 = vpop.f32.mrb[0].mxu0
      %v1049 = vpop.f32.mrb[0].mxu0
      %v1050 = vadd.f32 0.0, %v1049
      %v1051 = vpop.f32.mrb[0].mxu0
      %1052 = vmatprep.mubr.bf16.mxu0 0
      %1053 = vmatmul.mubr.bf16.gmra.mrb[0].mxu0 %v933
      %v1054 = vpop.f32.mrb[0].mxu0
      %v1055 = vadd.f32 0.0, %v1054
      %v1056 = vpop.f32.mrb[0].mxu0
      %v1057 = vpop.f32.mrb[0].mxu0
      %v1058 = vadd.f32 0.0, %v1057
      %v1059 = vpop.f32.mrb[0].mxu0
      %1060 = vmatprep.mubr.bf16.mxu0 0
      %1061 = vmatmul.mubr.bf16.gmra.mrb[0].mxu0 %v934
      %v1062 = vpop.f32.mrb[0].mxu0
      %v1063 = vadd.f32 0.0, %v1062
      %v1064 = vpop.f32.mrb[0].mxu0
      %v1065 = vpop.f32.mrb[0].mxu0
      %v1066 = vadd.f32 0.0, %v1065
      %v1067 = vpop.f32.mrb[0].mxu0
      %1068 = vmatprep.mubr.bf16.mxu0 0
      %1069 = vmatmul.mubr.bf16.gmra.mrb[0].mxu0 %v935
      %v1070 = vpop.f32.mrb[0].mxu0
      %v1071 = vadd.f32 0.0, %v1070
      %v1072 = vpop.f32.mrb[0].mxu0
      %v1073 = vpop.f32.mrb[0].mxu0
      %v1074 = vadd.f32 0.0, %v1073
      %v1075 = vpop.f32.mrb[0].mxu0
      %1076 = vmatprep.mubr.bf16.mxu0 0
      %1077 = vmatmul.mubr.bf16.gmra.mrb[0].mxu0 %v936
      %v1078 = vpop.f32.mrb[0].mxu0
      %v1079 = vadd.f32 0.0, %v1078
      %v1080 = vpop.f32.mrb[0].mxu0
      %v1081 = vpop.f32.mrb[0].mxu0
      %v1082 = vadd.f32 0.0, %v1081
      %v1083 = vpop.f32.mrb[0].mxu0
      %1084 = vmatprep.mubr.bf16.mxu0 0
      %1085 = vmatmul.mubr.bf16.gmra.mrb[0].mxu0 %v937
      %v1086 = vpop.f32.mrb[0].mxu0
      %v1087 = vadd.f32 0.0, %v1086
      %v1088 = vpop.f32.mrb[0].mxu0
      %v1089 = vpop.f32.mrb[0].mxu0
      %v1090 = vadd.f32 0.0, %v1089
      %v1091 = vpop.f32.mrb[0].mxu0
      %1092 = vmatprep.mubr.bf16.mxu0 0
      %1093 = vmatmul.mubr.bf16.gmra.mrb[0].mxu0 %v938
      %v1094 = vpop.f32.mrb[0].mxu0
      %v1095 = vadd.f32 0.0, %v1094
      %v1096 = vpop.f32.mrb[0].mxu0
      %v1097 = vpop.f32.mrb[0].mxu0
      %v1098 = vadd.f32 0.0, %v1097
      %v1099 = vpop.f32.mrb[0].mxu0
      %1100 = vmatprep.mubr.bf16.mxu0 0
      %1101 = vmatmul.mubr.bf16.gmra.mrb[0].mxu0 %v939
      %v1102 = vpop.f32.mrb[0].mxu0
      %v1103 = vadd.f32 0.0, %v1102
      %v1104 = vpop.f32.mrb[0].mxu0
      %v1105 = vpop.f32.mrb[0].mxu0
      %v1106 = vadd.f32 0.0, %v1105
      %v1107 = vpop.f32.mrb[0].mxu0
      %1108 = vmatprep.mubr.bf16.mxu0 0
      %1109 = vmatmul.mubr.bf16.gmra.mrb[0].mxu0 %v940
      %v1110 = vpop.f32.mrb[0].mxu0
      %v1111 = vadd.f32 0.0, %v1110
      %v1112 = vpop.f32.mrb[0].mxu0
      %v1113 = vpop.f32.mrb[0].mxu0
      %v1114 = vadd.f32 0.0, %v1113
      %v1115 = vpop.f32.mrb[0].mxu0
      %1116 = vmatprep.mubr.bf16.mxu0 0
      %1117 = vmatmul.mubr.bf16.gmra.mrb[0].mxu0 %v941
      %v1118 = vpop.f32.mrb[0].mxu0
      %v1119 = vadd.f32 0.0, %v1118
      %v1120 = vpop.f32.mrb[0].mxu0
      %v1121 = vpop.f32.mrb[0].mxu0
      %v1122 = vadd.f32 0.0, %v1121
      %v1123 = vpop.f32.mrb[0].mxu0
      %1124 = vmatprep.mubr.bf16.mxu0 0
      %1125 = vmatmul.mubr.bf16.gmra.mrb[0].mxu0 %v942
      %v1126 = vpop.f32.mrb[0].mxu0
      %v1127 = vadd.f32 0.0, %v1126
      %v1128 = vpop.f32.mrb[0].mxu0
      %v1129 = vpop.f32.mrb[0].mxu0
      %v1130 = vadd.f32 0.0, %v1129
      %v1131 = vpop.f32.mrb[0].mxu0
      %1132 = vmatprep.mubr.bf16.mxu0 0
      %1133 = vmatmul.mubr.bf16.gmra.mrb[0].mxu0 %v943
      %v1134 = vpop.f32.mrb[0].mxu0
      %v1135 = vadd.f32 0.0, %v1134
      %v1136 = vpop.f32.mrb[0].mxu0
      %v1137 = vpop.f32.mrb[0].mxu0
      %v1138 = vadd.f32 0.0, %v1137
      %v1139 = vpop.f32.mrb[0].mxu0
      %1140 = vmatprep.mubr.bf16.mxu0 0
      %1141 = vmatmul.mubr.bf16.gmra.mrb[0].mxu0 %v944
      %v1142 = vpop.f32.mrb[0].mxu0
      %v1143 = vadd.f32 0.0, %v1142
      %v1144 = vpop.f32.mrb[0].mxu0
      %v1145 = vpop.f32.mrb[0].mxu0
      %v1146 = vadd.f32 0.0, %v1145
      %v1147 = vpop.f32.mrb[0].mxu0
      %1148 = vmatprep.mubr.bf16.mxu0 0
      %1149 = vmatmul.mubr.bf16.gmra.mrb[0].mxu0 %v945
      %v1150 = vpop.f32.mrb[0].mxu0
      %v1151 = vadd.f32 0.0, %v1150
      %v1152 = vpop.f32.mrb[0].mxu0
      %v1153 = vpop.f32.mrb[0].mxu0
      %v1154 = vadd.f32 0.0, %v1153
      %v1155 = vpop.f32.mrb[0].mxu0
      %1156 = vmatprep.mubr.bf16.mxu0 0
      %1157 = vmatmul.mubr.bf16.gmra.mrb[0].mxu0 %v946
      %v1158 = vpop.f32.mrb[0].mxu0
      %v1159 = vadd.f32 0.0, %v1158
      %v1160 = vpop.f32.mrb[0].mxu0
      %v1161 = vpop.f32.mrb[0].mxu0
      %v1162 = vadd.f32 0.0, %v1161
      %v1163 = vpop.f32.mrb[0].mxu0
      %1164 = vmatprep.mubr.bf16.mxu0 0
      %1165 = vmatmul.mubr.bf16.gmra.mrb[0].mxu0 %v947
      %v1166 = vpop.f32.mrb[0].mxu0
      %v1167 = vadd.f32 0.0, %v1166
      %v1168 = vpop.f32.mrb[0].mxu0
      %v1169 = vpop.f32.mrb[0].mxu0
      %v1170 = vadd.f32 0.0, %v1169
      %v1171 = vpop.f32.mrb[0].mxu0
      %1172 = vdwg.mxu0
      %v1173 = vpack.c.bf16 %v1050, %v1047
      %v1174 = vpack.c.bf16 %v1058, %v1055
      %v1175 = vpack.c.bf16 %v1066, %v1063
      %v1176 = vpack.c.bf16 %v1074, %v1071
      %v1177 = vpack.c.bf16 %v1082, %v1079
      %v1178 = vpack.c.bf16 %v1090, %v1087
      %v1179 = vpack.c.bf16 %v1098, %v1095
      %v1180 = vpack.c.bf16 %v1106, %v1103
      %v1181 = vpack.c.bf16 %v1114, %v1111
      %v1182 = vpack.c.bf16 %v1122, %v1119
      %v1183 = vpack.c.bf16 %v1130, %v1127
      %v1184 = vpack.c.bf16 %v1138, %v1135
      %v1185 = vpack.c.bf16 %v1146, %v1143
      %v1186 = vpack.c.bf16 %v1154, %v1151
      %v1187 = vpack.c.bf16 %v1162, %v1159
      %v1188 = vpack.c.bf16 %v1170, %v1167
      %v1205 = vunpack.c.l.b16 %v1173
      %v1206 = vunpack.c.h.b16 %v1173
      %v1207 = vunpack.c.l.b16 %v1174
      %v1208 = vunpack.c.h.b16 %v1174
      %v1209 = vunpack.c.l.b16 %v1175
      %v1210 = vunpack.c.h.b16 %v1175
      %v1211 = vunpack.c.l.b16 %v1176
      %v1212 = vunpack.c.h.b16 %v1176
      %v1213 = vunpack.c.l.b16 %v1177
      %v1214 = vunpack.c.h.b16 %v1177
      %v1215 = vunpack.c.l.b16 %v1178
      %v1216 = vunpack.c.h.b16 %v1178
      %v1217 = vunpack.c.l.b16 %v1179
      %v1218 = vunpack.c.h.b16 %v1179
      %v1219 = vunpack.c.l.b16 %v1180
      %v1220 = vunpack.c.h.b16 %v1180
      %v1221 = vunpack.c.l.b16 %v1181
      %v1222 = vunpack.c.h.b16 %v1181
      %v1223 = vunpack.c.l.b16 %v1182
      %v1224 = vunpack.c.h.b16 %v1182
      %v1225 = vunpack.c.l.b16 %v1183
      %v1226 = vunpack.c.h.b16 %v1183
      %v1227 = vunpack.c.l.b16 %v1184
      %v1228 = vunpack.c.h.b16 %v1184
      %v1229 = vunpack.c.l.b16 %v1185
      %v1230 = vunpack.c.h.b16 %v1185
      %v1231 = vunpack.c.l.b16 %v1186
      %v1232 = vunpack.c.h.b16 %v1186
      %v1233 = vunpack.c.l.b16 %v1187
      %v1234 = vunpack.c.h.b16 %v1187
      %v1235 = vunpack.c.l.b16 %v1188
      %v1236 = vunpack.c.h.b16 %v1188
      %v1237 = vpack.c.b16 %v1205, %v1205
      %v1238 = vpack.c.b16 %v1206, %v1206
      %v1239 = vpack.c.b16 %v1207, %v1207
      %v1240 = vpack.c.b16 %v1208, %v1208
      %v1241 = vpack.c.b16 %v1209, %v1209
      %v1242 = vpack.c.b16 %v1210, %v1210
      %v1243 = vpack.c.b16 %v1211, %v1211
      %v1244 = vpack.c.b16 %v1212, %v1212
      %v1245 = vpack.c.b16 %v1213, %v1213
      %v1246 = vpack.c.b16 %v1214, %v1214
      %v1247 = vpack.c.b16 %v1215, %v1215
      %v1248 = vpack.c.b16 %v1216, %v1216
      %v1249 = vpack.c.b16 %v1217, %v1217
      %v1250 = vpack.c.b16 %v1218, %v1218
      %v1251 = vpack.c.b16 %v1219, %v1219
      %v1252 = vpack.c.b16 %v1220, %v1220
      %v1253 = vpack.c.b16 %v1221, %v1221
      %v1254 = vpack.c.b16 %v1222, %v1222
      %v1255 = vpack.c.b16 %v1223, %v1223
      %v1256 = vpack.c.b16 %v1224, %v1224
      %v1257 = vpack.c.b16 %v1225, %v1225
      %v1258 = vpack.c.b16 %v1226, %v1226
      %v1259 = vpack.c.b16 %v1227, %v1227
      %v1260 = vpack.c.b16 %v1228, %v1228
      %v1261 = vpack.c.b16 %v1229, %v1229
      %v1262 = vpack.c.b16 %v1230, %v1230
      %v1263 = vpack.c.b16 %v1231, %v1231
      %v1264 = vpack.c.b16 %v1232, %v1232
      %v1265 = vpack.c.b16 %v1233, %v1233
      %v1266 = vpack.c.b16 %v1234, %v1234
      %v1267 = vpack.c.b16 %v1235, %v1235
      %v1268 = vpack.c.b16 %v1236, %v1236
      %1301 = vst [vmem:[%s253] sm:$0xf] %v1237
      %1302 = vst [vmem:[%s253 + $0x8] sm:$0xf] %v1238
      %1303 = vst [vmem:[%s253 + $0x10] sm:$0xf] %v1239
      %1304 = vst [vmem:[%s253 + $0x18] sm:$0xf] %v1240
      %1305 = vst [vmem:[%s253 + $0x20] sm:$0xf] %v1241
      %1306 = vst [vmem:[%s253 + $0x28] sm:$0xf] %v1242
      %1307 = vst [vmem:[%s253 + $0x30] sm:$0xf] %v1243
      %1308 = vst [vmem:[%s253 + $0x38] sm:$0xf] %v1244
      %1309 = vst [vmem:[%s253 + $0x40] sm:$0xf] %v1245
      %1310 = vst [vmem:[%s253 + $0x48] sm:$0xf] %v1246
      %1311 = vst [vmem:[%s253 + $0x50] sm:$0xf] %v1247
      %1312 = vst [vmem:[%s253 + $0x58] sm:$0xf] %v1248
      %1313 = vst [vmem:[%s253 + $0x60] sm:$0xf] %v1249
      %1314 = vst [vmem:[%s253 + $0x68] sm:$0xf] %v1250
      %1315 = vst [vmem:[%s253 + $0x70] sm:$0xf] %v1251
      %1316 = vst [vmem:[%s253 + $0x78] sm:$0xf] %v1252
      %1317 = vst [vmem:[%s253 + $0x80] sm:$0xf] %v1253
      %1318 = vst [vmem:[%s253 + $0x88] sm:$0xf] %v1254
      %1319 = vst [vmem:[%s253 + $0x90] sm:$0xf] %v1255
      %1320 = vst [vmem:[%s253 + $0x98] sm:$0xf] %v1256
      %1321 = vst [vmem:[%s253 + $0xa0] sm:$0xf] %v1257
      %1322 = vst [vmem:[%s253 + $0xa8] sm:$0xf] %v1258
      %1323 = vst [vmem:[%s253 + $0xb0] sm:$0xf] %v1259
      %1324 = vst [vmem:[%s253 + $0xb8] sm:$0xf] %v1260
      %1325 = vst [vmem:[%s253 + $0xc0] sm:$0xf] %v1261
      %1326 = vst [vmem:[%s253 + $0xc8] sm:$0xf] %v1262
      %1327 = vst [vmem:[%s253 + $0xd0] sm:$0xf] %v1263
      %1328 = vst [vmem:[%s253 + $0xd8] sm:$0xf] %v1264
      %1329 = vst [vmem:[%s253 + $0xe0] sm:$0xf] %v1265
      %1330 = vst [vmem:[%s253 + $0xe8] sm:$0xf] %v1266
      %1331 = vst [vmem:[%s253 + $0xf0] sm:$0xf] %v1267
      %1332 = vst [vmem:[%s253 + $0xf8] sm:$0xf] %v1268
      %v1333 = vld [vmem:[%s232 + $0x4] sm:$0xf]
      %v1334 = vld [vmem:[%s232 + $0xc] sm:$0xf]
      %v1335 = vld [vmem:[%s232 + $0x14] sm:$0xf]
      %v1336 = vld [vmem:[%s232 + $0x1c] sm:$0xf]
      %v1337 = vld [vmem:[%s232 + $0x24] sm:$0xf]
      %v1338 = vld [vmem:[%s232 + $0x2c] sm:$0xf]
      %v1339 = vld [vmem:[%s232 + $0x34] sm:$0xf]
      %v1340 = vld [vmem:[%s232 + $0x3c] sm:$0xf]
      %v1341 = vld [vmem:[%s232 + $0x44] sm:$0xf]
      %v1342 = vld [vmem:[%s232 + $0x4c] sm:$0xf]
      %v1343 = vld [vmem:[%s232 + $0x54] sm:$0xf]
      %v1344 = vld [vmem:[%s232 + $0x5c] sm:$0xf]
      %v1345 = vld [vmem:[%s232 + $0x64] sm:$0xf]
      %v1346 = vld [vmem:[%s232 + $0x6c] sm:$0xf]
      %v1347 = vld [vmem:[%s232 + $0x74] sm:$0xf]
      %v1348 = vld [vmem:[%s232 + $0x7c] sm:$0xf]
      %v1349 = vld [vmem:[%s232 + $0x84] sm:$0xf]
      %v1350 = vld [vmem:[%s232 + $0x8c] sm:$0xf]
      %v1351 = vld [vmem:[%s232 + $0x94] sm:$0xf]
      %v1352 = vld [vmem:[%s232 + $0x9c] sm:$0xf]
      %v1353 = vld [vmem:[%s232 + $0xa4] sm:$0xf]
      %v1354 = vld [vmem:[%s232 + $0xac] sm:$0xf]
      %v1355 = vld [vmem:[%s232 + $0xb4] sm:$0xf]
      %v1356 = vld [vmem:[%s232 + $0xbc] sm:$0xf]
      %v1357 = vld [vmem:[%s232 + $0xc4] sm:$0xf]
      %v1358 = vld [vmem:[%s232 + $0xcc] sm:$0xf]
      %v1359 = vld [vmem:[%s232 + $0xd4] sm:$0xf]
      %v1360 = vld [vmem:[%s232 + $0xdc] sm:$0xf]
      %v1361 = vld [vmem:[%s232 + $0xe4] sm:$0xf]
      %v1362 = vld [vmem:[%s232 + $0xec] sm:$0xf]
      %v1363 = vld [vmem:[%s232 + $0xf4] sm:$0xf]
      %v1364 = vld [vmem:[%s232 + $0xfc] sm:$0xf]
      %s1365 = scalar_lea.vmem %s238, 64
      %v1366 = vld [vmem:[%s1365] sm:$0xf]
      %v1367 = vld [vmem:[%s1365 + $0x4] sm:$0xf]
      %v1368 = vld [vmem:[%s1365 + $0x8] sm:$0xf]
      %v1369 = vld [vmem:[%s1365 + $0xc] sm:$0xf]
      %v1370 = vld [vmem:[%s1365 + $0x10] sm:$0xf]
      %v1371 = vld [vmem:[%s1365 + $0x14] sm:$0xf]
      %v1372 = vld [vmem:[%s1365 + $0x18] sm:$0xf]
      %v1373 = vld [vmem:[%s1365 + $0x1c] sm:$0xf]
      %v1374 = vld [vmem:[%s1365 + $0x20] sm:$0xf]
      %v1375 = vld [vmem:[%s1365 + $0x24] sm:$0xf]
      %v1376 = vld [vmem:[%s1365 + $0x28] sm:$0xf]
      %v1377 = vld [vmem:[%s1365 + $0x2c] sm:$0xf]
      %v1378 = vld [vmem:[%s1365 + $0x30] sm:$0xf]
      %v1379 = vld [vmem:[%s1365 + $0x34] sm:$0xf]
      %v1380 = vld [vmem:[%s1365 + $0x38] sm:$0xf]
      %v1381 = vld [vmem:[%s1365 + $0x3c] sm:$0xf]
      %v1414 = vunpack.c.l.b16 %v1333
      %v1415 = vunpack.c.l.b16 %v1334
      %v1416 = vunpack.c.l.b16 %v1335
      %v1417 = vunpack.c.l.b16 %v1336
      %v1418 = vunpack.c.l.b16 %v1337
      %v1419 = vunpack.c.l.b16 %v1338
      %v1420 = vunpack.c.l.b16 %v1339
      %v1421 = vunpack.c.l.b16 %v1340
      %v1422 = vunpack.c.l.b16 %v1341
      %v1423 = vunpack.c.l.b16 %v1342
      %v1424 = vunpack.c.l.b16 %v1343
      %v1425 = vunpack.c.l.b16 %v1344
      %v1426 = vunpack.c.l.b16 %v1345
      %v1427 = vunpack.c.l.b16 %v1346
      %v1428 = vunpack.c.l.b16 %v1347
      %v1429 = vunpack.c.l.b16 %v1348
      %v1430 = vunpack.c.l.b16 %v1349
      %v1431 = vunpack.c.l.b16 %v1350
      %v1432 = vunpack.c.l.b16 %v1351
      %v1433 = vunpack.c.l.b16 %v1352
      %v1434 = vunpack.c.l.b16 %v1353
      %v1435 = vunpack.c.l.b16 %v1354
      %v1436 = vunpack.c.l.b16 %v1355
      %v1437 = vunpack.c.l.b16 %v1356
      %v1438 = vunpack.c.l.b16 %v1357
      %v1439 = vunpack.c.l.b16 %v1358
      %v1440 = vunpack.c.l.b16 %v1359
      %v1441 = vunpack.c.l.b16 %v1360
      %v1442 = vunpack.c.l.b16 %v1361
      %v1443 = vunpack.c.l.b16 %v1362
      %v1444 = vunpack.c.l.b16 %v1363
      %v1445 = vunpack.c.l.b16 %v1364
      %v1446 = vpack.c.b16 %v1415, %v1414
      %v1447 = vpack.c.b16 %v1417, %v1416
      %v1448 = vpack.c.b16 %v1419, %v1418
      %v1449 = vpack.c.b16 %v1421, %v1420
      %v1450 = vpack.c.b16 %v1423, %v1422
      %v1451 = vpack.c.b16 %v1425, %v1424
      %v1452 = vpack.c.b16 %v1427, %v1426
      %v1453 = vpack.c.b16 %v1429, %v1428
      %v1454 = vpack.c.b16 %v1431, %v1430
      %v1455 = vpack.c.b16 %v1433, %v1432
      %v1456 = vpack.c.b16 %v1435, %v1434
      %v1457 = vpack.c.b16 %v1437, %v1436
      %v1458 = vpack.c.b16 %v1439, %v1438
      %v1459 = vpack.c.b16 %v1441, %v1440
      %v1460 = vpack.c.b16 %v1443, %v1442
      %v1461 = vpack.c.b16 %v1445, %v1444
      %v1494 = vunpack.c.l.b16 %v1366
      %v1495 = vunpack.c.l.b16 %v1367
      %v1496 = vunpack.c.l.b16 %v1368
      %v1497 = vunpack.c.l.b16 %v1369
      %v1498 = vunpack.c.l.b16 %v1370
      %v1499 = vunpack.c.l.b16 %v1371
      %v1500 = vunpack.c.l.b16 %v1372
      %v1501 = vunpack.c.l.b16 %v1373
      %v1502 = vunpack.c.l.b16 %v1374
      %v1503 = vunpack.c.l.b16 %v1375
      %v1504 = vunpack.c.l.b16 %v1376
      %v1505 = vunpack.c.l.b16 %v1377
      %v1506 = vunpack.c.l.b16 %v1378
      %v1507 = vunpack.c.l.b16 %v1379
      %v1508 = vunpack.c.l.b16 %v1380
      %v1509 = vunpack.c.l.b16 %v1381
      %v1510 = vpack.c.b16 %v1495, %v1494
      %v1511 = vpack.c.b16 %v1497, %v1496
      %v1512 = vpack.c.b16 %v1499, %v1498
      %v1513 = vpack.c.b16 %v1501, %v1500
      %v1514 = vpack.c.b16 %v1503, %v1502
      %v1515 = vpack.c.b16 %v1505, %v1504
      %v1516 = vpack.c.b16 %v1507, %v1506
      %v1517 = vpack.c.b16 %v1509, %v1508
      %1526 = vmatprep.subr.bf16.mxu0 0
      %1527 = vmatpush1.bf16.msra.mxu0 %v1510
      %1528 = vmatprep.subr.bf16.mxu0 0
      %1529 = vmatpush1.bf16.msra.mxu0 %v1511
      %1530 = vmatprep.subr.bf16.mxu0 0
      %1531 = vmatpush1.bf16.msra.mxu0 %v1512
      %1532 = vmatprep.subr.bf16.mxu0 0
      %1533 = vmatpush1.bf16.msra.mxu0 %v1513
      %1534 = vmatprep.subr.bf16.mxu0 0
      %1535 = vmatpush1.bf16.msra.mxu0 %v1514
      %1536 = vmatprep.subr.bf16.mxu0 0
      %1537 = vmatpush1.bf16.msra.mxu0 %v1515
      %1538 = vmatprep.subr.bf16.mxu0 0
      %1539 = vmatpush1.bf16.msra.mxu0 %v1516
      %1540 = vmatprep.subr.bf16.mxu0 0
      %1541 = vmatpush1.bf16.msra.mxu0 %v1517
      %1542 = vmatprep.subr.bf16.mxu0 0
      %1543 = vmatpush1.bf16.msra.mxu0 0
      %1544 = vmatprep.subr.bf16.mxu0 0
      %1545 = vmatpush1.bf16.msra.mxu0 0
      %1546 = vmatprep.subr.bf16.mxu0 0
      %1547 = vmatpush1.bf16.msra.mxu0 0
      %1548 = vmatprep.subr.bf16.mxu0 0
      %1549 = vmatpush1.bf16.msra.mxu0 0
      %1550 = vmatprep.subr.bf16.mxu0 0
      %1551 = vmatpush1.bf16.msra.mxu0 0
      %1552 = vmatprep.subr.bf16.mxu0 0
      %1553 = vmatpush1.bf16.msra.mxu0 0
      %1554 = vmatprep.subr.bf16.mxu0 0
      %1555 = vmatpush1.bf16.msra.mxu0 0
      %1556 = vmatprep.subr.bf16.mxu0 0
      %1557 = vmatpush1.bf16.msra.mxu0 0
      %1558 = vmatprep.mubr.bf16.mxu0 0
      %1559 = vmatmul.mubr.bf16.gmra.mrb[0].mxu0 %v1446
      %v1560 = vpop.f32.mrb[0].mxu0
      %v1561 = vadd.f32 0.0, %v1560
      %v1562 = vpop.f32.mrb[0].mxu0
      %v1563 = vpop.f32.mrb[0].mxu0
      %v1564 = vadd.f32 0.0, %v1563
      %v1565 = vpop.f32.mrb[0].mxu0
      %1566 = vmatprep.mubr.bf16.mxu0 0
      %1567 = vmatmul.mubr.bf16.gmra.mrb[0].mxu0 %v1447
      %v1568 = vpop.f32.mrb[0].mxu0
      %v1569 = vadd.f32 0.0, %v1568
      %v1570 = vpop.f32.mrb[0].mxu0
      %v1571 = vpop.f32.mrb[0].mxu0
      %v1572 = vadd.f32 0.0, %v1571
      %v1573 = vpop.f32.mrb[0].mxu0
      %1574 = vmatprep.mubr.bf16.mxu0 0
      %1575 = vmatmul.mubr.bf16.gmra.mrb[0].mxu0 %v1448
      %v1576 = vpop.f32.mrb[0].mxu0
      %v1577 = vadd.f32 0.0, %v1576
      %v1578 = vpop.f32.mrb[0].mxu0
      %v1579 = vpop.f32.mrb[0].mxu0
      %v1580 = vadd.f32 0.0, %v1579
      %v1581 = vpop.f32.mrb[0].mxu0
      %1582 = vmatprep.mubr.bf16.mxu0 0
      %1583 = vmatmul.mubr.bf16.gmra.mrb[0].mxu0 %v1449
      %v1584 = vpop.f32.mrb[0].mxu0
      %v1585 = vadd.f32 0.0, %v1584
      %v1586 = vpop.f32.mrb[0].mxu0
      %v1587 = vpop.f32.mrb[0].mxu0
      %v1588 = vadd.f32 0.0, %v1587
      %v1589 = vpop.f32.mrb[0].mxu0
      %1590 = vmatprep.mubr.bf16.mxu0 0
      %1591 = vmatmul.mubr.bf16.gmra.mrb[0].mxu0 %v1450
      %v1592 = vpop.f32.mrb[0].mxu0
      %v1593 = vadd.f32 0.0, %v1592
      %v1594 = vpop.f32.mrb[0].mxu0
      %v1595 = vpop.f32.mrb[0].mxu0
      %v1596 = vadd.f32 0.0, %v1595
      %v1597 = vpop.f32.mrb[0].mxu0
      %1598 = vmatprep.mubr.bf16.mxu0 0
      %1599 = vmatmul.mubr.bf16.gmra.mrb[0].mxu0 %v1451
      %v1600 = vpop.f32.mrb[0].mxu0
      %v1601 = vadd.f32 0.0, %v1600
      %v1602 = vpop.f32.mrb[0].mxu0
      %v1603 = vpop.f32.mrb[0].mxu0
      %v1604 = vadd.f32 0.0, %v1603
      %v1605 = vpop.f32.mrb[0].mxu0
      %1606 = vmatprep.mubr.bf16.mxu0 0
      %1607 = vmatmul.mubr.bf16.gmra.mrb[0].mxu0 %v1452
      %v1608 = vpop.f32.mrb[0].mxu0
      %v1609 = vadd.f32 0.0, %v1608
      %v1610 = vpop.f32.mrb[0].mxu0
      %v1611 = vpop.f32.mrb[0].mxu0
      %v1612 = vadd.f32 0.0, %v1611
      %v1613 = vpop.f32.mrb[0].mxu0
      %1614 = vmatprep.mubr.bf16.mxu0 0
      %1615 = vmatmul.mubr.bf16.gmra.mrb[0].mxu0 %v1453
      %v1616 = vpop.f32.mrb[0].mxu0
      %v1617 = vadd.f32 0.0, %v1616
      %v1618 = vpop.f32.mrb[0].mxu0
      %v1619 = vpop.f32.mrb[0].mxu0
      %v1620 = vadd.f32 0.0, %v1619
      %v1621 = vpop.f32.mrb[0].mxu0
      %1622 = vmatprep.mubr.bf16.mxu0 0
      %1623 = vmatmul.mubr.bf16.gmra.mrb[0].mxu0 %v1454
      %v1624 = vpop.f32.mrb[0].mxu0
      %v1625 = vadd.f32 0.0, %v1624
      %v1626 = vpop.f32.mrb[0].mxu0
      %v1627 = vpop.f32.mrb[0].mxu0
      %v1628 = vadd.f32 0.0, %v1627
      %v1629 = vpop.f32.mrb[0].mxu0
      %1630 = vmatprep.mubr.bf16.mxu0 0
      %1631 = vmatmul.mubr.bf16.gmra.mrb[0].mxu0 %v1455
      %v1632 = vpop.f32.mrb[0].mxu0
      %v1633 = vadd.f32 0.0, %v1632
      %v1634 = vpop.f32.mrb[0].mxu0
      %v1635 = vpop.f32.mrb[0].mxu0
      %v1636 = vadd.f32 0.0, %v1635
      %v1637 = vpop.f32.mrb[0].mxu0
      %1638 = vmatprep.mubr.bf16.mxu0 0
      %1639 = vmatmul.mubr.bf16.gmra.mrb[0].mxu0 %v1456
      %v1640 = vpop.f32.mrb[0].mxu0
      %v1641 = vadd.f32 0.0, %v1640
      %v1642 = vpop.f32.mrb[0].mxu0
      %v1643 = vpop.f32.mrb[0].mxu0
      %v1644 = vadd.f32 0.0, %v1643
      %v1645 = vpop.f32.mrb[0].mxu0
      %1646 = vmatprep.mubr.bf16.mxu0 0
      %1647 = vmatmul.mubr.bf16.gmra.mrb[0].mxu0 %v1457
      %v1648 = vpop.f32.mrb[0].mxu0
      %v1649 = vadd.f32 0.0, %v1648
      %v1650 = vpop.f32.mrb[0].mxu0
      %v1651 = vpop.f32.mrb[0].mxu0
      %v1652 = vadd.f32 0.0, %v1651
      %v1653 = vpop.f32.mrb[0].mxu0
      %1654 = vmatprep.mubr.bf16.mxu0 0
      %1655 = vmatmul.mubr.bf16.gmra.mrb[0].mxu0 %v1458
      %v1656 = vpop.f32.mrb[0].mxu0
      %v1657 = vadd.f32 0.0, %v1656
      %v1658 = vpop.f32.mrb[0].mxu0
      %v1659 = vpop.f32.mrb[0].mxu0
      %v1660 = vadd.f32 0.0, %v1659
      %v1661 = vpop.f32.mrb[0].mxu0
      %1662 = vmatprep.mubr.bf16.mxu0 0
      %1663 = vmatmul.mubr.bf16.gmra.mrb[0].mxu0 %v1459
      %v1664 = vpop.f32.mrb[0].mxu0
      %v1665 = vadd.f32 0.0, %v1664
      %v1666 = vpop.f32.mrb[0].mxu0
      %v1667 = vpop.f32.mrb[0].mxu0
      %v1668 = vadd.f32 0.0, %v1667
      %v1669 = vpop.f32.mrb[0].mxu0
      %1670 = vmatprep.mubr.bf16.mxu0 0
      %1671 = vmatmul.mubr.bf16.gmra.mrb[0].mxu0 %v1460
      %v1672 = vpop.f32.mrb[0].mxu0
      %v1673 = vadd.f32 0.0, %v1672
      %v1674 = vpop.f32.mrb[0].mxu0
      %v1675 = vpop.f32.mrb[0].mxu0
      %v1676 = vadd.f32 0.0, %v1675
      %v1677 = vpop.f32.mrb[0].mxu0
      %1678 = vmatprep.mubr.bf16.mxu0 0
      %1679 = vmatmul.mubr.bf16.gmra.mrb[0].mxu0 %v1461
      %v1680 = vpop.f32.mrb[0].mxu0
      %v1681 = vadd.f32 0.0, %v1680
      %v1682 = vpop.f32.mrb[0].mxu0
      %v1683 = vpop.f32.mrb[0].mxu0
      %v1684 = vadd.f32 0.0, %v1683
      %v1685 = vpop.f32.mrb[0].mxu0
      %1686 = vdwg.mxu0
      %v1687 = vsel %vm611, %v1561, -1e+30
      %v1688 = vsel %vm611, %v1564, -1e+30
      %v1689 = vsel %vm611, %v1569, -1e+30
      %v1690 = vsel %vm611, %v1572, -1e+30
      %v1691 = vsel %vm611, %v1577, -1e+30
      %v1692 = vsel %vm611, %v1580, -1e+30
      %v1693 = vsel %vm611, %v1585, -1e+30
      %v1694 = vsel %vm611, %v1588, -1e+30
      %v1695 = vsel %vm611, %v1593, -1e+30
      %v1696 = vsel %vm611, %v1596, -1e+30
      %v1697 = vsel %vm611, %v1601, -1e+30
      %v1698 = vsel %vm611, %v1604, -1e+30
      %v1699 = vsel %vm611, %v1609, -1e+30
      %v1700 = vsel %vm611, %v1612, -1e+30
      %v1701 = vsel %vm611, %v1617, -1e+30
      %v1702 = vsel %vm611, %v1620, -1e+30
      %v1703 = vsel %vm611, %v1625, -1e+30
      %v1704 = vsel %vm611, %v1628, -1e+30
      %v1705 = vsel %vm611, %v1633, -1e+30
      %v1706 = vsel %vm611, %v1636, -1e+30
      %v1707 = vsel %vm611, %v1641, -1e+30
      %v1708 = vsel %vm611, %v1644, -1e+30
      %v1709 = vsel %vm611, %v1649, -1e+30
      %v1710 = vsel %vm611, %v1652, -1e+30
      %v1711 = vsel %vm611, %v1657, -1e+30
      %v1712 = vsel %vm611, %v1660, -1e+30
      %v1713 = vsel %vm611, %v1665, -1e+30
      %v1714 = vsel %vm611, %v1668, -1e+30
      %v1715 = vsel %vm611, %v1673, -1e+30
      %v1716 = vsel %vm611, %v1676, -1e+30
      %v1717 = vsel %vm611, %v1681, -1e+30
      %v1718 = vsel %vm611, %v1684, -1e+30
      %1719 = vmax.xlane.f32.xlu0 %v1687
      %v1720 = vpop.xlane.xlu0 %1719
      %1721 = vmax.xlane.f32.xlu0 %v1688
      %v1722 = vpop.xlane.xlu0 %1721
      %1723 = vmax.xlane.f32.xlu0 %v1689
      %v1724 = vpop.xlane.xlu0 %1723
      %1725 = vmax.xlane.f32.xlu0 %v1690
      %v1726 = vpop.xlane.xlu0 %1725
      %1727 = vmax.xlane.f32.xlu0 %v1691
      %v1728 = vpop.xlane.xlu0 %1727
      %1729 = vmax.xlane.f32.xlu0 %v1692
      %v1730 = vpop.xlane.xlu0 %1729
      %1731 = vmax.xlane.f32.xlu0 %v1693
      %v1732 = vpop.xlane.xlu0 %1731
      %1733 = vmax.xlane.f32.xlu0 %v1694
      %v1734 = vpop.xlane.xlu0 %1733
      %1735 = vmax.xlane.f32.xlu0 %v1695
      %v1736 = vpop.xlane.xlu0 %1735
      %1737 = vmax.xlane.f32.xlu0 %v1696
      %v1738 = vpop.xlane.xlu0 %1737
      %1739 = vmax.xlane.f32.xlu0 %v1697
      %v1740 = vpop.xlane.xlu0 %1739
      %1741 = vmax.xlane.f32.xlu0 %v1698
      %v1742 = vpop.xlane.xlu0 %1741
      %1743 = vmax.xlane.f32.xlu0 %v1699
      %v1744 = vpop.xlane.xlu0 %1743
      %1745 = vmax.xlane.f32.xlu0 %v1700
      %v1746 = vpop.xlane.xlu0 %1745
      %1747 = vmax.xlane.f32.xlu0 %v1701
      %v1748 = vpop.xlane.xlu0 %1747
      %1749 = vmax.xlane.f32.xlu0 %v1702
      %v1750 = vpop.xlane.xlu0 %1749
      %1751 = vmax.xlane.f32.xlu0 %v1703
      %v1752 = vpop.xlane.xlu0 %1751
      %1753 = vmax.xlane.f32.xlu0 %v1704
      %v1754 = vpop.xlane.xlu0 %1753
      %1755 = vmax.xlane.f32.xlu0 %v1705
      %v1756 = vpop.xlane.xlu0 %1755
      %1757 = vmax.xlane.f32.xlu0 %v1706
      %v1758 = vpop.xlane.xlu0 %1757
      %1759 = vmax.xlane.f32.xlu0 %v1707
      %v1760 = vpop.xlane.xlu0 %1759
      %1761 = vmax.xlane.f32.xlu0 %v1708
      %v1762 = vpop.xlane.xlu0 %1761
      %1763 = vmax.xlane.f32.xlu0 %v1709
      %v1764 = vpop.xlane.xlu0 %1763
      %1765 = vmax.xlane.f32.xlu0 %v1710
      %v1766 = vpop.xlane.xlu0 %1765
      %1767 = vmax.xlane.f32.xlu0 %v1711
      %v1768 = vpop.xlane.xlu0 %1767
      %1769 = vmax.xlane.f32.xlu0 %v1712
      %v1770 = vpop.xlane.xlu0 %1769
      %1771 = vmax.xlane.f32.xlu0 %v1713
      %v1772 = vpop.xlane.xlu0 %1771
      %1773 = vmax.xlane.f32.xlu0 %v1714
      %v1774 = vpop.xlane.xlu0 %1773
      %1775 = vmax.xlane.f32.xlu0 %v1715
      %v1776 = vpop.xlane.xlu0 %1775
      %1777 = vmax.xlane.f32.xlu0 %v1716
      %v1778 = vpop.xlane.xlu0 %1777
      %1779 = vmax.xlane.f32.xlu0 %v1717
      %v1780 = vpop.xlane.xlu0 %1779
      %1781 = vmax.xlane.f32.xlu0 %v1718
      %v1782 = vpop.xlane.xlu0 %1781
      %v1783 = vsub.f32 %v1687, %v1720
      %v1784 = vsub.f32 %v1688, %v1722
      %v1785 = vsub.f32 %v1689, %v1724
      %v1786 = vsub.f32 %v1690, %v1726
      %v1787 = vsub.f32 %v1691, %v1728
      %v1788 = vsub.f32 %v1692, %v1730
      %v1789 = vsub.f32 %v1693, %v1732
      %v1790 = vsub.f32 %v1694, %v1734
      %v1791 = vsub.f32 %v1695, %v1736
      %v1792 = vsub.f32 %v1696, %v1738
      %v1793 = vsub.f32 %v1697, %v1740
      %v1794 = vsub.f32 %v1698, %v1742
      %v1795 = vsub.f32 %v1699, %v1744
      %v1796 = vsub.f32 %v1700, %v1746
      %v1797 = vsub.f32 %v1701, %v1748
      %v1798 = vsub.f32 %v1702, %v1750
      %v1799 = vsub.f32 %v1703, %v1752
      %v1800 = vsub.f32 %v1704, %v1754
      %v1801 = vsub.f32 %v1705, %v1756
      %v1802 = vsub.f32 %v1706, %v1758
      %v1803 = vsub.f32 %v1707, %v1760
      %v1804 = vsub.f32 %v1708, %v1762
      %v1805 = vsub.f32 %v1709, %v1764
      %v1806 = vsub.f32 %v1710, %v1766
      %v1807 = vsub.f32 %v1711, %v1768
      %v1808 = vsub.f32 %v1712, %v1770
      %v1809 = vsub.f32 %v1713, %v1772
      %v1810 = vsub.f32 %v1714, %v1774
      %v1811 = vsub.f32 %v1715, %v1776
      %v1812 = vsub.f32 %v1716, %v1778
      %v1813 = vsub.f32 %v1717, %v1780
      %v1814 = vsub.f32 %v1718, %v1782
      %v1815 = vmul.f32 %v1783, 1.442695
      %v1816 = vpow.pop %v1815
      %v1817 = vmul.f32 %v1784, 1.442695
      %v1818 = vpow.pop %v1817
      %v1819 = vmul.f32 %v1785, 1.442695
      %v1820 = vpow.pop %v1819
      %v1821 = vmul.f32 %v1786, 1.442695
      %v1822 = vpow.pop %v1821
      %v1823 = vmul.f32 %v1787, 1.442695
      %v1824 = vpow.pop %v1823
      %v1825 = vmul.f32 %v1788, 1.442695
      %v1826 = vpow.pop %v1825
      %v1827 = vmul.f32 %v1789, 1.442695
      %v1828 = vpow.pop %v1827
      %v1829 = vmul.f32 %v1790, 1.442695
      %v1830 = vpow.pop %v1829
      %v1831 = vmul.f32 %v1791, 1.442695
      %v1832 = vpow.pop %v1831
      %v1833 = vmul.f32 %v1792, 1.442695
      %v1834 = vpow.pop %v1833
      %v1835 = vmul.f32 %v1793, 1.442695
      %v1836 = vpow.pop %v1835
      %v1837 = vmul.f32 %v1794, 1.442695
      %v1838 = vpow.pop %v1837
      %v1839 = vmul.f32 %v1795, 1.442695
      %v1840 = vpow.pop %v1839
      %v1841 = vmul.f32 %v1796, 1.442695
      %v1842 = vpow.pop %v1841
      %v1843 = vmul.f32 %v1797, 1.442695
      %v1844 = vpow.pop %v1843
      %v1845 = vmul.f32 %v1798, 1.442695
      %v1846 = vpow.pop %v1845
      %v1847 = vmul.f32 %v1799, 1.442695
      %v1848 = vpow.pop %v1847
      %v1849 = vmul.f32 %v1800, 1.442695
      %v1850 = vpow.pop %v1849
      %v1851 = vmul.f32 %v1801, 1.442695
      %v1852 = vpow.pop %v1851
      %v1853 = vmul.f32 %v1802, 1.442695
      %v1854 = vpow.pop %v1853
      %v1855 = vmul.f32 %v1803, 1.442695
      %v1856 = vpow.pop %v1855
      %v1857 = vmul.f32 %v1804, 1.442695
      %v1858 = vpow.pop %v1857
      %v1859 = vmul.f32 %v1805, 1.442695
      %v1860 = vpow.pop %v1859
      %v1861 = vmul.f32 %v1806, 1.442695
      %v1862 = vpow.pop %v1861
      %v1863 = vmul.f32 %v1807, 1.442695
      %v1864 = vpow.pop %v1863
      %v1865 = vmul.f32 %v1808, 1.442695
      %v1866 = vpow.pop %v1865
      %v1867 = vmul.f32 %v1809, 1.442695
      %v1868 = vpow.pop %v1867
      %v1869 = vmul.f32 %v1810, 1.442695
      %v1870 = vpow.pop %v1869
      %v1871 = vmul.f32 %v1811, 1.442695
      %v1872 = vpow.pop %v1871
      %v1873 = vmul.f32 %v1812, 1.442695
      %v1874 = vpow.pop %v1873
      %v1875 = vmul.f32 %v1813, 1.442695
      %v1876 = vpow.pop %v1875
      %v1877 = vmul.f32 %v1814, 1.442695
      %v1878 = vpow.pop %v1877
      %1879 = vadd.xlane.f32.xlu0 %v1816
      %v1880 = vpop.xlane.xlu0 %1879
      %1881 = vadd.xlane.f32.xlu0 %v1818
      %v1882 = vpop.xlane.xlu0 %1881
      %1883 = vadd.xlane.f32.xlu0 %v1820
      %v1884 = vpop.xlane.xlu0 %1883
      %1885 = vadd.xlane.f32.xlu0 %v1822
      %v1886 = vpop.xlane.xlu0 %1885
      %1887 = vadd.xlane.f32.xlu0 %v1824
      %v1888 = vpop.xlane.xlu0 %1887
      %1889 = vadd.xlane.f32.xlu0 %v1826
      %v1890 = vpop.xlane.xlu0 %1889
      %1891 = vadd.xlane.f32.xlu0 %v1828
      %v1892 = vpop.xlane.xlu0 %1891
      %1893 = vadd.xlane.f32.xlu0 %v1830
      %v1894 = vpop.xlane.xlu0 %1893
      %1895 = vadd.xlane.f32.xlu0 %v1832
      %v1896 = vpop.xlane.xlu0 %1895
      %1897 = vadd.xlane.f32.xlu0 %v1834
      %v1898 = vpop.xlane.xlu0 %1897
      %1899 = vadd.xlane.f32.xlu0 %v1836
      %v1900 = vpop.xlane.xlu0 %1899
      %1901 = vadd.xlane.f32.xlu0 %v1838
      %v1902 = vpop.xlane.xlu0 %1901
      %1903 = vadd.xlane.f32.xlu0 %v1840
      %v1904 = vpop.xlane.xlu0 %1903
      %1905 = vadd.xlane.f32.xlu0 %v1842
      %v1906 = vpop.xlane.xlu0 %1905
      %1907 = vadd.xlane.f32.xlu0 %v1844
      %v1908 = vpop.xlane.xlu0 %1907
      %1909 = vadd.xlane.f32.xlu0 %v1846
      %v1910 = vpop.xlane.xlu0 %1909
      %1911 = vadd.xlane.f32.xlu0 %v1848
      %v1912 = vpop.xlane.xlu0 %1911
      %1913 = vadd.xlane.f32.xlu0 %v1850
      %v1914 = vpop.xlane.xlu0 %1913
      %1915 = vadd.xlane.f32.xlu0 %v1852
      %v1916 = vpop.xlane.xlu0 %1915
      %1917 = vadd.xlane.f32.xlu0 %v1854
      %v1918 = vpop.xlane.xlu0 %1917
      %1919 = vadd.xlane.f32.xlu0 %v1856
      %v1920 = vpop.xlane.xlu0 %1919
      %1921 = vadd.xlane.f32.xlu0 %v1858
      %v1922 = vpop.xlane.xlu0 %1921
      %1923 = vadd.xlane.f32.xlu0 %v1860
      %v1924 = vpop.xlane.xlu0 %1923
      %1925 = vadd.xlane.f32.xlu0 %v1862
      %v1926 = vpop.xlane.xlu0 %1925
      %1927 = vadd.xlane.f32.xlu0 %v1864
      %v1928 = vpop.xlane.xlu0 %1927
      %1929 = vadd.xlane.f32.xlu0 %v1866
      %v1930 = vpop.xlane.xlu0 %1929
      %1931 = vadd.xlane.f32.xlu0 %v1868
      %v1932 = vpop.xlane.xlu0 %1931
      %1933 = vadd.xlane.f32.xlu0 %v1870
      %v1934 = vpop.xlane.xlu0 %1933
      %1935 = vadd.xlane.f32.xlu0 %v1872
      %v1936 = vpop.xlane.xlu0 %1935
      %1937 = vadd.xlane.f32.xlu0 %v1874
      %v1938 = vpop.xlane.xlu0 %1937
      %1939 = vadd.xlane.f32.xlu0 %v1876
      %v1940 = vpop.xlane.xlu0 %1939
      %1941 = vadd.xlane.f32.xlu0 %v1878
      %v1942 = vpop.xlane.xlu0 %1941
      %v1943 = vrcp.pop %v1880
      %v1944 = vrcp.pop %v1882
      %v1945 = vrcp.pop %v1884
      %v1946 = vrcp.pop %v1886
      %v1947 = vrcp.pop %v1888
      %v1948 = vrcp.pop %v1890
      %v1949 = vrcp.pop %v1892
      %v1950 = vrcp.pop %v1894
      %v1951 = vrcp.pop %v1896
      %v1952 = vrcp.pop %v1898
      %v1953 = vrcp.pop %v1900
      %v1954 = vrcp.pop %v1902
      %v1955 = vrcp.pop %v1904
      %v1956 = vrcp.pop %v1906
      %v1957 = vrcp.pop %v1908
      %v1958 = vrcp.pop %v1910
      %v1959 = vrcp.pop %v1912
      %v1960 = vrcp.pop %v1914
      %v1961 = vrcp.pop %v1916
      %v1962 = vrcp.pop %v1918
      %v1963 = vrcp.pop %v1920
      %v1964 = vrcp.pop %v1922
      %v1965 = vrcp.pop %v1924
      %v1966 = vrcp.pop %v1926
      %v1967 = vrcp.pop %v1928
      %v1968 = vrcp.pop %v1930
      %v1969 = vrcp.pop %v1932
      %v1970 = vrcp.pop %v1934
      %v1971 = vrcp.pop %v1936
      %v1972 = vrcp.pop %v1938
      %v1973 = vrcp.pop %v1940
      %v1974 = vrcp.pop %v1942
      %v1975 = vmul.f32 %v1816, %v1943
      %v1976 = vmul.f32 %v1818, %v1944
      %v1977 = vmul.f32 %v1820, %v1945
      %v1978 = vmul.f32 %v1822, %v1946
      %v1979 = vmul.f32 %v1824, %v1947
      %v1980 = vmul.f32 %v1826, %v1948
      %v1981 = vmul.f32 %v1828, %v1949
      %v1982 = vmul.f32 %v1830, %v1950
      %v1983 = vmul.f32 %v1832, %v1951
      %v1984 = vmul.f32 %v1834, %v1952
      %v1985 = vmul.f32 %v1836, %v1953
      %v1986 = vmul.f32 %v1838, %v1954
      %v1987 = vmul.f32 %v1840, %v1955
      %v1988 = vmul.f32 %v1842, %v1956
      %v1989 = vmul.f32 %v1844, %v1957
      %v1990 = vmul.f32 %v1846, %v1958
      %v1991 = vmul.f32 %v1848, %v1959
      %v1992 = vmul.f32 %v1850, %v1960
      %v1993 = vmul.f32 %v1852, %v1961
      %v1994 = vmul.f32 %v1854, %v1962
      %v1995 = vmul.f32 %v1856, %v1963
      %v1996 = vmul.f32 %v1858, %v1964
      %v1997 = vmul.f32 %v1860, %v1965
      %v1998 = vmul.f32 %v1862, %v1966
      %v1999 = vmul.f32 %v1864, %v1967
      %v2000 = vmul.f32 %v1866, %v1968
      %v2001 = vmul.f32 %v1868, %v1969
      %v2002 = vmul.f32 %v1870, %v1970
      %v2003 = vmul.f32 %v1872, %v1971
      %v2004 = vmul.f32 %v1874, %v1972
      %v2005 = vmul.f32 %v1876, %v1973
      %v2006 = vmul.f32 %v1878, %v1974
      %v2007 = vpack.c.bf16 %v1976, %v1975
      %v2008 = vpack.c.bf16 %v1978, %v1977
      %v2009 = vpack.c.bf16 %v1980, %v1979
      %v2010 = vpack.c.bf16 %v1982, %v1981
      %v2011 = vpack.c.bf16 %v1984, %v1983
      %v2012 = vpack.c.bf16 %v1986, %v1985
      %v2013 = vpack.c.bf16 %v1988, %v1987
      %v2014 = vpack.c.bf16 %v1990, %v1989
      %v2015 = vpack.c.bf16 %v1992, %v1991
      %v2016 = vpack.c.bf16 %v1994, %v1993
      %v2017 = vpack.c.bf16 %v1996, %v1995
      %v2018 = vpack.c.bf16 %v1998, %v1997
      %v2019 = vpack.c.bf16 %v2000, %v1999
      %v2020 = vpack.c.bf16 %v2002, %v2001
      %v2021 = vpack.c.bf16 %v2004, %v2003
      %v2022 = vpack.c.bf16 %v2006, %v2005
      %s2023 = scalar_lea.vmem %s243, 64
      %v2024 = vld [vmem:[%s2023] sm:$0xf]
      %v2025 = vld [vmem:[%s2023 + $0x4] sm:$0xf]
      %v2026 = vld [vmem:[%s2023 + $0x8] sm:$0xf]
      %v2027 = vld [vmem:[%s2023 + $0xc] sm:$0xf]
      %v2028 = vld [vmem:[%s2023 + $0x10] sm:$0xf]
      %v2029 = vld [vmem:[%s2023 + $0x14] sm:$0xf]
      %v2030 = vld [vmem:[%s2023 + $0x18] sm:$0xf]
      %v2031 = vld [vmem:[%s2023 + $0x1c] sm:$0xf]
      %v2032 = vld [vmem:[%s2023 + $0x20] sm:$0xf]
      %v2033 = vld [vmem:[%s2023 + $0x24] sm:$0xf]
      %v2034 = vld [vmem:[%s2023 + $0x28] sm:$0xf]
      %v2035 = vld [vmem:[%s2023 + $0x2c] sm:$0xf]
      %v2036 = vld [vmem:[%s2023 + $0x30] sm:$0xf]
      %v2037 = vld [vmem:[%s2023 + $0x34] sm:$0xf]
      %v2038 = vld [vmem:[%s2023 + $0x38] sm:$0xf]
      %v2039 = vld [vmem:[%s2023 + $0x3c] sm:$0xf]
      %v2056 = vunpack.c.l.b16 %v2024
      %v2057 = vunpack.c.l.b16 %v2025
      %v2058 = vunpack.c.l.b16 %v2026
      %v2059 = vunpack.c.l.b16 %v2027
      %v2060 = vunpack.c.l.b16 %v2028
      %v2061 = vunpack.c.l.b16 %v2029
      %v2062 = vunpack.c.l.b16 %v2030
      %v2063 = vunpack.c.l.b16 %v2031
      %v2064 = vunpack.c.l.b16 %v2032
      %v2065 = vunpack.c.l.b16 %v2033
      %v2066 = vunpack.c.l.b16 %v2034
      %v2067 = vunpack.c.l.b16 %v2035
      %v2068 = vunpack.c.l.b16 %v2036
      %v2069 = vunpack.c.l.b16 %v2037
      %v2070 = vunpack.c.l.b16 %v2038
      %v2071 = vunpack.c.l.b16 %v2039
      %v2072 = vpack.c.b16 %v2057, %v2056
      %v2073 = vpack.c.b16 %v2059, %v2058
      %v2074 = vpack.c.b16 %v2061, %v2060
      %v2075 = vpack.c.b16 %v2063, %v2062
      %v2076 = vpack.c.b16 %v2065, %v2064
      %v2077 = vpack.c.b16 %v2067, %v2066
      %v2078 = vpack.c.b16 %v2069, %v2068
      %v2079 = vpack.c.b16 %v2071, %v2070
      %2088 = vmatprep.subr.bf16.mxu0 0
      %2089 = vmatpush1.bf16.msra.mxu0 %v2072
      %2090 = vmatprep.subr.bf16.mxu0 0
      %2091 = vmatpush1.bf16.msra.mxu0 %v2073
      %2092 = vmatprep.subr.bf16.mxu0 0
      %2093 = vmatpush1.bf16.msra.mxu0 %v2074
      %2094 = vmatprep.subr.bf16.mxu0 0
      %2095 = vmatpush1.bf16.msra.mxu0 %v2075
      %2096 = vmatprep.subr.bf16.mxu0 0
      %2097 = vmatpush1.bf16.msra.mxu0 %v2076
      %2098 = vmatprep.subr.bf16.mxu0 0
      %2099 = vmatpush1.bf16.msra.mxu0 %v2077
      %2100 = vmatprep.subr.bf16.mxu0 0
      %2101 = vmatpush1.bf16.msra.mxu0 %v2078
      %2102 = vmatprep.subr.bf16.mxu0 0
      %2103 = vmatpush1.bf16.msra.mxu0 %v2079
      %2104 = vmatprep.subr.bf16.mxu0 0
      %2105 = vmatpush1.bf16.msra.mxu0 0
      %2106 = vmatprep.subr.bf16.mxu0 0
      %2107 = vmatpush1.bf16.msra.mxu0 0
      %2108 = vmatprep.subr.bf16.mxu0 0
      %2109 = vmatpush1.bf16.msra.mxu0 0
      %2110 = vmatprep.subr.bf16.mxu0 0
      %2111 = vmatpush1.bf16.msra.mxu0 0
      %2112 = vmatprep.subr.bf16.mxu0 0
      %2113 = vmatpush1.bf16.msra.mxu0 0
      %2114 = vmatprep.subr.bf16.mxu0 0
      %2115 = vmatpush1.bf16.msra.mxu0 0
      %2116 = vmatprep.subr.bf16.mxu0 0
      %2117 = vmatpush1.bf16.msra.mxu0 0
      %2118 = vmatprep.subr.bf16.mxu0 0
      %2119 = vmatpush1.bf16.msra.mxu0 0
      %2120 = vmatprep.mubr.bf16.mxu0 0
      %2121 = vmatmul.mubr.bf16.gmra.mrb[0].mxu0 %v2007
      %v2122 = vpop.f32.mrb[0].mxu0
      %v2123 = vadd.f32 0.0, %v2122
      %v2124 = vpop.f32.mrb[0].mxu0
      %v2125 = vpop.f32.mrb[0].mxu0
      %v2126 = vadd.f32 0.0, %v2125
      %v2127 = vpop.f32.mrb[0].mxu0
      %2128 = vmatprep.mubr.bf16.mxu0 0
      %2129 = vmatmul.mubr.bf16.gmra.mrb[0].mxu0 %v2008
      %v2130 = vpop.f32.mrb[0].mxu0
      %v2131 = vadd.f32 0.0, %v2130
      %v2132 = vpop.f32.mrb[0].mxu0
      %v2133 = vpop.f32.mrb[0].mxu0
      %v2134 = vadd.f32 0.0, %v2133
      %v2135 = vpop.f32.mrb[0].mxu0
      %2136 = vmatprep.mubr.bf16.mxu0 0
      %2137 = vmatmul.mubr.bf16.gmra.mrb[0].mxu0 %v2009
      %v2138 = vpop.f32.mrb[0].mxu0
      %v2139 = vadd.f32 0.0, %v2138
      %v2140 = vpop.f32.mrb[0].mxu0
      %v2141 = vpop.f32.mrb[0].mxu0
      %v2142 = vadd.f32 0.0, %v2141
      %v2143 = vpop.f32.mrb[0].mxu0
      %2144 = vmatprep.mubr.bf16.mxu0 0
      %2145 = vmatmul.mubr.bf16.gmra.mrb[0].mxu0 %v2010
      %v2146 = vpop.f32.mrb[0].mxu0
      %v2147 = vadd.f32 0.0, %v2146
      %v2148 = vpop.f32.mrb[0].mxu0
      %v2149 = vpop.f32.mrb[0].mxu0
      %v2150 = vadd.f32 0.0, %v2149
      %v2151 = vpop.f32.mrb[0].mxu0
      %2152 = vmatprep.mubr.bf16.mxu0 0
      %2153 = vmatmul.mubr.bf16.gmra.mrb[0].mxu0 %v2011
      %v2154 = vpop.f32.mrb[0].mxu0
      %v2155 = vadd.f32 0.0, %v2154
      %v2156 = vpop.f32.mrb[0].mxu0
      %v2157 = vpop.f32.mrb[0].mxu0
      %v2158 = vadd.f32 0.0, %v2157
      %v2159 = vpop.f32.mrb[0].mxu0
      %2160 = vmatprep.mubr.bf16.mxu0 0
      %2161 = vmatmul.mubr.bf16.gmra.mrb[0].mxu0 %v2012
      %v2162 = vpop.f32.mrb[0].mxu0
      %v2163 = vadd.f32 0.0, %v2162
      %v2164 = vpop.f32.mrb[0].mxu0
      %v2165 = vpop.f32.mrb[0].mxu0
      %v2166 = vadd.f32 0.0, %v2165
      %v2167 = vpop.f32.mrb[0].mxu0
      %2168 = vmatprep.mubr.bf16.mxu0 0
      %2169 = vmatmul.mubr.bf16.gmra.mrb[0].mxu0 %v2013
      %v2170 = vpop.f32.mrb[0].mxu0
      %v2171 = vadd.f32 0.0, %v2170
      %v2172 = vpop.f32.mrb[0].mxu0
      %v2173 = vpop.f32.mrb[0].mxu0
      %v2174 = vadd.f32 0.0, %v2173
      %v2175 = vpop.f32.mrb[0].mxu0
      %2176 = vmatprep.mubr.bf16.mxu0 0
      %2177 = vmatmul.mubr.bf16.gmra.mrb[0].mxu0 %v2014
      %v2178 = vpop.f32.mrb[0].mxu0
      %v2179 = vadd.f32 0.0, %v2178
      %v2180 = vpop.f32.mrb[0].mxu0
      %v2181 = vpop.f32.mrb[0].mxu0
      %v2182 = vadd.f32 0.0, %v2181
      %v2183 = vpop.f32.mrb[0].mxu0
      %2184 = vmatprep.mubr.bf16.mxu0 0
      %2185 = vmatmul.mubr.bf16.gmra.mrb[0].mxu0 %v2015
      %v2186 = vpop.f32.mrb[0].mxu0
      %v2187 = vadd.f32 0.0, %v2186
      %v2188 = vpop.f32.mrb[0].mxu0
      %v2189 = vpop.f32.mrb[0].mxu0
      %v2190 = vadd.f32 0.0, %v2189
      %v2191 = vpop.f32.mrb[0].mxu0
      %2192 = vmatprep.mubr.bf16.mxu0 0
      %2193 = vmatmul.mubr.bf16.gmra.mrb[0].mxu0 %v2016
      %v2194 = vpop.f32.mrb[0].mxu0
      %v2195 = vadd.f32 0.0, %v2194
      %v2196 = vpop.f32.mrb[0].mxu0
      %v2197 = vpop.f32.mrb[0].mxu0
      %v2198 = vadd.f32 0.0, %v2197
      %v2199 = vpop.f32.mrb[0].mxu0
      %2200 = vmatprep.mubr.bf16.mxu0 0
      %2201 = vmatmul.mubr.bf16.gmra.mrb[0].mxu0 %v2017
      %v2202 = vpop.f32.mrb[0].mxu0
      %v2203 = vadd.f32 0.0, %v2202
      %v2204 = vpop.f32.mrb[0].mxu0
      %v2205 = vpop.f32.mrb[0].mxu0
      %v2206 = vadd.f32 0.0, %v2205
      %v2207 = vpop.f32.mrb[0].mxu0
      %2208 = vmatprep.mubr.bf16.mxu0 0
      %2209 = vmatmul.mubr.bf16.gmra.mrb[0].mxu0 %v2018
      %v2210 = vpop.f32.mrb[0].mxu0
      %v2211 = vadd.f32 0.0, %v2210
      %v2212 = vpop.f32.mrb[0].mxu0
      %v2213 = vpop.f32.mrb[0].mxu0
      %v2214 = vadd.f32 0.0, %v2213
      %v2215 = vpop.f32.mrb[0].mxu0
      %2216 = vmatprep.mubr.bf16.mxu0 0
      %2217 = vmatmul.mubr.bf16.gmra.mrb[0].mxu0 %v2019
      %v2218 = vpop.f32.mrb[0].mxu0
      %v2219 = vadd.f32 0.0, %v2218
      %v2220 = vpop.f32.mrb[0].mxu0
      %v2221 = vpop.f32.mrb[0].mxu0
      %v2222 = vadd.f32 0.0, %v2221
      %v2223 = vpop.f32.mrb[0].mxu0
      %2224 = vmatprep.mubr.bf16.mxu0 0
      %2225 = vmatmul.mubr.bf16.gmra.mrb[0].mxu0 %v2020
      %v2226 = vpop.f32.mrb[0].mxu0
      %v2227 = vadd.f32 0.0, %v2226
      %v2228 = vpop.f32.mrb[0].mxu0
      %v2229 = vpop.f32.mrb[0].mxu0
      %v2230 = vadd.f32 0.0, %v2229
      %v2231 = vpop.f32.mrb[0].mxu0
      %2232 = vmatprep.mubr.bf16.mxu0 0
      %2233 = vmatmul.mubr.bf16.gmra.mrb[0].mxu0 %v2021
      %v2234 = vpop.f32.mrb[0].mxu0
      %v2235 = vadd.f32 0.0, %v2234
      %v2236 = vpop.f32.mrb[0].mxu0
      %v2237 = vpop.f32.mrb[0].mxu0
      %v2238 = vadd.f32 0.0, %v2237
      %v2239 = vpop.f32.mrb[0].mxu0
      %2240 = vmatprep.mubr.bf16.mxu0 0
      %2241 = vmatmul.mubr.bf16.gmra.mrb[0].mxu0 %v2022
      %v2242 = vpop.f32.mrb[0].mxu0
      %v2243 = vadd.f32 0.0, %v2242
      %v2244 = vpop.f32.mrb[0].mxu0
      %v2245 = vpop.f32.mrb[0].mxu0
      %v2246 = vadd.f32 0.0, %v2245
      %v2247 = vpop.f32.mrb[0].mxu0
      %2248 = vdwg.mxu0
      %v2249 = vpack.c.bf16 %v2126, %v2123
      %v2250 = vpack.c.bf16 %v2134, %v2131
      %v2251 = vpack.c.bf16 %v2142, %v2139
      %v2252 = vpack.c.bf16 %v2150, %v2147
      %v2253 = vpack.c.bf16 %v2158, %v2155
      %v2254 = vpack.c.bf16 %v2166, %v2163
      %v2255 = vpack.c.bf16 %v2174, %v2171
      %v2256 = vpack.c.bf16 %v2182, %v2179
      %v2257 = vpack.c.bf16 %v2190, %v2187
      %v2258 = vpack.c.bf16 %v2198, %v2195
      %v2259 = vpack.c.bf16 %v2206, %v2203
      %v2260 = vpack.c.bf16 %v2214, %v2211
      %v2261 = vpack.c.bf16 %v2222, %v2219
      %v2262 = vpack.c.bf16 %v2230, %v2227
      %v2263 = vpack.c.bf16 %v2238, %v2235
      %v2264 = vpack.c.bf16 %v2246, %v2243
      %v2281 = vunpack.c.l.b16 %v2249
      %v2282 = vunpack.c.h.b16 %v2249
      %v2283 = vunpack.c.l.b16 %v2250
      %v2284 = vunpack.c.h.b16 %v2250
      %v2285 = vunpack.c.l.b16 %v2251
      %v2286 = vunpack.c.h.b16 %v2251
      %v2287 = vunpack.c.l.b16 %v2252
      %v2288 = vunpack.c.h.b16 %v2252
      %v2289 = vunpack.c.l.b16 %v2253
      %v2290 = vunpack.c.h.b16 %v2253
      %v2291 = vunpack.c.l.b16 %v2254
      %v2292 = vunpack.c.h.b16 %v2254
      %v2293 = vunpack.c.l.b16 %v2255
      %v2294 = vunpack.c.h.b16 %v2255
      %v2295 = vunpack.c.l.b16 %v2256
      %v2296 = vunpack.c.h.b16 %v2256
      %v2297 = vunpack.c.l.b16 %v2257
      %v2298 = vunpack.c.h.b16 %v2257
      %v2299 = vunpack.c.l.b16 %v2258
      %v2300 = vunpack.c.h.b16 %v2258
      %v2301 = vunpack.c.l.b16 %v2259
      %v2302 = vunpack.c.h.b16 %v2259
      %v2303 = vunpack.c.l.b16 %v2260
      %v2304 = vunpack.c.h.b16 %v2260
      %v2305 = vunpack.c.l.b16 %v2261
      %v2306 = vunpack.c.h.b16 %v2261
      %v2307 = vunpack.c.l.b16 %v2262
      %v2308 = vunpack.c.h.b16 %v2262
      %v2309 = vunpack.c.l.b16 %v2263
      %v2310 = vunpack.c.h.b16 %v2263
      %v2311 = vunpack.c.l.b16 %v2264
      %v2312 = vunpack.c.h.b16 %v2264
      %v2313 = vpack.c.b16 %v2281, %v2281
      %v2314 = vpack.c.b16 %v2282, %v2282
      %v2315 = vpack.c.b16 %v2283, %v2283
      %v2316 = vpack.c.b16 %v2284, %v2284
      %v2317 = vpack.c.b16 %v2285, %v2285
      %v2318 = vpack.c.b16 %v2286, %v2286
      %v2319 = vpack.c.b16 %v2287, %v2287
      %v2320 = vpack.c.b16 %v2288, %v2288
      %v2321 = vpack.c.b16 %v2289, %v2289
      %v2322 = vpack.c.b16 %v2290, %v2290
      %v2323 = vpack.c.b16 %v2291, %v2291
      %v2324 = vpack.c.b16 %v2292, %v2292
      %v2325 = vpack.c.b16 %v2293, %v2293
      %v2326 = vpack.c.b16 %v2294, %v2294
      %v2327 = vpack.c.b16 %v2295, %v2295
      %v2328 = vpack.c.b16 %v2296, %v2296
      %v2329 = vpack.c.b16 %v2297, %v2297
      %v2330 = vpack.c.b16 %v2298, %v2298
      %v2331 = vpack.c.b16 %v2299, %v2299
      %v2332 = vpack.c.b16 %v2300, %v2300
      %v2333 = vpack.c.b16 %v2301, %v2301
      %v2334 = vpack.c.b16 %v2302, %v2302
      %v2335 = vpack.c.b16 %v2303, %v2303
      %v2336 = vpack.c.b16 %v2304, %v2304
      %v2337 = vpack.c.b16 %v2305, %v2305
      %v2338 = vpack.c.b16 %v2306, %v2306
      %v2339 = vpack.c.b16 %v2307, %v2307
      %v2340 = vpack.c.b16 %v2308, %v2308
      %v2341 = vpack.c.b16 %v2309, %v2309
      %v2342 = vpack.c.b16 %v2310, %v2310
      %v2343 = vpack.c.b16 %v2311, %v2311
      %v2344 = vpack.c.b16 %v2312, %v2312
      %2377 = vst [vmem:[%s253 + $0x4] sm:$0xf] %v2313
      %2378 = vst [vmem:[%s253 + $0xc] sm:$0xf] %v2314
      %2379 = vst [vmem:[%s253 + $0x14] sm:$0xf] %v2315
      %2380 = vst [vmem:[%s253 + $0x1c] sm:$0xf] %v2316
      %2381 = vst [vmem:[%s253 + $0x24] sm:$0xf] %v2317
      %2382 = vst [vmem:[%s253 + $0x2c] sm:$0xf] %v2318
      %2383 = vst [vmem:[%s253 + $0x34] sm:$0xf] %v2319
      %2384 = vst [vmem:[%s253 + $0x3c] sm:$0xf] %v2320
      %2385 = vst [vmem:[%s253 + $0x44] sm:$0xf] %v2321
      %2386 = vst [vmem:[%s253 + $0x4c] sm:$0xf] %v2322
      %2387 = vst [vmem:[%s253 + $0x54] sm:$0xf] %v2323
      %2388 = vst [vmem:[%s253 + $0x5c] sm:$0xf] %v2324
      %2389 = vst [vmem:[%s253 + $0x64] sm:$0xf] %v2325
      %2390 = vst [vmem:[%s253 + $0x6c] sm:$0xf] %v2326
      %2391 = vst [vmem:[%s253 + $0x74] sm:$0xf] %v2327
      %2392 = vst [vmem:[%s253 + $0x7c] sm:$0xf] %v2328
      %2393 = vst [vmem:[%s253 + $0x84] sm:$0xf] %v2329
      %2394 = vst [vmem:[%s253 + $0x8c] sm:$0xf] %v2330
      %2395 = vst [vmem:[%s253 + $0x94] sm:$0xf] %v2331
      %2396 = vst [vmem:[%s253 + $0x9c] sm:$0xf] %v2332
      %2397 = vst [vmem:[%s253 + $0xa4] sm:$0xf] %v2333
      %2398 = vst [vmem:[%s253 + $0xac] sm:$0xf] %v2334
      %2399 = vst [vmem:[%s253 + $0xb4] sm:$0xf] %v2335
      %2400 = vst [vmem:[%s253 + $0xbc] sm:$0xf] %v2336
      %2401 = vst [vmem:[%s253 + $0xc4] sm:$0xf] %v2337
      %2402 = vst [vmem:[%s253 + $0xcc] sm:$0xf] %v2338
      %2403 = vst [vmem:[%s253 + $0xd4] sm:$0xf] %v2339
      %2404 = vst [vmem:[%s253 + $0xdc] sm:$0xf] %v2340
      %2405 = vst [vmem:[%s253 + $0xe4] sm:$0xf] %v2341
      %2406 = vst [vmem:[%s253 + $0xec] sm:$0xf] %v2342
      %2407 = vst [vmem:[%s253 + $0xf4] sm:$0xf] %v2343
      %2408 = vst [vmem:[%s253 + $0xfc] sm:$0xf] %v2344
      %s2409 = smul.u32 32, %s19
      %p2410 = scmp.lt.s32.totalorder %s18, 1
      %s2411 = scalar_select %p2410, %s18, 1
      %p2412 = scmp.lt.s32.totalorder %s2409, 31
      %s2413 = scalar_select %p2412, %s2409, 31
      %s2414 = smul.addr %s2413, 2
      %s2415 = smul.addr %s2411, 64
      %s2416 = sadd.s32 %s2414, %s2415
      %s2417 = smul.addr %s2416, 4
      %s2418 = scalar_lea.vmem %s3, %s2417
      // Predicated region
      $region33: #{e_mhsa_forward.4} parent=31 // pred_check
        %p2419 = pneg %p126
      $region34: #{e_mhsa_forward.4} parent=31 // pred_check_branch
        %2421 = sbr.rel (%p2419) target = $region36
      $region35: #{e_mhsa_forward.4} parent=31 // pred_region
        %s2422 = smul.u32 32, %s19
      $region36: #{e_mhsa_forward.4} parent=31 // pred_fallthru
        _
    $region32: #{e_mhsa_forward.4} parent=5 // pred_fallthru
      _
    %p2423 = scmp.le.s32.totalorder 2, %s9
    // Predicated region
    $region37: #{e_mhsa_forward.4} parent=5 // pred_check
      %p2424 = pneg %p2423
    $region38: #{e_mhsa_forward.4} parent=5 // pred_check_branch
      %2426 = sbr.rel (%p2424) target = $region40
    $region39: #{e_mhsa_forward.4} parent=5 // pred_region
      %s2427 = ssub.s32 %s9, 2
      // Predicated region
      $region41: #{e_mhsa_forward.4} parent=39 // pred_check
        %p2428 = pneg %p132
      $region42: #{e_mhsa_forward.4} parent=39 // pred_check_branch
        %2430 = sbr.rel (%p2428) target = $region44
      $region43: #{e_mhsa_forward.4} parent=39 // pred_region
        %s2431 = smul.u32 32, %s21
        %p2432 = scmp.lt.s32.totalorder %s20, 1
        %s2433 = scalar_select %p2432, %s20, 1
        %p2434 = scmp.lt.s32.totalorder %s2431, 31
        %s2435 = scalar_select %p2434, %s2431, 31
        %s2436 = smul.addr %s2435, 2
        %s2437 = smul.addr %s2433, 64
        %s2438 = sadd.s32 %s2436, %s2437
        %s2439 = smul.addr %s2438, 4
        %s2440 = scalar_lea.vmem %s3, %s2439
      $region44: #{e_mhsa_forward.4} parent=39 // pred_fallthru
        _
    $region40: #{e_mhsa_forward.4} parent=5 // pred_fallthru
      _
  $region6: #{e_mhsa_forward.4} parent=0 // loop_footer
    %s13 = sadd.s32 1, %s9
  $region7: #{e_mhsa_forward.4} parent=0 // loop_footer_branch
    %8 = sbr.rel target = $region3
  $region8: #{e_mhsa_forward.4} parent=0 // loop_exit
    _

// kernel: e_mhsa_forward.5
$region0: #{e_mhsa_forward.5}
  #allocation0 [shape = 'u32[]', space=smem, size = 0x4, offset = 0x4, fixed_abs, tag = 'smem constant byte address 0x4 - core index']
  #allocation1 [shape = 'u32[144,128]{1,0:T(1,128)}', space=vmem, size = 0x12000, scoped, tag = 'internal scratch']
  %s0 = inlined_call_operand.vmem [shape: bf16[2,256,256], index: 0, kind: input, shape index: {}]
  %s1 = inlined_call_operand.vmem [shape: bf16[256,96], index: 1, kind: input, shape index: {}]
  %s2 = inlined_call_operand.vmem [shape: f32[1,96], index: 2, kind: input, shape index: {}]
  %s3 = inlined_call_operand.vmem [shape: f32[2,256,96], index: 3, kind: input, shape index: {}]
  %s4 = inlined_call_operand.vmem [shape: f32[256,96], index: 4, kind: input, shape index: {}]
  %s5 = inlined_call_operand.vmem [shape: f32[256,96], index: 5, kind: input, shape index: {}]
  %s6 = inlined_call_operand.vmem [shape: f32[2,256,96], index: 6, kind: output, shape index: {}]
  %s7 = sld [smem:[#allocation0]]
  $region57: #{e_mhsa_forward.5} parent=0
    _
  %s9 = ssub.s32 1, %s7
  %s10 = scalar_select 0, %s9, %s7
  loop: start=0, step=1, limit=4
  $region2: #{e_mhsa_forward.5} parent=0 // loop_pre_header
    _
  $region3: #{e_mhsa_forward.5} parent=0 // loop_header
    %s12 = sphi 0, %s16
    %p13 = scmp.ge.s32.totalorder %s12, 4
    %s19 = sphi 0, %s31
    %s20 = sphi 0, %s27
    %s21 = sphi 0, %s19
    %s22 = sphi 0, %s20
    %s23 = sphi 0, %s21
    %s24 = sphi 0, %s22
    %s36 = sphi 0, %s38
    %s39 = sphi 0, %s36
    %s40 = sphi 0, %s39
    %s56 = sphi 0, %s40
    %s60 = sphi 0, %s60
    %s62 = sphi 0, %s60
    %s63 = sphi 0, %s62
    %s77 = sphi 0, %s63
    %s81 = sphi 0, %s81
    %s83 = sphi 0, %s81
    %s84 = sphi 0, %s83
    %s98 = sphi 0, %s84
    %s106 = sphi 0, %s108
    %s109 = sphi 0, %s106
    %s110 = sphi 0, %s109
    %s126 = sphi 0, %s110
    %s132 = sphi 0, %s134
    %s135 = sphi 0, %s132
    %s136 = sphi 0, %s135
    %s152 = sphi 0, %s136
    %s158 = sphi 0, %s160
    %s161 = sphi 0, %s158
    %s162 = sphi 0, %s161
    %s178 = sphi 0, %s162
    %s186 = sphi 0, %s188
    %s189 = sphi 0, %s186
    %s190 = sphi 0, %s189
    %s206 = sphi 0, %s190
  $region4: #{e_mhsa_forward.5} parent=0 // loop_header_branch
    %15 = sbr.rel (%p13) target = $region8
  $region5: #{e_mhsa_forward.5} parent=0 // loop_body
    %s17 = ssub.s32 %s12, 1
    %s18 = ssub.s32 %s12, 2
    %s25 = sadd.s32 1, %s20
    %p26 = scmp.ge.s32.totalorder %s25, 1
    %s27 = scalar_select %p26, 0, %s25
    %s28 = sadd.s32 1, %s19
    %s29 = scalar_select %p26, %s28, %s19
    %p30 = scmp.ge.s32.totalorder %s29, 2
    %s31 = scalar_select %p30, 0, %s29
    %s32 = ssub.s32 %s19, %s31
    %s33 = ssub.s32 %s20, %s27
    %s34 = sor.u32 %s32, %s33
    %p35 = scmp.eq.s32.totalorder %s34, 0
    %s37 = sadd.s32 %s36, 1
    %s38 = scalar_select %p35, %s36, %s37
    %p41 = pneg %p35
    %p42 = scmp.eq.s32.totalorder %s12, 1
    %p43 = por %p41, %p42
    %p44 = scmp.ne.s32.totalorder %s36, %s39
    %p45 = scmp.eq.s32.totalorder %s12, 0
    %p46 = por %p44, %p45
    %p47 = scmp.ne.s32.totalorder %s36, %s39
    %p48 = scmp.eq.s32.totalorder %s17, 1
    %p49 = por %p47, %p48
    %p50 = scmp.ne.s32.totalorder %s39, %s40
    %p51 = scmp.eq.s32.totalorder %s17, 0
    %p52 = por %p50, %p51
    %p53 = scmp.ne.s32.totalorder %s39, %s40
    %p54 = scmp.eq.s32.totalorder %s18, 1
    %p55 = por %p53, %p54
    %p57 = scmp.ne.s32.totalorder %s40, %s56
    %p58 = scmp.eq.s32.totalorder %s18, 0
    %p59 = por %p57, %p58
    %s61 = sadd.s32 %s60, 1
    %p64 = scmp.eq.s32.totalorder %s12, 1
    %p65 = scmp.ne.s32.totalorder %s60, %s62
    %p66 = scmp.eq.s32.totalorder %s12, 0
    %p67 = por %p65, %p66
    %p68 = scmp.ne.s32.totalorder %s60, %s62
    %p69 = scmp.eq.s32.totalorder %s17, 1
    %p70 = por %p68, %p69
    %p71 = scmp.ne.s32.totalorder %s62, %s63
    %p72 = scmp.eq.s32.totalorder %s17, 0
    %p73 = por %p71, %p72
    %p74 = scmp.ne.s32.totalorder %s62, %s63
    %p75 = scmp.eq.s32.totalorder %s18, 1
    %p76 = por %p74, %p75
    %p78 = scmp.ne.s32.totalorder %s63, %s77
    %p79 = scmp.eq.s32.totalorder %s18, 0
    %p80 = por %p78, %p79
    %s82 = sadd.s32 %s81, 1
    %p85 = scmp.eq.s32.totalorder %s12, 1
    %p86 = scmp.ne.s32.totalorder %s81, %s83
    %p87 = scmp.eq.s32.totalorder %s12, 0
    %p88 = por %p86, %p87
    %p89 = scmp.ne.s32.totalorder %s81, %s83
    %p90 = scmp.eq.s32.totalorder %s17, 1
    %p91 = por %p89, %p90
    %p92 = scmp.ne.s32.totalorder %s83, %s84
    %p93 = scmp.eq.s32.totalorder %s17, 0
    %p94 = por %p92, %p93
    %p95 = scmp.ne.s32.totalorder %s83, %s84
    %p96 = scmp.eq.s32.totalorder %s18, 1
    %p97 = por %p95, %p96
    %p99 = scmp.ne.s32.totalorder %s84, %s98
    %p100 = scmp.eq.s32.totalorder %s18, 0
    %p101 = por %p99, %p100
    %s102 = ssub.s32 %s19, %s31
    %s103 = ssub.s32 %s20, %s27
    %s104 = sor.u32 %s102, %s103
    %p105 = scmp.eq.s32.totalorder %s104, 0
    %s107 = sadd.s32 %s106, 1
    %s108 = scalar_select %p105, %s106, %s107
    %p111 = pneg %p105
    %p112 = scmp.eq.s32.totalorder %s12, 1
    %p113 = por %p111, %p112
    %p114 = scmp.ne.s32.totalorder %s106, %s109
    %p115 = scmp.eq.s32.totalorder %s12, 0
    %p116 = por %p114, %p115
    %p117 = scmp.ne.s32.totalorder %s106, %s109
    %p118 = scmp.eq.s32.totalorder %s17, 1
    %p119 = por %p117, %p118
    %p120 = scmp.ne.s32.totalorder %s109, %s110
    %p121 = scmp.eq.s32.totalorder %s17, 0
    %p122 = por %p120, %p121
    %p123 = scmp.ne.s32.totalorder %s109, %s110
    %p124 = scmp.eq.s32.totalorder %s18, 1
    %p125 = por %p123, %p124
    %p127 = scmp.ne.s32.totalorder %s110, %s126
    %p128 = scmp.eq.s32.totalorder %s18, 0
    %p129 = por %p127, %p128
    %s130 = ssub.s32 %s20, %s27
    %p131 = scmp.eq.s32.totalorder %s130, 0
    %s133 = sadd.s32 %s132, 1
    %s134 = scalar_select %p131, %s132, %s133
    %p137 = pneg %p131
    %p138 = scmp.eq.s32.totalorder %s12, 1
    %p139 = por %p137, %p138
    %p140 = scmp.ne.s32.totalorder %s132, %s135
    %p141 = scmp.eq.s32.totalorder %s12, 0
    %p142 = por %p140, %p141
    %p143 = scmp.ne.s32.totalorder %s132, %s135
    %p144 = scmp.eq.s32.totalorder %s17, 1
    %p145 = por %p143, %p144
    %p146 = scmp.ne.s32.totalorder %s135, %s136
    %p147 = scmp.eq.s32.totalorder %s17, 0
    %p148 = por %p146, %p147
    %p149 = scmp.ne.s32.totalorder %s135, %s136
    %p150 = scmp.eq.s32.totalorder %s18, 1
    %p151 = por %p149, %p150
    %p153 = scmp.ne.s32.totalorder %s136, %s152
    %p154 = scmp.eq.s32.totalorder %s18, 0
    %p155 = por %p153, %p154
    %s156 = ssub.s32 %s20, %s27
    %p157 = scmp.eq.s32.totalorder %s156, 0
    %s159 = sadd.s32 %s158, 1
    %s160 = scalar_select %p157, %s158, %s159
    %p163 = pneg %p157
    %p164 = scmp.eq.s32.totalorder %s12, 1
    %p165 = por %p163, %p164
    %p166 = scmp.ne.s32.totalorder %s158, %s161
    %p167 = scmp.eq.s32.totalorder %s12, 0
    %p168 = por %p166, %p167
    %p169 = scmp.ne.s32.totalorder %s158, %s161
    %p170 = scmp.eq.s32.totalorder %s17, 1
    %p171 = por %p169, %p170
    %p172 = scmp.ne.s32.totalorder %s161, %s162
    %p173 = scmp.eq.s32.totalorder %s17, 0
    %p174 = por %p172, %p173
    %p175 = scmp.ne.s32.totalorder %s161, %s162
    %p176 = scmp.eq.s32.totalorder %s18, 1
    %p177 = por %p175, %p176
    %p179 = scmp.ne.s32.totalorder %s162, %s178
    %p180 = scmp.eq.s32.totalorder %s18, 0
    %p181 = por %p179, %p180
    %s182 = ssub.s32 %s19, %s31
    %s183 = ssub.s32 %s20, %s27
    %s184 = sor.u32 %s182, %s183
    %p185 = scmp.eq.s32.totalorder %s184, 0
    %s187 = sadd.s32 %s186, 1
    %s188 = scalar_select %p185, %s186, %s187
    %p191 = pneg %p185
    %p192 = scmp.eq.s32.totalorder %s12, 1
    %p193 = por %p191, %p192
    %p194 = scmp.ne.s32.totalorder %s186, %s189
    %p195 = scmp.eq.s32.totalorder %s12, 0
    %p196 = por %p194, %p195
    %p197 = scmp.ne.s32.totalorder %s186, %s189
    %p198 = scmp.eq.s32.totalorder %s17, 1
    %p199 = por %p197, %p198
    %p200 = scmp.ne.s32.totalorder %s189, %s190
    %p201 = scmp.eq.s32.totalorder %s17, 0
    %p202 = por %p200, %p201
    %p203 = scmp.ne.s32.totalorder %s189, %s190
    %p204 = scmp.eq.s32.totalorder %s18, 1
    %p205 = por %p203, %p204
    %p207 = scmp.ne.s32.totalorder %s190, %s206
    %p208 = scmp.eq.s32.totalorder %s18, 0
    %p209 = por %p207, %p208
    %p210 = scmp.le.s32.totalorder 1, %s12
    %p211 = scmp.lt.s32.totalorder %s12, 3
    %p212 = pnand %p210, %p211
    %p213 = pneg %p212
    // Predicated region
    $region9: #{e_mhsa_forward.5} parent=5 // pred_check
      _
    $region10: #{e_mhsa_forward.5} parent=5 // pred_check_branch
      %215 = sbr.rel (%p212) target = $region12
    $region11: #{e_mhsa_forward.5} parent=5 // pred_region
      %s216 = ssub.s32 %s12, 1
      // Predicated region
      $region13: #{e_mhsa_forward.5} parent=11 // pred_check
        %p217 = pneg %p73
      $region14: #{e_mhsa_forward.5} parent=11 // pred_check_branch
        %219 = sbr.rel (%p217) target = $region16
      $region15: #{e_mhsa_forward.5} parent=11 // pred_region
        _
      $region16: #{e_mhsa_forward.5} parent=11 // pred_fallthru
        _
      // Predicated region
      $region17: #{e_mhsa_forward.5} parent=11 // pred_check
        %p220 = pneg %p94
      $region18: #{e_mhsa_forward.5} parent=11 // pred_check_branch
        %222 = sbr.rel (%p220) target = $region20
      $region19: #{e_mhsa_forward.5} parent=11 // pred_region
        _
      $region20: #{e_mhsa_forward.5} parent=11 // pred_fallthru
        _
      // Predicated region
      $region21: #{e_mhsa_forward.5} parent=11 // pred_check
        %p223 = pneg %p148
      $region22: #{e_mhsa_forward.5} parent=11 // pred_check_branch
        %225 = sbr.rel (%p223) target = $region24
      $region23: #{e_mhsa_forward.5} parent=11 // pred_region
        %s226 = smul.u32 32, %s22
        %p227 = scmp.lt.s32.totalorder %s226, 31
        %s228 = scalar_select %p227, %s226, 31
        %s229 = smul.addr %s228, 8
        %s230 = scalar_lea.vmem %s4, %s229
        %s231 = smul.u32 32, %s22
      $region24: #{e_mhsa_forward.5} parent=11 // pred_fallthru
        _
      // Predicated region
      $region25: #{e_mhsa_forward.5} parent=11 // pred_check
        %p232 = pneg %p174
      $region26: #{e_mhsa_forward.5} parent=11 // pred_check_branch
        %234 = sbr.rel (%p232) target = $region28
      $region27: #{e_mhsa_forward.5} parent=11 // pred_region
        %s235 = smul.u32 32, %s22
        %p236 = scmp.lt.s32.totalorder %s235, 31
        %s237 = scalar_select %p236, %s235, 31
        %s238 = smul.addr %s237, 8
        %s239 = scalar_lea.vmem %s5, %s238
        %s240 = smul.u32 32, %s22
      $region28: #{e_mhsa_forward.5} parent=11 // pred_fallthru
        _
    $region12: #{e_mhsa_forward.5} parent=5 // pred_fallthru
      _
    %p241 = scmp.lt.s32.totalorder %s12, 2
    // Predicated region
    $region29: #{e_mhsa_forward.5} parent=5 // pred_check
      %p242 = pneg %p241
    $region30: #{e_mhsa_forward.5} parent=5 // pred_check_branch
      %244 = sbr.rel (%p242) target = $region32
    $region31: #{e_mhsa_forward.5} parent=5 // pred_region
      // Predicated region
      $region33: #{e_mhsa_forward.5} parent=31 // pred_check
        %p245 = pneg %p46
      $region34: #{e_mhsa_forward.5} parent=31 // pred_check_branch
        %247 = sbr.rel (%p245) target = $region36
      $region35: #{e_mhsa_forward.5} parent=31 // pred_region
        %s248 = smul.u32 32, %s20
        %p249 = scmp.lt.s32.totalorder %s19, 1
        %s250 = scalar_select %p249, %s19, 1
        %p251 = scmp.lt.s32.totalorder %s248, 31
        %s252 = scalar_select %p251, %s248, 31
        %s253 = smul.addr %s252, 2
        %s254 = smul.addr %s250, 64
        %s255 = sadd.s32 %s253, %s254
        %s256 = smul.addr %s255, 4
        %s257 = scalar_lea.vmem %s0, %s256
        %s258 = smul.u32 32, %s20
      $region36: #{e_mhsa_forward.5} parent=31 // pred_fallthru
        _
      // Predicated region
      $region37: #{e_mhsa_forward.5} parent=31 // pred_check
        %p259 = pneg %p116
      $region38: #{e_mhsa_forward.5} parent=31 // pred_check_branch
        %261 = sbr.rel (%p259) target = $region40
      $region39: #{e_mhsa_forward.5} parent=31 // pred_region
        %s262 = smul.u32 32, %s20
        %p263 = scmp.lt.s32.totalorder %s19, 1
        %s264 = scalar_select %p263, %s19, 1
        %p265 = scmp.lt.s32.totalorder %s262, 31
        %s266 = scalar_select %p265, %s262, 31
        %s267 = smul.addr %s264, 32
        %s268 = sadd.s32 %s266, %s267
        %s269 = smul.addr %s268, 8
        %s270 = scalar_lea.vmem %s3, %s269
        %s271 = smul.u32 32, %s20
      $region40: #{e_mhsa_forward.5} parent=31 // pred_fallthru
        _
    $region32: #{e_mhsa_forward.5} parent=5 // pred_fallthru
      _
    %p272 = scmp.le.s32.totalorder 1, %s12
    %p273 = scmp.lt.s32.totalorder %s12, 3
    %p274 = pnand %p272, %p273
    %p275 = pneg %p274
    // Predicated region
    $region41: #{e_mhsa_forward.5} parent=5 // pred_check
      _
    $region42: #{e_mhsa_forward.5} parent=5 // pred_check_branch
      %277 = sbr.rel (%p274) target = $region44
    $region43: #{e_mhsa_forward.5} parent=5 // pred_region
      %s278 = ssub.s32 %s12, 1
      %s279 = smul.u32 32, %s22
      %p280 = scmp.lt.s32.totalorder %s21, 1
      %s281 = scalar_select %p280, %s21, 1
      %p282 = scmp.lt.s32.totalorder %s279, 31
      %s283 = scalar_select %p282, %s279, 31
      %s284 = smul.addr %s283, 2
      %s285 = smul.addr %s281, 64
      %s286 = sadd.s32 %s284, %s285
      %s287 = smul.addr %s286, 4
      %s288 = scalar_lea.vmem %s0, %s287
      %p289 = pneg %p52
      %p290 = pneg %p49
      %p291 = pneg %p73
      %p292 = pneg %p70
      %p293 = pneg %p94
      %p294 = pneg %p91
      %s295 = smul.u32 32, %s22
      %p296 = scmp.lt.s32.totalorder %s21, 1
      %s297 = scalar_select %p296, %s21, 1
      %p298 = scmp.lt.s32.totalorder %s295, 31
      %s299 = scalar_select %p298, %s295, 31
      %s300 = smul.addr %s297, 32
      %s301 = sadd.s32 %s299, %s300
      %s302 = smul.addr %s301, 8
      %s303 = scalar_lea.vmem %s3, %s302
      %p304 = pneg %p122
      %p305 = pneg %p119
      %s306 = smul.u32 32, %s22
      %p307 = scmp.lt.s32.totalorder %s306, 31
      %s308 = scalar_select %p307, %s306, 31
      %s309 = smul.addr %s308, 8
      %s310 = scalar_lea.vmem %s4, %s309
      %p311 = pneg %p148
      %p312 = pneg %p145
      %s313 = smul.u32 32, %s22
      %p314 = scmp.lt.s32.totalorder %s313, 31
      %s315 = scalar_select %p314, %s313, 31
      %s316 = smul.addr %s315, 8
      %s317 = scalar_lea.vmem %s5, %s316
      %p318 = pneg %p174
      %p319 = pneg %p171
      %p320 = pneg %p202
      %p321 = pneg %p199
      %s322 = smul.u32 32, %s22
      %p323 = scmp.lt.s32.totalorder %s21, 1
      %s324 = scalar_select %p323, %s21, 1
      %p325 = scmp.lt.s32.totalorder %s322, 31
      %s326 = scalar_select %p325, %s322, 31
      %s327 = smul.addr %s324, 32
      %s328 = sadd.s32 %s326, %s327
      %s329 = smul.addr %s328, 8
      %s330 = scalar_lea.vmem %s6, %s329
      %s331 = smul.u32 32, %s22
      %p332 = scmp.lt.s32.totalorder %s21, 1
      %s333 = scalar_select %p332, %s21, 1
      %p334 = scmp.lt.s32.totalorder %s331, 31
      %s335 = scalar_select %p334, %s331, 31
      %s336 = smul.addr %s335, 2
      %s337 = smul.addr %s333, 64
      %s338 = sadd.s32 %s336, %s337
      %s339 = smul.addr %s338, 4
      %s340 = scalar_lea.vmem %s0, %s339
      %s341 = smul.u32 32, %s22
      %s342 = smul.u32 32, %s22
      %p343 = scmp.lt.s32.totalorder %s21, 1
      %s344 = scalar_select %p343, %s21, 1
      %p345 = scmp.lt.s32.totalorder %s342, 31
      %s346 = scalar_select %p345, %s342, 31
      %s347 = smul.addr %s344, 32
      %s348 = sadd.s32 %s346, %s347
      %s349 = smul.addr %s348, 8
      %s350 = scalar_lea.vmem %s3, %s349
      %s351 = smul.u32 32, %s22
      %s352 = smul.u32 32, %s22
      %p353 = scmp.lt.s32.totalorder %s352, 31
      %s354 = scalar_select %p353, %s352, 31
      %s355 = smul.addr %s354, 8
      %s356 = scalar_lea.vmem %s4, %s355
      %s357 = smul.u32 32, %s22
      %s358 = smul.u32 32, %s22
      %p359 = scmp.lt.s32.totalorder %s358, 31
      %s360 = scalar_select %p359, %s358, 31
      %s361 = smul.addr %s360, 8
      %s362 = scalar_lea.vmem %s5, %s361
      %s363 = smul.u32 32, %s22
      %s364 = smul.u32 32, %s22
      %p365 = scmp.lt.s32.totalorder %s21, 1
      %s366 = scalar_select %p365, %s21, 1
      %p367 = scmp.lt.s32.totalorder %s364, 31
      %s368 = scalar_select %p367, %s364, 31
      %s369 = smul.addr %s366, 32
      %s370 = sadd.s32 %s368, %s369
      %s371 = smul.addr %s370, 8
      %s372 = scalar_lea.vmem %s6, %s371
      %s373 = smul.u32 32, %s22
      %v375 = vld [vmem:[%s340] sm:$0xff]
      %v376 = vld [vmem:[%s340 + $0x8] sm:$0xff]
      %v377 = vld [vmem:[%s340 + $0x10] sm:$0xff]
      %v378 = vld [vmem:[%s340 + $0x18] sm:$0xff]
      %v379 = vld [vmem:[%s340 + $0x20] sm:$0xff]
      %v380 = vld [vmem:[%s340 + $0x28] sm:$0xff]
      %v381 = vld [vmem:[%s340 + $0x30] sm:$0xff]
      %v382 = vld [vmem:[%s340 + $0x38] sm:$0xff]
      %v383 = vld [vmem:[%s340 + $0x40] sm:$0xff]
      %v384 = vld [vmem:[%s340 + $0x48] sm:$0xff]
      %v385 = vld [vmem:[%s340 + $0x50] sm:$0xff]
      %v386 = vld [vmem:[%s340 + $0x58] sm:$0xff]
      %v387 = vld [vmem:[%s340 + $0x60] sm:$0xff]
      %v388 = vld [vmem:[%s340 + $0x68] sm:$0xff]
      %v389 = vld [vmem:[%s340 + $0x70] sm:$0xff]
      %v390 = vld [vmem:[%s340 + $0x78] sm:$0xff]
      %v391 = vld [vmem:[%s340 + $0x80] sm:$0xff]
      %v392 = vld [vmem:[%s340 + $0x88] sm:$0xff]
      %v393 = vld [vmem:[%s340 + $0x90] sm:$0xff]
      %v394 = vld [vmem:[%s340 + $0x98] sm:$0xff]
      %v395 = vld [vmem:[%s340 + $0xa0] sm:$0xff]
      %v396 = vld [vmem:[%s340 + $0xa8] sm:$0xff]
      %v397 = vld [vmem:[%s340 + $0xb0] sm:$0xff]
      %v398 = vld [vmem:[%s340 + $0xb8] sm:$0xff]
      %v399 = vld [vmem:[%s340 + $0xc0] sm:$0xff]
      %v400 = vld [vmem:[%s340 + $0xc8] sm:$0xff]
      %v401 = vld [vmem:[%s340 + $0xd0] sm:$0xff]
      %v402 = vld [vmem:[%s340 + $0xd8] sm:$0xff]
      %v403 = vld [vmem:[%s340 + $0xe0] sm:$0xff]
      %v404 = vld [vmem:[%s340 + $0xe8] sm:$0xff]
      %v405 = vld [vmem:[%s340 + $0xf0] sm:$0xff]
      %v406 = vld [vmem:[%s340 + $0xf8] sm:$0xff]
      %v407 = vld [vmem:[%s1] sm:$0xf]
      %v408 = vld [vmem:[%s1 + $0x4] sm:$0xf]
      %v409 = vld [vmem:[%s1 + $0x8] sm:$0xf]
      %v410 = vld [vmem:[%s1 + $0xc] sm:$0xf]
      %v411 = vld [vmem:[%s1 + $0x10] sm:$0xf]
      %v412 = vld [vmem:[%s1 + $0x14] sm:$0xf]
      %v413 = vld [vmem:[%s1 + $0x18] sm:$0xf]
      %v414 = vld [vmem:[%s1 + $0x1c] sm:$0xf]
      %v415 = vld [vmem:[%s1 + $0x20] sm:$0xf]
      %v416 = vld [vmem:[%s1 + $0x24] sm:$0xf]
      %v417 = vld [vmem:[%s1 + $0x28] sm:$0xf]
      %v418 = vld [vmem:[%s1 + $0x2c] sm:$0xf]
      %v419 = vld [vmem:[%s1 + $0x30] sm:$0xf]
      %v420 = vld [vmem:[%s1 + $0x34] sm:$0xf]
      %v421 = vld [vmem:[%s1 + $0x38] sm:$0xf]
      %v422 = vld [vmem:[%s1 + $0x3c] sm:$0xf]
      %v423 = vld [vmem:[%s1 + $0x40] sm:$0xf]
      %v424 = vld [vmem:[%s1 + $0x44] sm:$0xf]
      %v425 = vld [vmem:[%s1 + $0x48] sm:$0xf]
      %v426 = vld [vmem:[%s1 + $0x4c] sm:$0xf]
      %v427 = vld [vmem:[%s1 + $0x50] sm:$0xf]
      %v428 = vld [vmem:[%s1 + $0x54] sm:$0xf]
      %v429 = vld [vmem:[%s1 + $0x58] sm:$0xf]
      %v430 = vld [vmem:[%s1 + $0x5c] sm:$0xf]
      %v431 = vld [vmem:[%s1 + $0x60] sm:$0xf]
      %v432 = vld [vmem:[%s1 + $0x64] sm:$0xf]
      %v433 = vld [vmem:[%s1 + $0x68] sm:$0xf]
      %v434 = vld [vmem:[%s1 + $0x6c] sm:$0xf]
      %v435 = vld [vmem:[%s1 + $0x70] sm:$0xf]
      %v436 = vld [vmem:[%s1 + $0x74] sm:$0xf]
      %v437 = vld [vmem:[%s1 + $0x78] sm:$0xf]
      %v438 = vld [vmem:[%s1 + $0x7c] sm:$0xf]
      %v439 = vld [vmem:[%s350] sm:$0xff]
      %v440 = vld [vmem:[%s350 + $0x8] sm:$0xff]
      %v441 = vld [vmem:[%s350 + $0x10] sm:$0xff]
      %v442 = vld [vmem:[%s350 + $0x18] sm:$0xff]
      %v443 = vld [vmem:[%s350 + $0x20] sm:$0xff]
      %v444 = vld [vmem:[%s350 + $0x28] sm:$0xff]
      %v445 = vld [vmem:[%s350 + $0x30] sm:$0xff]
      %v446 = vld [vmem:[%s350 + $0x38] sm:$0xff]
      %v447 = vld [vmem:[%s350 + $0x40] sm:$0xff]
      %v448 = vld [vmem:[%s350 + $0x48] sm:$0xff]
      %v449 = vld [vmem:[%s350 + $0x50] sm:$0xff]
      %v450 = vld [vmem:[%s350 + $0x58] sm:$0xff]
      %v451 = vld [vmem:[%s350 + $0x60] sm:$0xff]
      %v452 = vld [vmem:[%s350 + $0x68] sm:$0xff]
      %v453 = vld [vmem:[%s350 + $0x70] sm:$0xff]
      %v454 = vld [vmem:[%s350 + $0x78] sm:$0xff]
      %v455 = vld [vmem:[%s350 + $0x80] sm:$0xff]
      %v456 = vld [vmem:[%s350 + $0x88] sm:$0xff]
      %v457 = vld [vmem:[%s350 + $0x90] sm:$0xff]
      %v458 = vld [vmem:[%s350 + $0x98] sm:$0xff]
      %v459 = vld [vmem:[%s350 + $0xa0] sm:$0xff]
      %v460 = vld [vmem:[%s350 + $0xa8] sm:$0xff]
      %v461 = vld [vmem:[%s350 + $0xb0] sm:$0xff]
      %v462 = vld [vmem:[%s350 + $0xb8] sm:$0xff]
      %v463 = vld [vmem:[%s350 + $0xc0] sm:$0xff]
      %v464 = vld [vmem:[%s350 + $0xc8] sm:$0xff]
      %v465 = vld [vmem:[%s350 + $0xd0] sm:$0xff]
      %v466 = vld [vmem:[%s350 + $0xd8] sm:$0xff]
      %v467 = vld [vmem:[%s350 + $0xe0] sm:$0xff]
      %v468 = vld [vmem:[%s350 + $0xe8] sm:$0xff]
      %v469 = vld [vmem:[%s350 + $0xf0] sm:$0xff]
      %v470 = vld [vmem:[%s350 + $0xf8] sm:$0xff]
      %v471 = vld [vmem:[%s356] sm:$0xff]
      %v472 = vld [vmem:[%s356 + $0x8] sm:$0xff]
      %v473 = vld [vmem:[%s356 + $0x10] sm:$0xff]
      %v474 = vld [vmem:[%s356 + $0x18] sm:$0xff]
      %v475 = vld [vmem:[%s356 + $0x20] sm:$0xff]
      %v476 = vld [vmem:[%s356 + $0x28] sm:$0xff]
      %v477 = vld [vmem:[%s356 + $0x30] sm:$0xff]
      %v478 = vld [vmem:[%s356 + $0x38] sm:$0xff]
      %v479 = vld [vmem:[%s356 + $0x40] sm:$0xff]
      %v480 = vld [vmem:[%s356 + $0x48] sm:$0xff]
      %v481 = vld [vmem:[%s356 + $0x50] sm:$0xff]
      %v482 = vld [vmem:[%s356 + $0x58] sm:$0xff]
      %v483 = vld [vmem:[%s356 + $0x60] sm:$0xff]
      %v484 = vld [vmem:[%s356 + $0x68] sm:$0xff]
      %v485 = vld [vmem:[%s356 + $0x70] sm:$0xff]
      %v486 = vld [vmem:[%s356 + $0x78] sm:$0xff]
      %v487 = vld [vmem:[%s356 + $0x80] sm:$0xff]
      %v488 = vld [vmem:[%s356 + $0x88] sm:$0xff]
      %v489 = vld [vmem:[%s356 + $0x90] sm:$0xff]
      %v490 = vld [vmem:[%s356 + $0x98] sm:$0xff]
      %v491 = vld [vmem:[%s356 + $0xa0] sm:$0xff]
      %v492 = vld [vmem:[%s356 + $0xa8] sm:$0xff]
      %v493 = vld [vmem:[%s356 + $0xb0] sm:$0xff]
      %v494 = vld [vmem:[%s356 + $0xb8] sm:$0xff]
      %v495 = vld [vmem:[%s356 + $0xc0] sm:$0xff]
      %v496 = vld [vmem:[%s356 + $0xc8] sm:$0xff]
      %v497 = vld [vmem:[%s356 + $0xd0] sm:$0xff]
      %v498 = vld [vmem:[%s356 + $0xd8] sm:$0xff]
      %v499 = vld [vmem:[%s356 + $0xe0] sm:$0xff]
      %v500 = vld [vmem:[%s356 + $0xe8] sm:$0xff]
      %v501 = vld [vmem:[%s356 + $0xf0] sm:$0xff]
      %v502 = vld [vmem:[%s356 + $0xf8] sm:$0xff]
      %v503 = vmul.f32 %v439, %v471
      %v504 = vmul.f32 %v440, %v472
      %v505 = vmul.f32 %v441, %v473
      %v506 = vmul.f32 %v442, %v474
      %v507 = vmul.f32 %v443, %v475
      %v508 = vmul.f32 %v444, %v476
      %v509 = vmul.f32 %v445, %v477
      %v510 = vmul.f32 %v446, %v478
      %v511 = vmul.f32 %v447, %v479
      %v512 = vmul.f32 %v448, %v480
      %v513 = vmul.f32 %v449, %v481
      %v514 = vmul.f32 %v450, %v482
      %v515 = vmul.f32 %v451, %v483
      %v516 = vmul.f32 %v452, %v484
      %v517 = vmul.f32 %v453, %v485
      %v518 = vmul.f32 %v454, %v486
      %v519 = vmul.f32 %v455, %v487
      %v520 = vmul.f32 %v456, %v488
      %v521 = vmul.f32 %v457, %v489
      %v522 = vmul.f32 %v458, %v490
      %v523 = vmul.f32 %v459, %v491
      %v524 = vmul.f32 %v460, %v492
      %v525 = vmul.f32 %v461, %v493
      %v526 = vmul.f32 %v462, %v494
      %v527 = vmul.f32 %v463, %v495
      %v528 = vmul.f32 %v464, %v496
      %v529 = vmul.f32 %v465, %v497
      %v530 = vmul.f32 %v466, %v498
      %v531 = vmul.f32 %v467, %v499
      %v532 = vmul.f32 %v468, %v500
      %v533 = vmul.f32 %v469, %v501
      %v534 = vmul.f32 %v470, %v502
      %v535 = vld [vmem:[%s362] sm:$0xff]
      %v536 = vld [vmem:[%s362 + $0x8] sm:$0xff]
      %v537 = vld [vmem:[%s362 + $0x10] sm:$0xff]
      %v538 = vld [vmem:[%s362 + $0x18] sm:$0xff]
      %v539 = vld [vmem:[%s362 + $0x20] sm:$0xff]
      %v540 = vld [vmem:[%s362 + $0x28] sm:$0xff]
      %v541 = vld [vmem:[%s362 + $0x30] sm:$0xff]
      %v542 = vld [vmem:[%s362 + $0x38] sm:$0xff]
      %v543 = vld [vmem:[%s362 + $0x40] sm:$0xff]
      %v544 = vld [vmem:[%s362 + $0x48] sm:$0xff]
      %v545 = vld [vmem:[%s362 + $0x50] sm:$0xff]
      %v546 = vld [vmem:[%s362 + $0x58] sm:$0xff]
      %v547 = vld [vmem:[%s362 + $0x60] sm:$0xff]
      %v548 = vld [vmem:[%s362 + $0x68] sm:$0xff]
      %v549 = vld [vmem:[%s362 + $0x70] sm:$0xff]
      %v550 = vld [vmem:[%s362 + $0x78] sm:$0xff]
      %v551 = vld [vmem:[%s362 + $0x80] sm:$0xff]
      %v552 = vld [vmem:[%s362 + $0x88] sm:$0xff]
      %v553 = vld [vmem:[%s362 + $0x90] sm:$0xff]
      %v554 = vld [vmem:[%s362 + $0x98] sm:$0xff]
      %v555 = vld [vmem:[%s362 + $0xa0] sm:$0xff]
      %v556 = vld [vmem:[%s362 + $0xa8] sm:$0xff]
      %v557 = vld [vmem:[%s362 + $0xb0] sm:$0xff]
      %v558 = vld [vmem:[%s362 + $0xb8] sm:$0xff]
      %v559 = vld [vmem:[%s362 + $0xc0] sm:$0xff]
      %v560 = vld [vmem:[%s362 + $0xc8] sm:$0xff]
      %v561 = vld [vmem:[%s362 + $0xd0] sm:$0xff]
      %v562 = vld [vmem:[%s362 + $0xd8] sm:$0xff]
      %v563 = vld [vmem:[%s362 + $0xe0] sm:$0xff]
      %v564 = vld [vmem:[%s362 + $0xe8] sm:$0xff]
      %v565 = vld [vmem:[%s362 + $0xf0] sm:$0xff]
      %v566 = vld [vmem:[%s362 + $0xf8] sm:$0xff]
      %v567 = vadd.f32 %v503, %v535
      %v568 = vadd.f32 %v504, %v536
      %v569 = vadd.f32 %v505, %v537
      %v570 = vadd.f32 %v506, %v538
      %v571 = vadd.f32 %v507, %v539
      %v572 = vadd.f32 %v508, %v540
      %v573 = vadd.f32 %v509, %v541
      %v574 = vadd.f32 %v510, %v542
      %v575 = vadd.f32 %v511, %v543
      %v576 = vadd.f32 %v512, %v544
      %v577 = vadd.f32 %v513, %v545
      %v578 = vadd.f32 %v514, %v546
      %v579 = vadd.f32 %v515, %v547
      %v580 = vadd.f32 %v516, %v548
      %v581 = vadd.f32 %v517, %v549
      %v582 = vadd.f32 %v518, %v550
      %v583 = vadd.f32 %v519, %v551
      %v584 = vadd.f32 %v520, %v552
      %v585 = vadd.f32 %v521, %v553
      %v586 = vadd.f32 %v522, %v554
      %v587 = vadd.f32 %v523, %v555
      %v588 = vadd.f32 %v524, %v556
      %v589 = vadd.f32 %v525, %v557
      %v590 = vadd.f32 %v526, %v558
      %v591 = vadd.f32 %v527, %v559
      %v592 = vadd.f32 %v528, %v560
      %v593 = vadd.f32 %v529, %v561
      %v594 = vadd.f32 %v530, %v562
      %v595 = vadd.f32 %v531, %v563
      %v596 = vadd.f32 %v532, %v564
      %v597 = vadd.f32 %v533, %v565
      %v598 = vadd.f32 %v534, %v566
      %v599 = vld [vmem:[%s2] sm:$0x1]
      %v601 = vlaneseq
      %v602 = vshrl.u32 %v601, 7
      %v603 = vsub.s32 0, %v602
      %v604 = vrot.slane %v599, %v603
      %v638 = vunpack.c.l.b16 %v375
      %v639 = vunpack.c.h.b16 %v375
      %v640 = vunpack.c.l.b16 %v376
      %v641 = vunpack.c.h.b16 %v376
      %v642 = vunpack.c.l.b16 %v377
      %v643 = vunpack.c.h.b16 %v377
      %v644 = vunpack.c.l.b16 %v378
      %v645 = vunpack.c.h.b16 %v378
      %v646 = vunpack.c.l.b16 %v379
      %v647 = vunpack.c.h.b16 %v379
      %v648 = vunpack.c.l.b16 %v380
      %v649 = vunpack.c.h.b16 %v380
      %v650 = vunpack.c.l.b16 %v381
      %v651 = vunpack.c.h.b16 %v381
      %v652 = vunpack.c.l.b16 %v382
      %v653 = vunpack.c.h.b16 %v382
      %v654 = vunpack.c.l.b16 %v383
      %v655 = vunpack.c.h.b16 %v383
      %v656 = vunpack.c.l.b16 %v384
      %v657 = vunpack.c.h.b16 %v384
      %v658 = vunpack.c.l.b16 %v385
      %v659 = vunpack.c.h.b16 %v385
      %v660 = vunpack.c.l.b16 %v386
      %v661 = vunpack.c.h.b16 %v386
      %v662 = vunpack.c.l.b16 %v387
      %v663 = vunpack.c.h.b16 %v387
      %v664 = vunpack.c.l.b16 %v388
      %v665 = vunpack.c.h.b16 %v388
      %v666 = vunpack.c.l.b16 %v389
      %v667 = vunpack.c.h.b16 %v389
      %v668 = vunpack.c.l.b16 %v390
      %v669 = vunpack.c.h.b16 %v390
      %v670 = vunpack.c.l.b16 %v391
      %v671 = vunpack.c.h.b16 %v391
      %v672 = vunpack.c.l.b16 %v392
      %v673 = vunpack.c.h.b16 %v392
      %v674 = vunpack.c.l.b16 %v393
      %v675 = vunpack.c.h.b16 %v393
      %v676 = vunpack.c.l.b16 %v394
      %v677 = vunpack.c.h.b16 %v394
      %v678 = vunpack.c.l.b16 %v395
      %v679 = vunpack.c.h.b16 %v395
      %v680 = vunpack.c.l.b16 %v396
      %v681 = vunpack.c.h.b16 %v396
      %v682 = vunpack.c.l.b16 %v397
      %v683 = vunpack.c.h.b16 %v397
      %v684 = vunpack.c.l.b16 %v398
      %v685 = vunpack.c.h.b16 %v398
      %v686 = vunpack.c.l.b16 %v399
      %v687 = vunpack.c.h.b16 %v399
      %v688 = vunpack.c.l.b16 %v400
      %v689 = vunpack.c.h.b16 %v400
      %v690 = vunpack.c.l.b16 %v401
      %v691 = vunpack.c.h.b16 %v401
      %v692 = vunpack.c.l.b16 %v402
      %v693 = vunpack.c.h.b16 %v402
      %v694 = vunpack.c.l.b16 %v403
      %v695 = vunpack.c.h.b16 %v403
      %v696 = vunpack.c.l.b16 %v404
      %v697 = vunpack.c.h.b16 %v404
      %v698 = vunpack.c.l.b16 %v405
      %v699 = vunpack.c.h.b16 %v405
      %v700 = vunpack.c.l.b16 %v406
      %v701 = vunpack.c.h.b16 %v406
      %v702 = vpack.c.b16 %v640, %v638
      %v703 = vpack.c.b16 %v641, %v639
      %v704 = vpack.c.b16 %v644, %v642
      %v705 = vpack.c.b16 %v645, %v643
      %v706 = vpack.c.b16 %v648, %v646
      %v707 = vpack.c.b16 %v649, %v647
      %v708 = vpack.c.b16 %v652, %v650
      %v709 = vpack.c.b16 %v653, %v651
      %v710 = vpack.c.b16 %v656, %v654
      %v711 = vpack.c.b16 %v657, %v655
      %v712 = vpack.c.b16 %v660, %v658
      %v713 = vpack.c.b16 %v661, %v659
      %v714 = vpack.c.b16 %v664, %v662
      %v715 = vpack.c.b16 %v665, %v663
      %v716 = vpack.c.b16 %v668, %v666
      %v717 = vpack.c.b16 %v669, %v667
      %v718 = vpack.c.b16 %v672, %v670
      %v719 = vpack.c.b16 %v673, %v671
      %v720 = vpack.c.b16 %v676, %v674
      %v721 = vpack.c.b16 %v677, %v675
      %v722 = vpack.c.b16 %v680, %v678
      %v723 = vpack.c.b16 %v681, %v679
      %v724 = vpack.c.b16 %v684, %v682
      %v725 = vpack.c.b16 %v685, %v683
      %v726 = vpack.c.b16 %v688, %v686
      %v727 = vpack.c.b16 %v689, %v687
      %v728 = vpack.c.b16 %v692, %v690
      %v729 = vpack.c.b16 %v693, %v691
      %v730 = vpack.c.b16 %v696, %v694
      %v731 = vpack.c.b16 %v697, %v695
      %v732 = vpack.c.b16 %v700, %v698
      %v733 = vpack.c.b16 %v701, %v699
      %v798 = vunpack.c.l.b16 %v407
      %v799 = vunpack.c.l.b16 %v408
      %v800 = vunpack.c.l.b16 %v409
      %v801 = vunpack.c.l.b16 %v410
      %v802 = vunpack.c.l.b16 %v411
      %v803 = vunpack.c.l.b16 %v412
      %v804 = vunpack.c.l.b16 %v413
      %v805 = vunpack.c.l.b16 %v414
      %v806 = vunpack.c.l.b16 %v415
      %v807 = vunpack.c.l.b16 %v416
      %v808 = vunpack.c.l.b16 %v417
      %v809 = vunpack.c.l.b16 %v418
      %v810 = vunpack.c.l.b16 %v419
      %v811 = vunpack.c.l.b16 %v420
      %v812 = vunpack.c.l.b16 %v421
      %v813 = vunpack.c.l.b16 %v422
      %v814 = vunpack.c.l.b16 %v423
      %v815 = vunpack.c.l.b16 %v424
      %v816 = vunpack.c.l.b16 %v425
      %v817 = vunpack.c.l.b16 %v426
      %v818 = vunpack.c.l.b16 %v427
      %v819 = vunpack.c.l.b16 %v428
      %v820 = vunpack.c.l.b16 %v429
      %v821 = vunpack.c.l.b16 %v430
      %v822 = vunpack.c.l.b16 %v431
      %v823 = vunpack.c.l.b16 %v432
      %v824 = vunpack.c.l.b16 %v433
      %v825 = vunpack.c.l.b16 %v434
      %v826 = vunpack.c.l.b16 %v435
      %v827 = vunpack.c.l.b16 %v436
      %v828 = vunpack.c.l.b16 %v437
      %v829 = vunpack.c.l.b16 %v438
      %v830 = vpack.c.b16 %v799, %v798
      %v831 = vpack.c.b16 %v801, %v800
      %v832 = vpack.c.b16 %v803, %v802
      %v833 = vpack.c.b16 %v805, %v804
      %v834 = vpack.c.b16 %v807, %v806
      %v835 = vpack.c.b16 %v809, %v808
      %v836 = vpack.c.b16 %v811, %v810
      %v837 = vpack.c.b16 %v813, %v812
      %v838 = vpack.c.b16 %v815, %v814
      %v839 = vpack.c.b16 %v817, %v816
      %v840 = vpack.c.b16 %v819, %v818
      %v841 = vpack.c.b16 %v821, %v820
      %v842 = vpack.c.b16 %v823, %v822
      %v843 = vpack.c.b16 %v825, %v824
      %v844 = vpack.c.b16 %v827, %v826
      %v845 = vpack.c.b16 %v829, %v828
      %862 = vmatprep.subr.bf16.mxu0 0
      %863 = vmatpush1.bf16.msra.mxu0 %v830
      %864 = vmatprep.subr.bf16.mxu0 0
      %865 = vmatpush1.bf16.msra.mxu0 %v831
      %866 = vmatprep.subr.bf16.mxu0 0
      %867 = vmatpush1.bf16.msra.mxu0 %v832
      %868 = vmatprep.subr.bf16.mxu0 0
      %869 = vmatpush1.bf16.msra.mxu0 %v833
      %870 = vmatprep.subr.bf16.mxu0 0
      %871 = vmatpush1.bf16.msra.mxu0 %v834
      %872 = vmatprep.subr.bf16.mxu0 0
      %873 = vmatpush1.bf16.msra.mxu0 %v835
      %874 = vmatprep.subr.bf16.mxu0 0
      %875 = vmatpush1.bf16.msra.mxu0 %v836
      %876 = vmatprep.subr.bf16.mxu0 0
      %877 = vmatpush1.bf16.msra.mxu0 %v837
      %878 = vmatprep.subr.bf16.mxu0 0
      %879 = vmatpush1.bf16.msra.mxu0 %v838
      %880 = vmatprep.subr.bf16.mxu0 0
      %881 = vmatpush1.bf16.msra.mxu0 %v839
      %882 = vmatprep.subr.bf16.mxu0 0
      %883 = vmatpush1.bf16.msra.mxu0 %v840
      %884 = vmatprep.subr.bf16.mxu0 0
      %885 = vmatpush1.bf16.msra.mxu0 %v841
      %886 = vmatprep.subr.bf16.mxu0 0
      %887 = vmatpush1.bf16.msra.mxu0 %v842
      %888 = vmatprep.subr.bf16.mxu0 0
      %889 = vmatpush1.bf16.msra.mxu0 %v843
      %890 = vmatprep.subr.bf16.mxu0 0
      %891 = vmatpush1.bf16.msra.mxu0 %v844
      %892 = vmatprep.subr.bf16.mxu0 0
      %893 = vmatpush1.bf16.msra.mxu0 %v845
      %894 = vmatprep.mubr.bf16.mxu0 %v703
      %895 = vmatmul.mubr.bf16.gmra.mrb[0].mxu0 %v702
      %v896 = vpop.f32.mrb[0].mxu0
      %v897 = vadd.f32 %v604, %v896
      %v898 = vpop.f32.mrb[0].mxu0
      %v899 = vpop.f32.mrb[0].mxu0
      %v900 = vadd.f32 %v604, %v899
      %v901 = vpop.f32.mrb[0].mxu0
      %902 = vmatprep.mubr.bf16.mxu0 %v705
      %903 = vmatmul.mubr.bf16.gmra.mrb[0].mxu0 %v704
      %v904 = vpop.f32.mrb[0].mxu0
      %v905 = vadd.f32 %v604, %v904
      %v906 = vpop.f32.mrb[0].mxu0
      %v907 = vpop.f32.mrb[0].mxu0
      %v908 = vadd.f32 %v604, %v907
      %v909 = vpop.f32.mrb[0].mxu0
      %910 = vmatprep.mubr.bf16.mxu0 %v707
      %911 = vmatmul.mubr.bf16.gmra.mrb[0].mxu0 %v706
      %v912 = vpop.f32.mrb[0].mxu0
      %v913 = vadd.f32 %v604, %v912
      %v914 = vpop.f32.mrb[0].mxu0
      %v915 = vpop.f32.mrb[0].mxu0
      %v916 = vadd.f32 %v604, %v915
      %v917 = vpop.f32.mrb[0].mxu0
      %918 = vmatprep.mubr.bf16.mxu0 %v709
      %919 = vmatmul.mubr.bf16.gmra.mrb[0].mxu0 %v708
      %v920 = vpop.f32.mrb[0].mxu0
      %v921 = vadd.f32 %v604, %v920
      %v922 = vpop.f32.mrb[0].mxu0
      %v923 = vpop.f32.mrb[0].mxu0
      %v924 = vadd.f32 %v604, %v923
      %v925 = vpop.f32.mrb[0].mxu0
      %926 = vmatprep.mubr.bf16.mxu0 %v711
      %927 = vmatmul.mubr.bf16.gmra.mrb[0].mxu0 %v710
      %v928 = vpop.f32.mrb[0].mxu0
      %v929 = vadd.f32 %v604, %v928
      %v930 = vpop.f32.mrb[0].mxu0
      %v931 = vpop.f32.mrb[0].mxu0
      %v932 = vadd.f32 %v604, %v931
      %v933 = vpop.f32.mrb[0].mxu0
      %934 = vmatprep.mubr.bf16.mxu0 %v713
      %935 = vmatmul.mubr.bf16.gmra.mrb[0].mxu0 %v712
      %v936 = vpop.f32.mrb[0].mxu0
      %v937 = vadd.f32 %v604, %v936
      %v938 = vpop.f32.mrb[0].mxu0
      %v939 = vpop.f32.mrb[0].mxu0
      %v940 = vadd.f32 %v604, %v939
      %v941 = vpop.f32.mrb[0].mxu0
      %942 = vmatprep.mubr.bf16.mxu0 %v715
      %943 = vmatmul.mubr.bf16.gmra.mrb[0].mxu0 %v714
      %v944 = vpop.f32.mrb[0].mxu0
      %v945 = vadd.f32 %v604, %v944
      %v946 = vpop.f32.mrb[0].mxu0
      %v947 = vpop.f32.mrb[0].mxu0
      %v948 = vadd.f32 %v604, %v947
      %v949 = vpop.f32.mrb[0].mxu0
      %950 = vmatprep.mubr.bf16.mxu0 %v717
      %951 = vmatmul.mubr.bf16.gmra.mrb[0].mxu0 %v716
      %v952 = vpop.f32.mrb[0].mxu0
      %v953 = vadd.f32 %v604, %v952
      %v954 = vpop.f32.mrb[0].mxu0
      %v955 = vpop.f32.mrb[0].mxu0
      %v956 = vadd.f32 %v604, %v955
      %v957 = vpop.f32.mrb[0].mxu0
      %958 = vmatprep.mubr.bf16.mxu0 %v719
      %959 = vmatmul.mubr.bf16.gmra.mrb[0].mxu0 %v718
      %v960 = vpop.f32.mrb[0].mxu0
      %v961 = vadd.f32 %v604, %v960
      %v962 = vpop.f32.mrb[0].mxu0
      %v963 = vpop.f32.mrb[0].mxu0
      %v964 = vadd.f32 %v604, %v963
      %v965 = vpop.f32.mrb[0].mxu0
      %966 = vmatprep.mubr.bf16.mxu0 %v721
      %967 = vmatmul.mubr.bf16.gmra.mrb[0].mxu0 %v720
      %v968 = vpop.f32.mrb[0].mxu0
      %v969 = vadd.f32 %v604, %v968
      %v970 = vpop.f32.mrb[0].mxu0
      %v971 = vpop.f32.mrb[0].mxu0
      %v972 = vadd.f32 %v604, %v971
      %v973 = vpop.f32.mrb[0].mxu0
      %974 = vmatprep.mubr.bf16.mxu0 %v723
      %975 = vmatmul.mubr.bf16.gmra.mrb[0].mxu0 %v722
      %v976 = vpop.f32.mrb[0].mxu0
      %v977 = vadd.f32 %v604, %v976
      %v978 = vpop.f32.mrb[0].mxu0
      %v979 = vpop.f32.mrb[0].mxu0
      %v980 = vadd.f32 %v604, %v979
      %v981 = vpop.f32.mrb[0].mxu0
      %982 = vmatprep.mubr.bf16.mxu0 %v725
      %983 = vmatmul.mubr.bf16.gmra.mrb[0].mxu0 %v724
      %v984 = vpop.f32.mrb[0].mxu0
      %v985 = vadd.f32 %v604, %v984
      %v986 = vpop.f32.mrb[0].mxu0
      %v987 = vpop.f32.mrb[0].mxu0
      %v988 = vadd.f32 %v604, %v987
      %v989 = vpop.f32.mrb[0].mxu0
      %990 = vmatprep.mubr.bf16.mxu0 %v727
      %991 = vmatmul.mubr.bf16.gmra.mrb[0].mxu0 %v726
      %v992 = vpop.f32.mrb[0].mxu0
      %v993 = vadd.f32 %v604, %v992
      %v994 = vpop.f32.mrb[0].mxu0
      %v995 = vpop.f32.mrb[0].mxu0
      %v996 = vadd.f32 %v604, %v995
      %v997 = vpop.f32.mrb[0].mxu0
      %998 = vmatprep.mubr.bf16.mxu0 %v729
      %999 = vmatmul.mubr.bf16.gmra.mrb[0].mxu0 %v728
      %v1000 = vpop.f32.mrb[0].mxu0
      %v1001 = vadd.f32 %v604, %v1000
      %v1002 = vpop.f32.mrb[0].mxu0
      %v1003 = vpop.f32.mrb[0].mxu0
      %v1004 = vadd.f32 %v604, %v1003
      %v1005 = vpop.f32.mrb[0].mxu0
      %1006 = vmatprep.mubr.bf16.mxu0 %v731
      %1007 = vmatmul.mubr.bf16.gmra.mrb[0].mxu0 %v730
      %v1008 = vpop.f32.mrb[0].mxu0
      %v1009 = vadd.f32 %v604, %v1008
      %v1010 = vpop.f32.mrb[0].mxu0
      %v1011 = vpop.f32.mrb[0].mxu0
      %v1012 = vadd.f32 %v604, %v1011
      %v1013 = vpop.f32.mrb[0].mxu0
      %1014 = vmatprep.mubr.bf16.mxu0 %v733
      %1015 = vmatmul.mubr.bf16.gmra.mrb[0].mxu0 %v732
      %v1016 = vpop.f32.mrb[0].mxu0
      %v1017 = vadd.f32 %v604, %v1016
      %v1018 = vpop.f32.mrb[0].mxu0
      %v1019 = vpop.f32.mrb[0].mxu0
      %v1020 = vadd.f32 %v604, %v1019
      %v1021 = vpop.f32.mrb[0].mxu0
      %1022 = vdwg.mxu0
      %v1023 = vadd.f32 %v897, %v567
      %v1024 = vadd.f32 %v900, %v568
      %v1025 = vadd.f32 %v905, %v569
      %v1026 = vadd.f32 %v908, %v570
      %v1027 = vadd.f32 %v913, %v571
      %v1028 = vadd.f32 %v916, %v572
      %v1029 = vadd.f32 %v921, %v573
      %v1030 = vadd.f32 %v924, %v574
      %v1031 = vadd.f32 %v929, %v575
      %v1032 = vadd.f32 %v932, %v576
      %v1033 = vadd.f32 %v937, %v577
      %v1034 = vadd.f32 %v940, %v578
      %v1035 = vadd.f32 %v945, %v579
      %v1036 = vadd.f32 %v948, %v580
      %v1037 = vadd.f32 %v953, %v581
      %v1038 = vadd.f32 %v956, %v582
      %v1039 = vadd.f32 %v961, %v583
      %v1040 = vadd.f32 %v964, %v584
      %v1041 = vadd.f32 %v969, %v585
      %v1042 = vadd.f32 %v972, %v586
      %v1043 = vadd.f32 %v977, %v587
      %v1044 = vadd.f32 %v980, %v588
      %v1045 = vadd.f32 %v985, %v589
      %v1046 = vadd.f32 %v988, %v590
      %v1047 = vadd.f32 %v993, %v591
      %v1048 = vadd.f32 %v996, %v592
      %v1049 = vadd.f32 %v1001, %v593
      %v1050 = vadd.f32 %v1004, %v594
      %v1051 = vadd.f32 %v1009, %v595
      %v1052 = vadd.f32 %v1012, %v596
      %v1053 = vadd.f32 %v1017, %v597
      %v1054 = vadd.f32 %v1020, %v598
      %vm1055 = vcmask 785408
      %1056 = vst.msk [vmem:[%s372] sm:$0xff] %vm1055, %v1023
      %1057 = vst.msk [vmem:[%s372 + $0x8] sm:$0xff] %vm1055, %v1024
      %1058 = vst.msk [vmem:[%s372 + $0x10] sm:$0xff] %vm1055, %v1025
      %1059 = vst.msk [vmem:[%s372 + $0x18] sm:$0xff] %vm1055, %v1026
      %1060 = vst.msk [vmem:[%s372 + $0x20] sm:$0xff] %vm1055, %v1027
      %1061 = vst.msk [vmem:[%s372 + $0x28] sm:$0xff] %vm1055, %v1028
      %1062 = vst.msk [vmem:[%s372 + $0x30] sm:$0xff] %vm1055, %v1029
      %1063 = vst.msk [vmem:[%s372 + $0x38] sm:$0xff] %vm1055, %v1030
      %1064 = vst.msk [vmem:[%s372 + $0x40] sm:$0xff] %vm1055, %v1031
      %1065 = vst.msk [vmem:[%s372 + $0x48] sm:$0xff] %vm1055, %v1032
      %1066 = vst.msk [vmem:[%s372 + $0x50] sm:$0xff] %vm1055, %v1033
      %1067 = vst.msk [vmem:[%s372 + $0x58] sm:$0xff] %vm1055, %v1034
      %1068 = vst.msk [vmem:[%s372 + $0x60] sm:$0xff] %vm1055, %v1035
      %1069 = vst.msk [vmem:[%s372 + $0x68] sm:$0xff] %vm1055, %v1036
      %1070 = vst.msk [vmem:[%s372 + $0x70] sm:$0xff] %vm1055, %v1037
      %1071 = vst.msk [vmem:[%s372 + $0x78] sm:$0xff] %vm1055, %v1038
      %1072 = vst.msk [vmem:[%s372 + $0x80] sm:$0xff] %vm1055, %v1039
      %1073 = vst.msk [vmem:[%s372 + $0x88] sm:$0xff] %vm1055, %v1040
      %1074 = vst.msk [vmem:[%s372 + $0x90] sm:$0xff] %vm1055, %v1041
      %1075 = vst.msk [vmem:[%s372 + $0x98] sm:$0xff] %vm1055, %v1042
      %1076 = vst.msk [vmem:[%s372 + $0xa0] sm:$0xff] %vm1055, %v1043
      %1077 = vst.msk [vmem:[%s372 + $0xa8] sm:$0xff] %vm1055, %v1044
      %1078 = vst.msk [vmem:[%s372 + $0xb0] sm:$0xff] %vm1055, %v1045
      %1079 = vst.msk [vmem:[%s372 + $0xb8] sm:$0xff] %vm1055, %v1046
      %1080 = vst.msk [vmem:[%s372 + $0xc0] sm:$0xff] %vm1055, %v1047
      %1081 = vst.msk [vmem:[%s372 + $0xc8] sm:$0xff] %vm1055, %v1048
      %1082 = vst.msk [vmem:[%s372 + $0xd0] sm:$0xff] %vm1055, %v1049
      %1083 = vst.msk [vmem:[%s372 + $0xd8] sm:$0xff] %vm1055, %v1050
      %1084 = vst.msk [vmem:[%s372 + $0xe0] sm:$0xff] %vm1055, %v1051
      %1085 = vst.msk [vmem:[%s372 + $0xe8] sm:$0xff] %vm1055, %v1052
      %1086 = vst.msk [vmem:[%s372 + $0xf0] sm:$0xff] %vm1055, %v1053
      %1087 = vst.msk [vmem:[%s372 + $0xf8] sm:$0xff] %vm1055, %v1054
      %s1088 = smul.u32 32, %s22
      %p1089 = scmp.lt.s32.totalorder %s21, 1
      %s1090 = scalar_select %p1089, %s21, 1
      %p1091 = scmp.lt.s32.totalorder %s1088, 31
      %s1092 = scalar_select %p1091, %s1088, 31
      %s1093 = smul.addr %s1090, 32
      %s1094 = sadd.s32 %s1092, %s1093
      %s1095 = smul.addr %s1094, 8
      %s1096 = scalar_lea.vmem %s6, %s1095
      // Predicated region
      $region45: #{e_mhsa_forward.5} parent=43 // pred_check
        %p1097 = pneg %p199
      $region46: #{e_mhsa_forward.5} parent=43 // pred_check_branch
        %1099 = sbr.rel (%p1097) target = $region48
      $region47: #{e_mhsa_forward.5} parent=43 // pred_region
        %s1100 = smul.u32 32, %s22
      $region48: #{e_mhsa_forward.5} parent=43 // pred_fallthru
        _
    $region44: #{e_mhsa_forward.5} parent=5 // pred_fallthru
      _
    %p1101 = scmp.le.s32.totalorder 2, %s12
    // Predicated region
    $region49: #{e_mhsa_forward.5} parent=5 // pred_check
      %p1102 = pneg %p1101
    $region50: #{e_mhsa_forward.5} parent=5 // pred_check_branch
      %1104 = sbr.rel (%p1102) target = $region52
    $region51: #{e_mhsa_forward.5} parent=5 // pred_region
      %s1105 = ssub.s32 %s12, 2
      // Predicated region
      $region53: #{e_mhsa_forward.5} parent=51 // pred_check
        %p1106 = pneg %p205
      $region54: #{e_mhsa_forward.5} parent=51 // pred_check_branch
        %1108 = sbr.rel (%p1106) target = $region56
      $region55: #{e_mhsa_forward.5} parent=51 // pred_region
        %s1109 = smul.u32 32, %s24
        %p1110 = scmp.lt.s32.totalorder %s23, 1
        %s1111 = scalar_select %p1110, %s23, 1
        %p1112 = scmp.lt.s32.totalorder %s1109, 31
        %s1113 = scalar_select %p1112, %s1109, 31
        %s1114 = smul.addr %s1111, 32
        %s1115 = sadd.s32 %s1113, %s1114
        %s1116 = smul.addr %s1115, 8
        %s1117 = scalar_lea.vmem %s6, %s1116
      $region56: #{e_mhsa_forward.5} parent=51 // pred_fallthru
        _
    $region52: #{e_mhsa_forward.5} parent=5 // pred_fallthru
      _
  $region6: #{e_mhsa_forward.5} parent=0 // loop_footer
    %s16 = sadd.s32 1, %s12
  $region7: #{e_mhsa_forward.5} parent=0 // loop_footer_branch
    %11 = sbr.rel target = $region3
  $region8: #{e_mhsa_forward.5} parent=0 // loop_exit
    _

</llo_original>
